<compile_context>
chip_gen: v6e
topology: v6e:2x2x1
jax: 0.10.0
libtpu: 0.0.40
codegen_flags: <defaults>
</compile_context>

<pallas_src>
import functools

import jax
import jax.numpy as jnp
from jax import lax
from jax.experimental import pallas as pl
from jax.experimental.pallas import tpu as pltpu

EPS = 1e-5

# Row layout of the two packed per-channel parameter slabs.
# pc: (8, C)  — stage-1 (input_dim-wide) operands.
_PC_W1_PREV, _PC_W1_MID, _PC_W1_NEXT, _PC_G1, _PC_BE1 = 0, 1, 2, 3, 4
# pf: (16, F) — stage-2/3/4 (n_filters-wide) operands.
(_PF_G2, _PF_BE2,
 _PF_W3_PREV, _PF_W3_MID, _PF_W3_NEXT, _PF_G3, _PF_BE3,
 _PF_G4, _PF_BE4) = range(9)


def _swap_minor2(a):
    """(N, A, B) -> (N, B, A) via per-batch 2-D transposes (simplest XLU lowering).

    TODO(synk): for large N switch to a gridded/batched transpose instead of this
    static unroll + stack (N is tiny for this block).
    """
    return jnp.stack([a[i].T for i in range(a.shape[0])], axis=0)


def _conv_block_kernel(x_ref, pc_ref, w2_ref, pf_ref, w4_ref, o_ref, *,
                       transpose_io):
    x = x_ref[...]                                      # f32
    if transpose_io:
        x = _swap_minor2(x)                             # (N, C, L) -> (N, L, C) on-chip
    n, l, _ = x.shape

    pc = pc_ref[...]                                    # (8, C)  packed params
    pf = pf_ref[...]                                    # (16, F) packed params

    def row(slab, i):                                   # (1, width) static sublane slice
        return slab[i:i + 1, :]

    # Edge masks for the k=3 / pad=1 depthwise convs (same L for both stages).
    l_col = lax.broadcasted_iota(jnp.int32, (l, 1), 0)  # (L, 1)
    not_first = l_col > 0                               # kill wrapped tap at l == 0
    not_last = l_col < (l - 1)                          # kill wrapped tap at l == L-1

    def dwconv3(h, w_prev, w_mid, w_next):
        # y[:, l, :] = w_prev*h[:, l-1, :] + w_mid*h[:, l, :] + w_next*h[:, l+1, :]
        # Shifts via XLU roll; zero padding at the ends is folded into small (L, C)
        # masked tap weights instead of masking the full (N, L, C) tensor.
        wp = jnp.where(not_first, w_prev, 0.0)          # (L, C)
        wn = jnp.where(not_last, w_next, 0.0)           # (L, C)
        return (pltpu.roll(h, 1, 1) * wp + h * w_mid
                + pltpu.roll(h, h.shape[1] - 1, 1) * wn)

    def pwconv(h, w_bf16):
        # 1x1 conv == channel matmul on the MXU: bf16 inputs, f32 accumulation.
        nn_, ll_, cin = h.shape
        y = jnp.dot(h.astype(jnp.bfloat16).reshape(nn_ * ll_, cin), w_bf16,
                    preferred_element_type=jnp.float32)
        return y.reshape(nn_, ll_, -1)

    def bn_relu(h, gamma, beta):
        # Training-mode BatchNorm1d (biased batch stats over N, L) folded into one
        # scale/shift FMA, fused with the following ReLU.  Stats stay in f32.
        # NOTE: single-pass E[x^2]-E[x]^2 (clamped at 0) is fine at these sizes.
        # TODO(synk): two-pass / MXU-based stats in the tiled large-batch version.
        inv_count = 1.0 / (h.shape[0] * h.shape[1])
        mean = jnp.sum(h, axis=(0, 1), keepdims=True) * inv_count
        meansq = jnp.sum(h * h, axis=(0, 1), keepdims=True) * inv_count
        var = jnp.maximum(meansq - mean * mean, 0.0)
        scale = gamma * lax.rsqrt(var + EPS)
        shift = beta - mean * scale
        return jnp.maximum(h * scale + shift, 0.0)

    # Conv biases omitted on purpose: training-mode BN mean subtraction cancels them.
    out = dwconv3(x, row(pc, _PC_W1_PREV), row(pc, _PC_W1_MID), row(pc, _PC_W1_NEXT))
    out = bn_relu(out, row(pc, _PC_G1), row(pc, _PC_BE1))
    out = pwconv(out, w2_ref[...])
    out = bn_relu(out, row(pf, _PF_G2), row(pf, _PF_BE2))
    out = dwconv3(out, row(pf, _PF_W3_PREV), row(pf, _PF_W3_MID), row(pf, _PF_W3_NEXT))
    out = bn_relu(out, row(pf, _PF_G3), row(pf, _PF_BE3))
    out = pwconv(out, w4_ref[...])
    out = bn_relu(out, row(pf, _PF_G4), row(pf, _PF_BE4))
    # TODO(synk): optional shortcut/downsample residual add (module default shortcut=False).

    if transpose_io:
        out = out.astype(o_ref.dtype)
        for i in range(n):                              # (N, L, F) -> (N, F, L) on-chip
            o_ref[i] = out[i].T
    else:
        o_ref[...] = out.astype(o_ref.dtype)


def _prep_params(params):
    """Pack the per-channel operands into two slabs and cast MXU weights to bf16."""
    c = params["w1"].shape[1]
    f = params["w4"].shape[1]

    pc = jnp.zeros((8, c), jnp.float32)
    pc = pc.at[_PC_W1_PREV:_PC_W1_NEXT + 1, :].set(params["w1"].astype(jnp.float32))
    pc = pc.at[_PC_G1, :].set(params["g1"].astype(jnp.float32))
    pc = pc.at[_PC_BE1, :].set(params["be1"].astype(jnp.float32))

    pf = jnp.zeros((16, f), jnp.float32)
    pf = pf.at[_PF_G2, :].set(params["g2"].astype(jnp.float32))
    pf = pf.at[_PF_BE2, :].set(params["be2"].astype(jnp.float32))
    pf = pf.at[_PF_W3_PREV:_PF_W3_NEXT + 1, :].set(params["w3"].astype(jnp.float32))
    pf = pf.at[_PF_G3, :].set(params["g3"].astype(jnp.float32))
    pf = pf.at[_PF_BE3, :].set(params["be3"].astype(jnp.float32))
    pf = pf.at[_PF_G4, :].set(params["g4"].astype(jnp.float32))
    pf = pf.at[_PF_BE4, :].set(params["be4"].astype(jnp.float32))

    # Conv biases b1..b4 intentionally dropped: exactly cancelled by training-mode BN.
    return pc, params["w2"].astype(jnp.bfloat16), pf, params["w4"].astype(jnp.bfloat16)


def _run(x, params, out_shape, transpose_io):
    pc, w2, pf, w4 = _prep_params(params)
    args = (x, pc, w2, pf, w4)
    vmem = pl.BlockSpec(memory_space=pltpu.MemorySpace.VMEM)
    return pl.pallas_call(
        functools.partial(_conv_block_kernel, transpose_io=transpose_io),
        out_shape=out_shape,
        in_specs=[vmem] * len(args),
        out_specs=vmem,
    )(*args)


def convolutional_block_nlc(x_nlc, params):
    """Channels-last entry point: x (N, L, C) f32 -> (N, L, F) f32 (no transposes)."""
    n, l, _ = x_nlc.shape
    f = params["w4"].shape[1]
    return _run(x_nlc, params, jax.ShapeDtypeStruct((n, l, f), jnp.float32), False)


def convolutional_block(x_ncl, params):
    """PyTorch-layout entry point: (N, C, L) -> (N, F, L); C<->L transposes in-kernel."""
    n, _, l = x_ncl.shape
    f = params["w4"].shape[1]
    return _run(x_ncl, params, jax.ShapeDtypeStruct((n, f, l), jnp.float32), True)


def make_params(key, input_dim=128, n_filters=256):
    ks = jax.random.split(key, 12)
    c, f = input_dim, n_filters
    p = {
        # depthwise conv1: PyTorch weight (C,1,3) stored here as (3, C)
        "w1": jax.random.normal(ks[0], (3, c), jnp.float32) * 0.3,
        "b1": jax.random.normal(ks[1], (c,), jnp.float32) * 0.1,
        "g1": 1.0 + 0.1 * jax.random.normal(ks[2], (c,), jnp.float32),
        "be1": 0.1 * jax.random.normal(ks[3], (c,), jnp.float32),
        # pointwise conv2: PyTorch weight (F,C,1) stored here as (C, F)
        "w2": jax.random.normal(ks[4], (c, f), jnp.float32) * (1.0 / c) ** 0.5,
        "b2": jax.random.normal(ks[5], (f,), jnp.float32) * 0.1,
        "g2": 1.0 + 0.1 * jax.random.normal(ks[6], (f,), jnp.float32),
        "be2": 0.1 * jax.random.normal(ks[7], (f,), jnp.float32),
        # depthwise conv3: (F,1,3) stored as (3, F)
        "w3": jax.random.normal(ks[8], (3, f), jnp.float32) * 0.3,
        "b3": jax.random.normal(ks[9], (f,), jnp.float32) * 0.1,
        "g3": 1.0 + 0.1 * jax.random.normal(ks[10], (f,), jnp.float32),
        "be3": 0.1 * jax.random.normal(ks[11], (f,), jnp.float32),
    }
    ks2 = jax.random.split(jax.random.fold_in(key, 1), 4)
    p.update({
        # pointwise conv4: (F,F,1) stored as (F, F)
        "w4": jax.random.normal(ks2[0], (f, f), jnp.float32) * (1.0 / f) ** 0.5,
        "b4": jax.random.normal(ks2[1], (f,), jnp.float32) * 0.1,
        "g4": 1.0 + 0.1 * jax.random.normal(ks2[2], (f,), jnp.float32),
        "be4": 0.1 * jax.random.normal(ks2[3], (f,), jnp.float32),
    })
    return p


def reference(x_ncl, params):
    """Pure-JAX f32 reference in PyTorch (N, C, L) layout (with conv biases)."""
    def dwconv(x, w_kc, b):
        cc = x.shape[1]
        w = jnp.transpose(w_kc, (1, 0))[:, None, :]        # (C, 1, 3)
        y = lax.conv_general_dilated(x, w, window_strides=(1,), padding=((1, 1),),
                                     dimension_numbers=("NCH", "OIH", "NCH"),
                                     feature_group_count=cc)
        return y + b[None, :, None]

    def pwconv(x, w_cf, b):
        w = jnp.transpose(w_cf, (1, 0))[:, :, None]        # (F, C, 1)
        y = lax.conv_general_dilated(x, w, window_strides=(1,), padding=((0, 0),),
                                     dimension_numbers=("NCH", "OIH", "NCH"))
        return y + b[None, :, None]

    def bn(x, g, be):
        mean = jnp.mean(x, axis=(0, 2), keepdims=True)
        var = jnp.mean((x - mean) ** 2, axis=(0, 2), keepdims=True)
        return (x - mean) * lax.rsqrt(var + EPS) * g[None, :, None] + be[None, :, None]

    out = jax.nn.relu(bn(dwconv(x_ncl, params["w1"], params["b1"]), params["g1"], params["be1"]))
    out = jax.nn.relu(bn(pwconv(out, params["w2"], params["b2"]), params["g2"], params["be2"]))
    out = jax.nn.relu(bn(dwconv(out, params["w3"], params["b3"]), params["g3"], params["be3"]))
    out = bn(pwconv(out, params["w4"], params["b4"]), params["g4"], params["be4"])
    return jax.nn.relu(out)


if __name__ == "__main__":
    # Module defaults: input_dim=128, n_filters=256.  L chosen lane-aligned (128) so the
    # in-kernel transposes work on fully-aligned tiles and N*L = 256 fills the MXU rows.
    N, C, L, F = 2, 128, 128, 256
    key = jax.random.PRNGKey(0)
    kx, kp = jax.random.split(key)
    x = jax.random.normal(kx, (N, C, L), jnp.float32)      # PyTorch Conv1d layout (N, C, L)
    params = make_params(kp, input_dim=C, n_filters=F)

    out = jax.block_until_ready(jax.jit(convolutional_block)(x, params))
    assert out.shape == (N, F, L), out.shape

    # Channels-last path must agree with the PyTorch-layout (in-kernel transpose) path.
    out_nlc = jax.block_until_ready(
        jax.jit(convolutional_block_nlc)(jnp.transpose(x, (0, 2, 1)), params))
    assert jnp.allclose(jnp.transpose(out_nlc, (0, 2, 1)), out, atol=1e-4, rtol=1e-4)

    ref = jax.block_until_ready(reference(x, params))
    err = float(jnp.max(jnp.abs(out - ref)))
    # Tolerance accounts for bf16 MXU inputs on the two 1x1 convs (f32 accumulation,
    # f32 BN statistics); everything else is f32.
    assert jnp.allclose(out, ref, atol=3e-2, rtol=3e-2), err

    print("KERNEL_OK")
</pallas_src>

<mosaic_0001>
module attributes {stable_mosaic.version = 11 : i64} {
  func.func @_conv_block_kernel(%arg0: memref<2x128x128xf32, #tpu.memory_space<vmem>>, %arg1: memref<8x128xf32, #tpu.memory_space<vmem>>, %arg2: memref<128x256xbf16, #tpu.memory_space<vmem>>, %arg3: memref<16x256xf32, #tpu.memory_space<vmem>>, %arg4: memref<256x256xbf16, #tpu.memory_space<vmem>>, %arg5: memref<2x256x128xf32, #tpu.memory_space<vmem>>) attributes {dimension_semantics = [], scalar_prefetch = 0 : i64, scratch_operands = 0 : i64, tpu.core_type = #tpu.core_type<tc>} {
    %c0 = arith.constant 0 : index
    %c0_0 = arith.constant 0 : index
    %c0_1 = arith.constant 0 : index
    %0 = vector.load %arg0[%c0, %c0_0, %c0_1] : memref<2x128x128xf32, #tpu.memory_space<vmem>>, vector<2x128x128xf32>
    %1 = vector.extract_strided_slice %0 {offsets = [0, 0, 0], sizes = [1, 128, 128], strides = [1, 1, 1]} : vector<2x128x128xf32> to vector<1x128x128xf32>
    %2 = vector.shape_cast %1 : vector<1x128x128xf32> to vector<128x128xf32>
    %3 = tpu.transpose %2, [1, 0] : vector<128x128xf32> -> vector<128x128xf32>
    %4 = vector.extract_strided_slice %0 {offsets = [1, 0, 0], sizes = [1, 128, 128], strides = [1, 1, 1]} : vector<2x128x128xf32> to vector<1x128x128xf32>
    %5 = vector.shape_cast %4 : vector<1x128x128xf32> to vector<128x128xf32>
    %6 = tpu.transpose %5, [1, 0] : vector<128x128xf32> -> vector<128x128xf32>
    %7 = vector.shape_cast %3 : vector<128x128xf32> to vector<1x128x128xf32>
    %8 = vector.shape_cast %6 : vector<128x128xf32> to vector<1x128x128xf32>
    %9 = tpu.concatenate %7, %8 in 0 : vector<1x128x128xf32>, vector<1x128x128xf32> -> vector<2x128x128xf32>
    %c0_2 = arith.constant 0 : index
    %c0_3 = arith.constant 0 : index
    %10 = vector.load %arg1[%c0_2, %c0_3] : memref<8x128xf32, #tpu.memory_space<vmem>>, vector<8x128xf32>
    %c0_4 = arith.constant 0 : index
    %c0_5 = arith.constant 0 : index
    %11 = vector.load %arg3[%c0_4, %c0_5] : memref<16x256xf32, #tpu.memory_space<vmem>>, vector<16x256xf32>
    %12 = tpu.iota {dimensions = array<i32: 0>} : vector<128x1xi32>
    %c0_i32 = arith.constant 0 : i32
    %13 = vector.broadcast %c0_i32 : i32 to vector<128x1xi32>
    %14 = arith.cmpi sgt, %12, %13 : vector<128x1xi32>
    %c127_i32 = arith.constant 127 : i32
    %15 = vector.broadcast %c127_i32 : i32 to vector<128x1xi32>
    %16 = arith.cmpi slt, %12, %15 : vector<128x1xi32>
    %17 = vector.extract_strided_slice %10 {offsets = [0, 0], sizes = [1, 128], strides = [1, 1]} : vector<8x128xf32> to vector<1x128xf32>
    %18 = vector.extract_strided_slice %10 {offsets = [1, 0], sizes = [1, 128], strides = [1, 1]} : vector<8x128xf32> to vector<1x128xf32>
    %19 = vector.extract_strided_slice %10 {offsets = [2, 0], sizes = [1, 128], strides = [1, 1]} : vector<8x128xf32> to vector<1x128xf32>
    %cst = arith.constant 0.000000e+00 : f32
    %20 = vector.shape_cast %14 : vector<128x1xi1> to vector<128x1xi1>
    %21 = vector.broadcast %20 : vector<128x1xi1> to vector<128x128xi1>
    %22 = vector.shape_cast %17 : vector<1x128xf32> to vector<1x128xf32>
    %23 = vector.broadcast %22 : vector<1x128xf32> to vector<128x128xf32>
    %24 = vector.broadcast %cst : f32 to vector<128x128xf32>
    %25 = arith.select %21, %23, %24 : vector<128x128xi1>, vector<128x128xf32>
    %cst_6 = arith.constant 0.000000e+00 : f32
    %26 = vector.shape_cast %16 : vector<128x1xi1> to vector<128x1xi1>
    %27 = vector.broadcast %26 : vector<128x1xi1> to vector<128x128xi1>
    %28 = vector.shape_cast %19 : vector<1x128xf32> to vector<1x128xf32>
    %29 = vector.broadcast %28 : vector<1x128xf32> to vector<128x128xf32>
    %30 = vector.broadcast %cst_6 : f32 to vector<128x128xf32>
    %31 = arith.select %27, %29, %30 : vector<128x128xi1>, vector<128x128xf32>
    %c1_i32 = arith.constant 1 : i32
    %32 = tpu.dynamic_rotate %9 by %c1_i32 dim 1 : vector<2x128x128xf32>, i32 -> vector<2x128x128xf32>
    %33 = vector.shape_cast %25 : vector<128x128xf32> to vector<1x128x128xf32>
    %34 = vector.broadcast %33 : vector<1x128x128xf32> to vector<2x128x128xf32>
    %35 = arith.mulf %32, %34 : vector<2x128x128xf32>
    %36 = vector.shape_cast %18 : vector<1x128xf32> to vector<1x1x128xf32>
    %37 = vector.broadcast %36 : vector<1x1x128xf32> to vector<2x128x128xf32>
    %38 = arith.mulf %9, %37 : vector<2x128x128xf32>
    %39 = arith.addf %35, %38 : vector<2x128x128xf32>
    %c127_i32_7 = arith.constant 127 : i32
    %40 = tpu.dynamic_rotate %9 by %c127_i32_7 dim 1 : vector<2x128x128xf32>, i32 -> vector<2x128x128xf32>
    %41 = vector.shape_cast %31 : vector<128x128xf32> to vector<1x128x128xf32>
    %42 = vector.broadcast %41 : vector<1x128x128xf32> to vector<2x128x128xf32>
    %43 = arith.mulf %40, %42 : vector<2x128x128xf32>
    %44 = arith.addf %39, %43 : vector<2x128x128xf32>
    %45 = vector.extract_strided_slice %10 {offsets = [3, 0], sizes = [1, 128], strides = [1, 1]} : vector<8x128xf32> to vector<1x128xf32>
    %46 = vector.extract_strided_slice %10 {offsets = [4, 0], sizes = [1, 128], strides = [1, 1]} : vector<8x128xf32> to vector<1x128xf32>
    %cst_8 = arith.constant dense<0.000000e+00> : vector<128xf32>
    %47 = vector.multi_reduction <add>, %44, %cst_8 [0, 1] : vector<2x128x128xf32> to vector<128xf32>
    %48 = vector.shape_cast %47 : vector<128xf32> to vector<1x1x128xf32>
    %cst_9 = arith.constant 3.906250e-03 : f32
    %49 = vector.broadcast %cst_9 : f32 to vector<1x1x128xf32>
    %50 = arith.mulf %48, %49 : vector<1x1x128xf32>
    %51 = arith.mulf %44, %44 : vector<2x128x128xf32>
    %cst_10 = arith.constant dense<0.000000e+00> : vector<128xf32>
    %52 = vector.multi_reduction <add>, %51, %cst_10 [0, 1] : vector<2x128x128xf32> to vector<128xf32>
    %53 = vector.shape_cast %52 : vector<128xf32> to vector<1x1x128xf32>
    %cst_11 = arith.constant 3.906250e-03 : f32
    %54 = vector.broadcast %cst_11 : f32 to vector<1x1x128xf32>
    %55 = arith.mulf %53, %54 : vector<1x1x128xf32>
    %56 = arith.mulf %50, %50 : vector<1x1x128xf32>
    %57 = arith.subf %55, %56 : vector<1x1x128xf32>
    %cst_12 = arith.constant 0.000000e+00 : f32
    %58 = vector.broadcast %cst_12 : f32 to vector<1x1x128xf32>
    %59 = arith.maximumf %57, %58 : vector<1x1x128xf32>
    %cst_13 = arith.constant 9.99999974E-6 : f32
    %60 = vector.broadcast %cst_13 : f32 to vector<1x1x128xf32>
    %61 = arith.addf %59, %60 : vector<1x1x128xf32>
    %62 = math.rsqrt %61 : vector<1x1x128xf32>
    %63 = vector.shape_cast %45 : vector<1x128xf32> to vector<1x1x128xf32>
    %64 = arith.mulf %63, %62 : vector<1x1x128xf32>
    %65 = arith.mulf %50, %64 : vector<1x1x128xf32>
    %66 = vector.shape_cast %46 : vector<1x128xf32> to vector<1x1x128xf32>
    %67 = arith.subf %66, %65 : vector<1x1x128xf32>
    %68 = vector.broadcast %64 : vector<1x1x128xf32> to vector<2x128x128xf32>
    %69 = arith.mulf %44, %68 : vector<2x128x128xf32>
    %70 = vector.broadcast %67 : vector<1x1x128xf32> to vector<2x128x128xf32>
    %71 = arith.addf %69, %70 : vector<2x128x128xf32>
    %cst_14 = arith.constant 0.000000e+00 : f32
    %72 = vector.broadcast %cst_14 : f32 to vector<2x128x128xf32>
    %73 = arith.maximumf %71, %72 : vector<2x128x128xf32>
    %c0_15 = arith.constant 0 : index
    %c0_16 = arith.constant 0 : index
    %74 = vector.load %arg2[%c0_15, %c0_16] : memref<128x256xbf16, #tpu.memory_space<vmem>>, vector<128x256xbf16>
    %75 = arith.truncf %73 : vector<2x128x128xf32> to vector<2x128x128xbf16>
    %76 = vector.shape_cast %75 : vector<2x128x128xbf16> to vector<256x128xbf16>
    %cst_17 = arith.constant dense<0.000000e+00> : vector<256x256xf32>
    %77 = tpu.matmul %76, %74, %cst_17 {dimension_numbers = #tpu.dot_dimension_numbers<[1], [0], [0], [1], [0, 0, 1, 1], [], []>} : vector<256x128xbf16>, vector<128x256xbf16>, vector<256x256xf32> -> vector<256x256xf32>
    %78 = vector.shape_cast %77 : vector<256x256xf32> to vector<2x128x256xf32>
    %79 = vector.extract_strided_slice %11 {offsets = [0, 0], sizes = [1, 256], strides = [1, 1]} : vector<16x256xf32> to vector<1x256xf32>
    %80 = vector.extract_strided_slice %11 {offsets = [1, 0], sizes = [1, 256], strides = [1, 1]} : vector<16x256xf32> to vector<1x256xf32>
    %cst_18 = arith.constant dense<0.000000e+00> : vector<256xf32>
    %81 = vector.multi_reduction <add>, %78, %cst_18 [0, 1] : vector<2x128x256xf32> to vector<256xf32>
    %82 = vector.shape_cast %81 : vector<256xf32> to vector<1x1x256xf32>
    %cst_19 = arith.constant 3.906250e-03 : f32
    %83 = vector.broadcast %cst_19 : f32 to vector<1x1x256xf32>
    %84 = arith.mulf %82, %83 : vector<1x1x256xf32>
    %85 = arith.mulf %78, %78 : vector<2x128x256xf32>
    %cst_20 = arith.constant dense<0.000000e+00> : vector<256xf32>
    %86 = vector.multi_reduction <add>, %85, %cst_20 [0, 1] : vector<2x128x256xf32> to vector<256xf32>
    %87 = vector.shape_cast %86 : vector<256xf32> to vector<1x1x256xf32>
    %cst_21 = arith.constant 3.906250e-03 : f32
    %88 = vector.broadcast %cst_21 : f32 to vector<1x1x256xf32>
    %89 = arith.mulf %87, %88 : vector<1x1x256xf32>
    %90 = arith.mulf %84, %84 : vector<1x1x256xf32>
    %91 = arith.subf %89, %90 : vector<1x1x256xf32>
    %cst_22 = arith.constant 0.000000e+00 : f32
    %92 = vector.broadcast %cst_22 : f32 to vector<1x1x256xf32>
    %93 = arith.maximumf %91, %92 : vector<1x1x256xf32>
    %cst_23 = arith.constant 9.99999974E-6 : f32
    %94 = vector.broadcast %cst_23 : f32 to vector<1x1x256xf32>
    %95 = arith.addf %93, %94 : vector<1x1x256xf32>
    %96 = math.rsqrt %95 : vector<1x1x256xf32>
    %97 = vector.shape_cast %79 : vector<1x256xf32> to vector<1x1x256xf32>
    %98 = arith.mulf %97, %96 : vector<1x1x256xf32>
    %99 = arith.mulf %84, %98 : vector<1x1x256xf32>
    %100 = vector.shape_cast %80 : vector<1x256xf32> to vector<1x1x256xf32>
    %101 = arith.subf %100, %99 : vector<1x1x256xf32>
    %102 = vector.broadcast %98 : vector<1x1x256xf32> to vector<2x128x256xf32>
    %103 = arith.mulf %78, %102 : vector<2x128x256xf32>
    %104 = vector.broadcast %101 : vector<1x1x256xf32> to vector<2x128x256xf32>
    %105 = arith.addf %103, %104 : vector<2x128x256xf32>
    %cst_24 = arith.constant 0.000000e+00 : f32
    %106 = vector.broadcast %cst_24 : f32 to vector<2x128x256xf32>
    %107 = arith.maximumf %105, %106 : vector<2x128x256xf32>
    %108 = vector.extract_strided_slice %11 {offsets = [2, 0], sizes = [1, 256], strides = [1, 1]} : vector<16x256xf32> to vector<1x256xf32>
    %109 = vector.extract_strided_slice %11 {offsets = [3, 0], sizes = [1, 256], strides = [1, 1]} : vector<16x256xf32> to vector<1x256xf32>
    %110 = vector.extract_strided_slice %11 {offsets = [4, 0], sizes = [1, 256], strides = [1, 1]} : vector<16x256xf32> to vector<1x256xf32>
    %cst_25 = arith.constant 0.000000e+00 : f32
    %111 = vector.shape_cast %14 : vector<128x1xi1> to vector<128x1xi1>
    %112 = vector.broadcast %111 : vector<128x1xi1> to vector<128x256xi1>
    %113 = vector.shape_cast %108 : vector<1x256xf32> to vector<1x256xf32>
    %114 = vector.broadcast %113 : vector<1x256xf32> to vector<128x256xf32>
    %115 = vector.broadcast %cst_25 : f32 to vector<128x256xf32>
    %116 = arith.select %112, %114, %115 : vector<128x256xi1>, vector<128x256xf32>
    %cst_26 = arith.constant 0.000000e+00 : f32
    %117 = vector.shape_cast %16 : vector<128x1xi1> to vector<128x1xi1>
    %118 = vector.broadcast %117 : vector<128x1xi1> to vector<128x256xi1>
    %119 = vector.shape_cast %110 : vector<1x256xf32> to vector<1x256xf32>
    %120 = vector.broadcast %119 : vector<1x256xf32> to vector<128x256xf32>
    %121 = vector.broadcast %cst_26 : f32 to vector<128x256xf32>
    %122 = arith.select %118, %120, %121 : vector<128x256xi1>, vector<128x256xf32>
    %c1_i32_27 = arith.constant 1 : i32
    %123 = tpu.dynamic_rotate %107 by %c1_i32_27 dim 1 : vector<2x128x256xf32>, i32 -> vector<2x128x256xf32>
    %124 = vector.shape_cast %116 : vector<128x256xf32> to vector<1x128x256xf32>
    %125 = vector.broadcast %124 : vector<1x128x256xf32> to vector<2x128x256xf32>
    %126 = arith.mulf %123, %125 : vector<2x128x256xf32>
    %127 = vector.shape_cast %109 : vector<1x256xf32> to vector<1x1x256xf32>
    %128 = vector.broadcast %127 : vector<1x1x256xf32> to vector<2x128x256xf32>
    %129 = arith.mulf %107, %128 : vector<2x128x256xf32>
    %130 = arith.addf %126, %129 : vector<2x128x256xf32>
    %c127_i32_28 = arith.constant 127 : i32
    %131 = tpu.dynamic_rotate %107 by %c127_i32_28 dim 1 : vector<2x128x256xf32>, i32 -> vector<2x128x256xf32>
    %132 = vector.shape_cast %122 : vector<128x256xf32> to vector<1x128x256xf32>
    %133 = vector.broadcast %132 : vector<1x128x256xf32> to vector<2x128x256xf32>
    %134 = arith.mulf %131, %133 : vector<2x128x256xf32>
    %135 = arith.addf %130, %134 : vector<2x128x256xf32>
    %136 = vector.extract_strided_slice %11 {offsets = [5, 0], sizes = [1, 256], strides = [1, 1]} : vector<16x256xf32> to vector<1x256xf32>
    %137 = vector.extract_strided_slice %11 {offsets = [6, 0], sizes = [1, 256], strides = [1, 1]} : vector<16x256xf32> to vector<1x256xf32>
    %cst_29 = arith.constant dense<0.000000e+00> : vector<256xf32>
    %138 = vector.multi_reduction <add>, %135, %cst_29 [0, 1] : vector<2x128x256xf32> to vector<256xf32>
    %139 = vector.shape_cast %138 : vector<256xf32> to vector<1x1x256xf32>
    %cst_30 = arith.constant 3.906250e-03 : f32
    %140 = vector.broadcast %cst_30 : f32 to vector<1x1x256xf32>
    %141 = arith.mulf %139, %140 : vector<1x1x256xf32>
    %142 = arith.mulf %135, %135 : vector<2x128x256xf32>
    %cst_31 = arith.constant dense<0.000000e+00> : vector<256xf32>
    %143 = vector.multi_reduction <add>, %142, %cst_31 [0, 1] : vector<2x128x256xf32> to vector<256xf32>
    %144 = vector.shape_cast %143 : vector<256xf32> to vector<1x1x256xf32>
    %cst_32 = arith.constant 3.906250e-03 : f32
    %145 = vector.broadcast %cst_32 : f32 to vector<1x1x256xf32>
    %146 = arith.mulf %144, %145 : vector<1x1x256xf32>
    %147 = arith.mulf %141, %141 : vector<1x1x256xf32>
    %148 = arith.subf %146, %147 : vector<1x1x256xf32>
    %cst_33 = arith.constant 0.000000e+00 : f32
    %149 = vector.broadcast %cst_33 : f32 to vector<1x1x256xf32>
    %150 = arith.maximumf %148, %149 : vector<1x1x256xf32>
    %cst_34 = arith.constant 9.99999974E-6 : f32
    %151 = vector.broadcast %cst_34 : f32 to vector<1x1x256xf32>
    %152 = arith.addf %150, %151 : vector<1x1x256xf32>
    %153 = math.rsqrt %152 : vector<1x1x256xf32>
    %154 = vector.shape_cast %136 : vector<1x256xf32> to vector<1x1x256xf32>
    %155 = arith.mulf %154, %153 : vector<1x1x256xf32>
    %156 = arith.mulf %141, %155 : vector<1x1x256xf32>
    %157 = vector.shape_cast %137 : vector<1x256xf32> to vector<1x1x256xf32>
    %158 = arith.subf %157, %156 : vector<1x1x256xf32>
    %159 = vector.broadcast %155 : vector<1x1x256xf32> to vector<2x128x256xf32>
    %160 = arith.mulf %135, %159 : vector<2x128x256xf32>
    %161 = vector.broadcast %158 : vector<1x1x256xf32> to vector<2x128x256xf32>
    %162 = arith.addf %160, %161 : vector<2x128x256xf32>
    %cst_35 = arith.constant 0.000000e+00 : f32
    %163 = vector.broadcast %cst_35 : f32 to vector<2x128x256xf32>
    %164 = arith.maximumf %162, %163 : vector<2x128x256xf32>
    %c0_36 = arith.constant 0 : index
    %c0_37 = arith.constant 0 : index
    %165 = vector.load %arg4[%c0_36, %c0_37] : memref<256x256xbf16, #tpu.memory_space<vmem>>, vector<256x256xbf16>
    %166 = arith.truncf %164 : vector<2x128x256xf32> to vector<2x128x256xbf16>
    %167 = vector.shape_cast %166 : vector<2x128x256xbf16> to vector<256x256xbf16>
    %cst_38 = arith.constant dense<0.000000e+00> : vector<256x256xf32>
    %168 = tpu.matmul %167, %165, %cst_38 {dimension_numbers = #tpu.dot_dimension_numbers<[1], [0], [0], [1], [0, 0, 1, 1], [], []>} : vector<256x256xbf16>, vector<256x256xbf16>, vector<256x256xf32> -> vector<256x256xf32>
    %169 = vector.shape_cast %168 : vector<256x256xf32> to vector<2x128x256xf32>
    %170 = vector.extract_strided_slice %11 {offsets = [7, 0], sizes = [1, 256], strides = [1, 1]} : vector<16x256xf32> to vector<1x256xf32>
    %171 = vector.extract_strided_slice %11 {offsets = [8, 0], sizes = [1, 256], strides = [1, 1]} : vector<16x256xf32> to vector<1x256xf32>
    %cst_39 = arith.constant dense<0.000000e+00> : vector<256xf32>
    %172 = vector.multi_reduction <add>, %169, %cst_39 [0, 1] : vector<2x128x256xf32> to vector<256xf32>
    %173 = vector.shape_cast %172 : vector<256xf32> to vector<1x1x256xf32>
    %cst_40 = arith.constant 3.906250e-03 : f32
    %174 = vector.broadcast %cst_40 : f32 to vector<1x1x256xf32>
    %175 = arith.mulf %173, %174 : vector<1x1x256xf32>
    %176 = arith.mulf %169, %169 : vector<2x128x256xf32>
    %cst_41 = arith.constant dense<0.000000e+00> : vector<256xf32>
    %177 = vector.multi_reduction <add>, %176, %cst_41 [0, 1] : vector<2x128x256xf32> to vector<256xf32>
    %178 = vector.shape_cast %177 : vector<256xf32> to vector<1x1x256xf32>
    %cst_42 = arith.constant 3.906250e-03 : f32
    %179 = vector.broadcast %cst_42 : f32 to vector<1x1x256xf32>
    %180 = arith.mulf %178, %179 : vector<1x1x256xf32>
    %181 = arith.mulf %175, %175 : vector<1x1x256xf32>
    %182 = arith.subf %180, %181 : vector<1x1x256xf32>
    %cst_43 = arith.constant 0.000000e+00 : f32
    %183 = vector.broadcast %cst_43 : f32 to vector<1x1x256xf32>
    %184 = arith.maximumf %182, %183 : vector<1x1x256xf32>
    %cst_44 = arith.constant 9.99999974E-6 : f32
    %185 = vector.broadcast %cst_44 : f32 to vector<1x1x256xf32>
    %186 = arith.addf %184, %185 : vector<1x1x256xf32>
    %187 = math.rsqrt %186 : vector<1x1x256xf32>
    %188 = vector.shape_cast %170 : vector<1x256xf32> to vector<1x1x256xf32>
    %189 = arith.mulf %188, %187 : vector<1x1x256xf32>
    %190 = arith.mulf %175, %189 : vector<1x1x256xf32>
    %191 = vector.shape_cast %171 : vector<1x256xf32> to vector<1x1x256xf32>
    %192 = arith.subf %191, %190 : vector<1x1x256xf32>
    %193 = vector.broadcast %189 : vector<1x1x256xf32> to vector<2x128x256xf32>
    %194 = arith.mulf %169, %193 : vector<2x128x256xf32>
    %195 = vector.broadcast %192 : vector<1x1x256xf32> to vector<2x128x256xf32>
    %196 = arith.addf %194, %195 : vector<2x128x256xf32>
    %cst_45 = arith.constant 0.000000e+00 : f32
    %197 = vector.broadcast %cst_45 : f32 to vector<2x128x256xf32>
    %198 = arith.maximumf %196, %197 : vector<2x128x256xf32>
    %199 = vector.extract_strided_slice %198 {offsets = [0, 0, 0], sizes = [1, 128, 256], strides = [1, 1, 1]} : vector<2x128x256xf32> to vector<1x128x256xf32>
    %200 = vector.shape_cast %199 : vector<1x128x256xf32> to vector<128x256xf32>
    %201 = tpu.transpose %200, [1, 0] : vector<128x256xf32> -> vector<256x128xf32>
    %c0_46 = arith.constant 0 : index
    %c0_47 = arith.constant 0 : index
    %c0_48 = arith.constant 0 : index
    %202 = vector.load %arg5[%c0_46, %c0_47, %c0_48] : memref<2x256x128xf32, #tpu.memory_space<vmem>>, vector<1x256x128xf32>
    %203 = vector.shape_cast %202 : vector<1x256x128xf32> to vector<256x128xf32>
    %204 = vector.shape_cast %201 : vector<256x128xf32> to vector<1x256x128xf32>
    tpu.vector_store %arg5[%c0_46, %c0_47, %c0_48], %204 {strides = array<i32>} : memref<2x256x128xf32, #tpu.memory_space<vmem>>, vector<1x256x128xf32>,
    %205 = vector.extract_strided_slice %198 {offsets = [1, 0, 0], sizes = [1, 128, 256], strides = [1, 1, 1]} : vector<2x128x256xf32> to vector<1x128x256xf32>
    %206 = vector.shape_cast %205 : vector<1x128x256xf32> to vector<128x256xf32>
    %207 = tpu.transpose %206, [1, 0] : vector<128x256xf32> -> vector<256x128xf32>
    %c1 = arith.constant 1 : index
    %c0_49 = arith.constant 0 : index
    %c0_50 = arith.constant 0 : index
    %208 = vector.load %arg5[%c1, %c0_49, %c0_50] : memref<2x256x128xf32, #tpu.memory_space<vmem>>, vector<1x256x128xf32>
    %209 = vector.shape_cast %208 : vector<1x256x128xf32> to vector<256x128xf32>
    %210 = vector.shape_cast %207 : vector<256x128xf32> to vector<1x256x128xf32>
    tpu.vector_store %arg5[%c1, %c0_49, %c0_50], %210 {strides = array<i32>} : memref<2x256x128xf32, #tpu.memory_space<vmem>>, vector<1x256x128xf32>,
    return
  }
}

</mosaic_0001>

<llo_original>
// kernel: convolutional_block.1
$region0: #{convolutional_block.1}
  #allocation0 [shape = 'u32[]', space=smem, size = 0x4, offset = 0x4, fixed_abs, tag = 'smem constant byte address 0x4 - core index']
  #allocation1 [shape = 'u32[144,128]{1,0:T(1,128)}', space=vmem, size = 0x12000, scoped, tag = 'internal scratch']
  %s0 = inlined_call_operand.vmem [shape: f32[2,128,128], index: 0, kind: input, shape index: {}]
  %s1 = inlined_call_operand.vmem [shape: f32[8,128], index: 1, kind: input, shape index: {}]
  %s2 = inlined_call_operand.vmem [shape: bf16[128,256], index: 2, kind: input, shape index: {}]
  %s3 = inlined_call_operand.vmem [shape: f32[16,256], index: 3, kind: input, shape index: {}]
  %s4 = inlined_call_operand.vmem [shape: bf16[256,256], index: 4, kind: input, shape index: {}]
  %s5 = inlined_call_operand.hbm [shape: f32[2,256,128], index: 5, kind: output, shape index: {}]
  %s6 = sld [smem:[#allocation0]]
  $region30: #{convolutional_block.1} parent=0
    _
  %s8 = ssub.s32 1, %s6
  %s9 = scalar_select 0, %s8, %s6
  $region1: #{convolutional_block.1} parent=0
    #allocation2 [shape = 'u8[262144]{0}', space=vmem, size = 0x40000, scoped, tag = 'output window, operand 0, single buffered']
    #allocation3 [shape = 's32[1]{0}', space=sflag, size = 0x4, scoped, tag = 'scoped memory for convolutional_block.1']
    %10 = vsyncpa [#allocation3], 0
    // Predicated region
    $region2: #{convolutional_block.1} parent=1 // pred_check
      _
    $region3: #{convolutional_block.1} parent=1 // pred_check_branch
      %12 = sbr.rel (0) target = $region5
    $region4: #{convolutional_block.1} parent=1 // pred_region
      _
    $region5: #{convolutional_block.1} parent=1 // pred_fallthru
      _
    // Predicated region
    $region6: #{convolutional_block.1} parent=1 // pred_check
      _
    $region7: #{convolutional_block.1} parent=1 // pred_check_branch
      %14 = sbr.rel (0) target = $region9
    $region8: #{convolutional_block.1} parent=1 // pred_region
      _
    $region9: #{convolutional_block.1} parent=1 // pred_fallthru
      _
    // Predicated region
    $region10: #{convolutional_block.1} parent=1 // pred_check
      _
    $region11: #{convolutional_block.1} parent=1 // pred_check_branch
      %16 = sbr.rel (0) target = $region13
    $region12: #{convolutional_block.1} parent=1 // pred_region
      _
    $region13: #{convolutional_block.1} parent=1 // pred_fallthru
      _
    // Predicated region
    $region14: #{convolutional_block.1} parent=1 // pred_check
      _
    $region15: #{convolutional_block.1} parent=1 // pred_check_branch
      %18 = sbr.rel (0) target = $region17
    $region16: #{convolutional_block.1} parent=1 // pred_region
      _
    $region17: #{convolutional_block.1} parent=1 // pred_fallthru
      _
    // Predicated region
    $region18: #{convolutional_block.1} parent=1 // pred_check
      _
    $region19: #{convolutional_block.1} parent=1 // pred_check_branch
      %20 = sbr.rel (0) target = $region21
    $region20: #{convolutional_block.1} parent=1 // pred_region
      _
    $region21: #{convolutional_block.1} parent=1 // pred_fallthru
      _
    %v22 = vld [vmem:[%s0] sm:$0xff]
    %v23 = vld [vmem:[%s0 + $0x8] sm:$0xff]
    %v24 = vld [vmem:[%s0 + $0x10] sm:$0xff]
    %v25 = vld [vmem:[%s0 + $0x18] sm:$0xff]
    %v26 = vld [vmem:[%s0 + $0x20] sm:$0xff]
    %v27 = vld [vmem:[%s0 + $0x28] sm:$0xff]
    %v28 = vld [vmem:[%s0 + $0x30] sm:$0xff]
    %v29 = vld [vmem:[%s0 + $0x38] sm:$0xff]
    %v30 = vld [vmem:[%s0 + $0x40] sm:$0xff]
    %v31 = vld [vmem:[%s0 + $0x48] sm:$0xff]
    %v32 = vld [vmem:[%s0 + $0x50] sm:$0xff]
    %v33 = vld [vmem:[%s0 + $0x58] sm:$0xff]
    %v34 = vld [vmem:[%s0 + $0x60] sm:$0xff]
    %v35 = vld [vmem:[%s0 + $0x68] sm:$0xff]
    %v36 = vld [vmem:[%s0 + $0x70] sm:$0xff]
    %v37 = vld [vmem:[%s0 + $0x78] sm:$0xff]
    %v38 = vld [vmem:[%s0 + $0x80] sm:$0xff]
    %v39 = vld [vmem:[%s0 + $0x88] sm:$0xff]
    %v40 = vld [vmem:[%s0 + $0x90] sm:$0xff]
    %v41 = vld [vmem:[%s0 + $0x98] sm:$0xff]
    %v42 = vld [vmem:[%s0 + $0xa0] sm:$0xff]
    %v43 = vld [vmem:[%s0 + $0xa8] sm:$0xff]
    %v44 = vld [vmem:[%s0 + $0xb0] sm:$0xff]
    %v45 = vld [vmem:[%s0 + $0xb8] sm:$0xff]
    %v46 = vld [vmem:[%s0 + $0xc0] sm:$0xff]
    %v47 = vld [vmem:[%s0 + $0xc8] sm:$0xff]
    %v48 = vld [vmem:[%s0 + $0xd0] sm:$0xff]
    %v49 = vld [vmem:[%s0 + $0xd8] sm:$0xff]
    %v50 = vld [vmem:[%s0 + $0xe0] sm:$0xff]
    %v51 = vld [vmem:[%s0 + $0xe8] sm:$0xff]
    %v52 = vld [vmem:[%s0 + $0xf0] sm:$0xff]
    %v53 = vld [vmem:[%s0 + $0xf8] sm:$0xff]
    %54 = vxpose.xlu0.b32.start [1/16] %v22, 128
    %55 = vxpose.xlu0.b32.cont [2/16] %v23, 128
    %56 = vxpose.xlu0.b32.cont [3/16] %v24, 128
    %57 = vxpose.xlu0.b32.cont [4/16] %v25, 128
    %58 = vxpose.xlu0.b32.cont [5/16] %v26, 128
    %59 = vxpose.xlu0.b32.cont [6/16] %v27, 128
    %60 = vxpose.xlu0.b32.cont [7/16] %v28, 128
    %61 = vxpose.xlu0.b32.cont [8/16] %v29, 128
    %62 = vxpose.xlu0.b32.cont [9/16] %v30, 128
    %63 = vxpose.xlu0.b32.cont [10/16] %v31, 128
    %64 = vxpose.xlu0.b32.cont [11/16] %v32, 128
    %65 = vxpose.xlu0.b32.cont [12/16] %v33, 128
    %66 = vxpose.xlu0.b32.cont [13/16] %v34, 128
    %67 = vxpose.xlu0.b32.cont [14/16] %v35, 128
    %68 = vxpose.xlu0.b32.cont [15/16] %v36, 128
    %69 = vxpose.xlu0.b32.end [16/16] %v37, 128
    %v70 = vpop.trf.xlu0
    %v71 = vpop.trf.xlu0
    %v72 = vpop.trf.xlu0
    %v73 = vpop.trf.xlu0
    %v74 = vpop.trf.xlu0
    %v75 = vpop.trf.xlu0
    %v76 = vpop.trf.xlu0
    %v77 = vpop.trf.xlu0
    %v78 = vpop.trf.xlu0
    %v79 = vpop.trf.xlu0
    %v80 = vpop.trf.xlu0
    %v81 = vpop.trf.xlu0
    %v82 = vpop.trf.xlu0
    %v83 = vpop.trf.xlu0
    %v84 = vpop.trf.xlu0
    %v85 = vpop.trf.xlu0
    %86 = vxpose.xlu0.b32.start [1/16] %v38, 128
    %87 = vxpose.xlu0.b32.cont [2/16] %v39, 128
    %88 = vxpose.xlu0.b32.cont [3/16] %v40, 128
    %89 = vxpose.xlu0.b32.cont [4/16] %v41, 128
    %90 = vxpose.xlu0.b32.cont [5/16] %v42, 128
    %91 = vxpose.xlu0.b32.cont [6/16] %v43, 128
    %92 = vxpose.xlu0.b32.cont [7/16] %v44, 128
    %93 = vxpose.xlu0.b32.cont [8/16] %v45, 128
    %94 = vxpose.xlu0.b32.cont [9/16] %v46, 128
    %95 = vxpose.xlu0.b32.cont [10/16] %v47, 128
    %96 = vxpose.xlu0.b32.cont [11/16] %v48, 128
    %97 = vxpose.xlu0.b32.cont [12/16] %v49, 128
    %98 = vxpose.xlu0.b32.cont [13/16] %v50, 128
    %99 = vxpose.xlu0.b32.cont [14/16] %v51, 128
    %100 = vxpose.xlu0.b32.cont [15/16] %v52, 128
    %101 = vxpose.xlu0.b32.end [16/16] %v53, 128
    %v102 = vpop.trf.xlu0
    %v103 = vpop.trf.xlu0
    %v104 = vpop.trf.xlu0
    %v105 = vpop.trf.xlu0
    %v106 = vpop.trf.xlu0
    %v107 = vpop.trf.xlu0
    %v108 = vpop.trf.xlu0
    %v109 = vpop.trf.xlu0
    %v110 = vpop.trf.xlu0
    %v111 = vpop.trf.xlu0
    %v112 = vpop.trf.xlu0
    %v113 = vpop.trf.xlu0
    %v114 = vpop.trf.xlu0
    %v115 = vpop.trf.xlu0
    %v116 = vpop.trf.xlu0
    %v117 = vpop.trf.xlu0
    %v118 = vld [vmem:[%s1] sm:$0xff]
    %v119 = vld [vmem:[%s3] sm:$0xff]
    %v120 = vld [vmem:[%s3 + $0x8] sm:$0xff]
    %v121 = vld [vmem:[%s3 + $0x10] sm:$0xff]
    %v122 = vld [vmem:[%s3 + $0x18] sm:$0xff]
    %v123 = vlaneseq
    %v124 = vshrl.u32 %v123, 7
    %v125 = vadd.s32 %v124, 8
    %v126 = vadd.s32 %v124, 16
    %v127 = vadd.s32 %v124, 24
    %v128 = vadd.s32 %v124, 32
    %v129 = vadd.s32 %v124, 40
    %v130 = vadd.s32 %v124, 48
    %v131 = vadd.s32 %v124, 56
    %v132 = vadd.s32 %v124, 64
    %v133 = vadd.s32 %v124, 72
    %v134 = vadd.s32 %v124, 80
    %v135 = vadd.s32 %v124, 88
    %v136 = vadd.s32 %v124, 96
    %v137 = vadd.s32 %v124, 104
    %v138 = vadd.s32 %v124, 112
    %v139 = vadd.s32 %v124, 120
    %vm140 = vcmp.gt.s32.totalorder %v124, 0
    %vm141 = vcmp.gt.s32.totalorder %v125, 0
    %vm142 = vcmp.gt.s32.totalorder %v126, 0
    %vm143 = vcmp.gt.s32.totalorder %v127, 0
    %vm144 = vcmp.gt.s32.totalorder %v128, 0
    %vm145 = vcmp.gt.s32.totalorder %v129, 0
    %vm146 = vcmp.gt.s32.totalorder %v130, 0
    %vm147 = vcmp.gt.s32.totalorder %v131, 0
    %vm148 = vcmp.gt.s32.totalorder %v132, 0
    %vm149 = vcmp.gt.s32.totalorder %v133, 0
    %vm150 = vcmp.gt.s32.totalorder %v134, 0
    %vm151 = vcmp.gt.s32.totalorder %v135, 0
    %vm152 = vcmp.gt.s32.totalorder %v136, 0
    %vm153 = vcmp.gt.s32.totalorder %v137, 0
    %vm154 = vcmp.gt.s32.totalorder %v138, 0
    %vm155 = vcmp.gt.s32.totalorder %v139, 0
    %vm156 = vcmp.lt.s32.totalorder %v124, 127
    %vm157 = vcmp.lt.s32.totalorder %v125, 127
    %vm158 = vcmp.lt.s32.totalorder %v126, 127
    %vm159 = vcmp.lt.s32.totalorder %v127, 127
    %vm160 = vcmp.lt.s32.totalorder %v128, 127
    %vm161 = vcmp.lt.s32.totalorder %v129, 127
    %vm162 = vcmp.lt.s32.totalorder %v130, 127
    %vm163 = vcmp.lt.s32.totalorder %v131, 127
    %vm164 = vcmp.lt.s32.totalorder %v132, 127
    %vm165 = vcmp.lt.s32.totalorder %v133, 127
    %vm166 = vcmp.lt.s32.totalorder %v134, 127
    %vm167 = vcmp.lt.s32.totalorder %v135, 127
    %vm168 = vcmp.lt.s32.totalorder %v136, 127
    %vm169 = vcmp.lt.s32.totalorder %v137, 127
    %vm170 = vcmp.lt.s32.totalorder %v138, 127
    %vm171 = vcmp.lt.s32.totalorder %v139, 127
    %v172 = vsel %vm140, 1, 0
    %v173 = vsel %vm141, 1, 0
    %v174 = vsel %vm142, 1, 0
    %v175 = vsel %vm143, 1, 0
    %v176 = vsel %vm144, 1, 0
    %v177 = vsel %vm145, 1, 0
    %v178 = vsel %vm146, 1, 0
    %v179 = vsel %vm147, 1, 0
    %v180 = vsel %vm148, 1, 0
    %v181 = vsel %vm149, 1, 0
    %v182 = vsel %vm150, 1, 0
    %v183 = vsel %vm151, 1, 0
    %v184 = vsel %vm152, 1, 0
    %v185 = vsel %vm153, 1, 0
    %v186 = vsel %vm154, 1, 0
    %v187 = vsel %vm155, 1, 0
    %vm188 = vcmp.eq.s32.totalorder %v172, 1
    %vm189 = vcmp.eq.s32.totalorder %v173, 1
    %vm190 = vcmp.eq.s32.totalorder %v174, 1
    %vm191 = vcmp.eq.s32.totalorder %v175, 1
    %vm192 = vcmp.eq.s32.totalorder %v176, 1
    %vm193 = vcmp.eq.s32.totalorder %v177, 1
    %vm194 = vcmp.eq.s32.totalorder %v178, 1
    %vm195 = vcmp.eq.s32.totalorder %v179, 1
    %vm196 = vcmp.eq.s32.totalorder %v180, 1
    %vm197 = vcmp.eq.s32.totalorder %v181, 1
    %vm198 = vcmp.eq.s32.totalorder %v182, 1
    %vm199 = vcmp.eq.s32.totalorder %v183, 1
    %vm200 = vcmp.eq.s32.totalorder %v184, 1
    %vm201 = vcmp.eq.s32.totalorder %v185, 1
    %vm202 = vcmp.eq.s32.totalorder %v186, 1
    %vm203 = vcmp.eq.s32.totalorder %v187, 1
    %v204 = vlaneseq
    %v205 = vshrl.u32 %v204, 7
    %v206 = vsub.s32 0, %v205
    %v207 = vrot.slane %v118, %v206
    %v208 = vsel %vm188, %v207, 0.0
    %v209 = vsel %vm189, %v207, 0.0
    %v210 = vsel %vm190, %v207, 0.0
    %v211 = vsel %vm191, %v207, 0.0
    %v212 = vsel %vm192, %v207, 0.0
    %v213 = vsel %vm193, %v207, 0.0
    %v214 = vsel %vm194, %v207, 0.0
    %v215 = vsel %vm195, %v207, 0.0
    %v216 = vsel %vm196, %v207, 0.0
    %v217 = vsel %vm197, %v207, 0.0
    %v218 = vsel %vm198, %v207, 0.0
    %v219 = vsel %vm199, %v207, 0.0
    %v220 = vsel %vm200, %v207, 0.0
    %v221 = vsel %vm201, %v207, 0.0
    %v222 = vsel %vm202, %v207, 0.0
    %v223 = vsel %vm203, %v207, 0.0
    %v224 = vsel %vm156, 1, 0
    %v225 = vsel %vm157, 1, 0
    %v226 = vsel %vm158, 1, 0
    %v227 = vsel %vm159, 1, 0
    %v228 = vsel %vm160, 1, 0
    %v229 = vsel %vm161, 1, 0
    %v230 = vsel %vm162, 1, 0
    %v231 = vsel %vm163, 1, 0
    %v232 = vsel %vm164, 1, 0
    %v233 = vsel %vm165, 1, 0
    %v234 = vsel %vm166, 1, 0
    %v235 = vsel %vm167, 1, 0
    %v236 = vsel %vm168, 1, 0
    %v237 = vsel %vm169, 1, 0
    %v238 = vsel %vm170, 1, 0
    %v239 = vsel %vm171, 1, 0
    %vm240 = vcmp.eq.s32.totalorder %v224, 1
    %vm241 = vcmp.eq.s32.totalorder %v225, 1
    %vm242 = vcmp.eq.s32.totalorder %v226, 1
    %vm243 = vcmp.eq.s32.totalorder %v227, 1
    %vm244 = vcmp.eq.s32.totalorder %v228, 1
    %vm245 = vcmp.eq.s32.totalorder %v229, 1
    %vm246 = vcmp.eq.s32.totalorder %v230, 1
    %vm247 = vcmp.eq.s32.totalorder %v231, 1
    %vm248 = vcmp.eq.s32.totalorder %v232, 1
    %vm249 = vcmp.eq.s32.totalorder %v233, 1
    %vm250 = vcmp.eq.s32.totalorder %v234, 1
    %vm251 = vcmp.eq.s32.totalorder %v235, 1
    %vm252 = vcmp.eq.s32.totalorder %v236, 1
    %vm253 = vcmp.eq.s32.totalorder %v237, 1
    %vm254 = vcmp.eq.s32.totalorder %v238, 1
    %vm255 = vcmp.eq.s32.totalorder %v239, 1
    %v256 = vlaneseq
    %v257 = vshrl.u32 %v256, 7
    %v258 = vsub.s32 2, %v257
    %v259 = vrot.slane %v118, %v258
    %v260 = vsel %vm240, %v259, 0.0
    %v261 = vsel %vm241, %v259, 0.0
    %v262 = vsel %vm242, %v259, 0.0
    %v263 = vsel %vm243, %v259, 0.0
    %v264 = vsel %vm244, %v259, 0.0
    %v265 = vsel %vm245, %v259, 0.0
    %v266 = vsel %vm246, %v259, 0.0
    %v267 = vsel %vm247, %v259, 0.0
    %v268 = vsel %vm248, %v259, 0.0
    %v269 = vsel %vm249, %v259, 0.0
    %v270 = vsel %vm250, %v259, 0.0
    %v271 = vsel %vm251, %v259, 0.0
    %v272 = vsel %vm252, %v259, 0.0
    %v273 = vsel %vm253, %v259, 0.0
    %v274 = vsel %vm254, %v259, 0.0
    %v275 = vsel %vm255, %v259, 0.0
    %v276 = vrot.slane %v70, 7
    %v277 = vrot.slane %v102, 7
    %v278 = vrot.slane %v71, 7
    %v279 = vrot.slane %v103, 7
    %v280 = vrot.slane %v72, 7
    %v281 = vrot.slane %v104, 7
    %v282 = vrot.slane %v73, 7
    %v283 = vrot.slane %v105, 7
    %v284 = vrot.slane %v74, 7
    %v285 = vrot.slane %v106, 7
    %v286 = vrot.slane %v75, 7
    %v287 = vrot.slane %v107, 7
    %v288 = vrot.slane %v76, 7
    %v289 = vrot.slane %v108, 7
    %v290 = vrot.slane %v77, 7
    %v291 = vrot.slane %v109, 7
    %v292 = vrot.slane %v78, 7
    %v293 = vrot.slane %v110, 7
    %v294 = vrot.slane %v79, 7
    %v295 = vrot.slane %v111, 7
    %v296 = vrot.slane %v80, 7
    %v297 = vrot.slane %v112, 7
    %v298 = vrot.slane %v81, 7
    %v299 = vrot.slane %v113, 7
    %v300 = vrot.slane %v82, 7
    %v301 = vrot.slane %v114, 7
    %v302 = vrot.slane %v83, 7
    %v303 = vrot.slane %v115, 7
    %v304 = vrot.slane %v84, 7
    %v305 = vrot.slane %v116, 7
    %v306 = vrot.slane %v85, 7
    %v307 = vrot.slane %v117, 7
    %vm308 = vcmp.lt.s32.totalorder %v124, 1
    %v309 = vsel %vm308, %v304, %v306
    %v310 = vsel %vm308, %v305, %v307
    %v311 = vsel %vm308, %v302, %v304
    %v312 = vsel %vm308, %v303, %v305
    %v313 = vsel %vm308, %v300, %v302
    %v314 = vsel %vm308, %v301, %v303
    %v315 = vsel %vm308, %v298, %v300
    %v316 = vsel %vm308, %v299, %v301
    %v317 = vsel %vm308, %v296, %v298
    %v318 = vsel %vm308, %v297, %v299
    %v319 = vsel %vm308, %v294, %v296
    %v320 = vsel %vm308, %v295, %v297
    %v321 = vsel %vm308, %v292, %v294
    %v322 = vsel %vm308, %v293, %v295
    %v323 = vsel %vm308, %v290, %v292
    %v324 = vsel %vm308, %v291, %v293
    %v325 = vsel %vm308, %v288, %v290
    %v326 = vsel %vm308, %v289, %v291
    %v327 = vsel %vm308, %v286, %v288
    %v328 = vsel %vm308, %v287, %v289
    %v329 = vsel %vm308, %v284, %v286
    %v330 = vsel %vm308, %v285, %v287
    %v331 = vsel %vm308, %v282, %v284
    %v332 = vsel %vm308, %v283, %v285
    %v333 = vsel %vm308, %v280, %v282
    %v334 = vsel %vm308, %v281, %v283
    %v335 = vsel %vm308, %v278, %v280
    %v336 = vsel %vm308, %v279, %v281
    %v337 = vsel %vm308, %v276, %v278
    %v338 = vsel %vm308, %v277, %v279
    %v339 = vsel %vm308, %v306, %v276
    %v340 = vsel %vm308, %v307, %v277
    %v341 = vmul.f32 %v339, %v208
    %v342 = vmul.f32 %v337, %v209
    %v343 = vmul.f32 %v335, %v210
    %v344 = vmul.f32 %v333, %v211
    %v345 = vmul.f32 %v331, %v212
    %v346 = vmul.f32 %v329, %v213
    %v347 = vmul.f32 %v327, %v214
    %v348 = vmul.f32 %v325, %v215
    %v349 = vmul.f32 %v323, %v216
    %v350 = vmul.f32 %v321, %v217
    %v351 = vmul.f32 %v319, %v218
    %v352 = vmul.f32 %v317, %v219
    %v353 = vmul.f32 %v315, %v220
    %v354 = vmul.f32 %v313, %v221
    %v355 = vmul.f32 %v311, %v222
    %v356 = vmul.f32 %v309, %v223
    %v357 = vmul.f32 %v340, %v208
    %v358 = vmul.f32 %v338, %v209
    %v359 = vmul.f32 %v336, %v210
    %v360 = vmul.f32 %v334, %v211
    %v361 = vmul.f32 %v332, %v212
    %v362 = vmul.f32 %v330, %v213
    %v363 = vmul.f32 %v328, %v214
    %v364 = vmul.f32 %v326, %v215
    %v365 = vmul.f32 %v324, %v216
    %v366 = vmul.f32 %v322, %v217
    %v367 = vmul.f32 %v320, %v218
    %v368 = vmul.f32 %v318, %v219
    %v369 = vmul.f32 %v316, %v220
    %v370 = vmul.f32 %v314, %v221
    %v371 = vmul.f32 %v312, %v222
    %v372 = vmul.f32 %v310, %v223
    %v373 = vlaneseq
    %v374 = vshrl.u32 %v373, 7
    %v375 = vsub.s32 1, %v374
    %v376 = vrot.slane %v118, %v375
    %v377 = vmul.f32 %v70, %v376
    %v378 = vmul.f32 %v71, %v376
    %v379 = vmul.f32 %v72, %v376
    %v380 = vmul.f32 %v73, %v376
    %v381 = vmul.f32 %v74, %v376
    %v382 = vmul.f32 %v75, %v376
    %v383 = vmul.f32 %v76, %v376
    %v384 = vmul.f32 %v77, %v376
    %v385 = vmul.f32 %v78, %v376
    %v386 = vmul.f32 %v79, %v376
    %v387 = vmul.f32 %v80, %v376
    %v388 = vmul.f32 %v81, %v376
    %v389 = vmul.f32 %v82, %v376
    %v390 = vmul.f32 %v83, %v376
    %v391 = vmul.f32 %v84, %v376
    %v392 = vmul.f32 %v85, %v376
    %v393 = vmul.f32 %v102, %v376
    %v394 = vmul.f32 %v103, %v376
    %v395 = vmul.f32 %v104, %v376
    %v396 = vmul.f32 %v105, %v376
    %v397 = vmul.f32 %v106, %v376
    %v398 = vmul.f32 %v107, %v376
    %v399 = vmul.f32 %v108, %v376
    %v400 = vmul.f32 %v109, %v376
    %v401 = vmul.f32 %v110, %v376
    %v402 = vmul.f32 %v111, %v376
    %v403 = vmul.f32 %v112, %v376
    %v404 = vmul.f32 %v113, %v376
    %v405 = vmul.f32 %v114, %v376
    %v406 = vmul.f32 %v115, %v376
    %v407 = vmul.f32 %v116, %v376
    %v408 = vmul.f32 %v117, %v376
    %v409 = vadd.f32 %v341, %v377
    %v410 = vadd.f32 %v342, %v378
    %v411 = vadd.f32 %v343, %v379
    %v412 = vadd.f32 %v344, %v380
    %v413 = vadd.f32 %v345, %v381
    %v414 = vadd.f32 %v346, %v382
    %v415 = vadd.f32 %v347, %v383
    %v416 = vadd.f32 %v348, %v384
    %v417 = vadd.f32 %v349, %v385
    %v418 = vadd.f32 %v350, %v386
    %v419 = vadd.f32 %v351, %v387
    %v420 = vadd.f32 %v352, %v388
    %v421 = vadd.f32 %v353, %v389
    %v422 = vadd.f32 %v354, %v390
    %v423 = vadd.f32 %v355, %v391
    %v424 = vadd.f32 %v356, %v392
    %v425 = vadd.f32 %v357, %v393
    %v426 = vadd.f32 %v358, %v394
    %v427 = vadd.f32 %v359, %v395
    %v428 = vadd.f32 %v360, %v396
    %v429 = vadd.f32 %v361, %v397
    %v430 = vadd.f32 %v362, %v398
    %v431 = vadd.f32 %v363, %v399
    %v432 = vadd.f32 %v364, %v400
    %v433 = vadd.f32 %v365, %v401
    %v434 = vadd.f32 %v366, %v402
    %v435 = vadd.f32 %v367, %v403
    %v436 = vadd.f32 %v368, %v404
    %v437 = vadd.f32 %v369, %v405
    %v438 = vadd.f32 %v370, %v406
    %v439 = vadd.f32 %v371, %v407
    %v440 = vadd.f32 %v372, %v408
    %v441 = vrot.slane %v70, 1
    %v442 = vrot.slane %v102, 1
    %v443 = vrot.slane %v71, 1
    %v444 = vrot.slane %v103, 1
    %v445 = vrot.slane %v72, 1
    %v446 = vrot.slane %v104, 1
    %v447 = vrot.slane %v73, 1
    %v448 = vrot.slane %v105, 1
    %v449 = vrot.slane %v74, 1
    %v450 = vrot.slane %v106, 1
    %v451 = vrot.slane %v75, 1
    %v452 = vrot.slane %v107, 1
    %v453 = vrot.slane %v76, 1
    %v454 = vrot.slane %v108, 1
    %v455 = vrot.slane %v77, 1
    %v456 = vrot.slane %v109, 1
    %v457 = vrot.slane %v78, 1
    %v458 = vrot.slane %v110, 1
    %v459 = vrot.slane %v79, 1
    %v460 = vrot.slane %v111, 1
    %v461 = vrot.slane %v80, 1
    %v462 = vrot.slane %v112, 1
    %v463 = vrot.slane %v81, 1
    %v464 = vrot.slane %v113, 1
    %v465 = vrot.slane %v82, 1
    %v466 = vrot.slane %v114, 1
    %v467 = vrot.slane %v83, 1
    %v468 = vrot.slane %v115, 1
    %v469 = vrot.slane %v84, 1
    %v470 = vrot.slane %v116, 1
    %v471 = vrot.slane %v85, 1
    %v472 = vrot.slane %v117, 1
    %vm473 = vcmp.lt.s32.totalorder %v124, 7
    %v474 = vsel %vm473, %v469, %v471
    %v475 = vsel %vm473, %v470, %v472
    %v476 = vsel %vm473, %v467, %v469
    %v477 = vsel %vm473, %v468, %v470
    %v478 = vsel %vm473, %v465, %v467
    %v479 = vsel %vm473, %v466, %v468
    %v480 = vsel %vm473, %v463, %v465
    %v481 = vsel %vm473, %v464, %v466
    %v482 = vsel %vm473, %v461, %v463
    %v483 = vsel %vm473, %v462, %v464
    %v484 = vsel %vm473, %v459, %v461
    %v485 = vsel %vm473, %v460, %v462
    %v486 = vsel %vm473, %v457, %v459
    %v487 = vsel %vm473, %v458, %v460
    %v488 = vsel %vm473, %v455, %v457
    %v489 = vsel %vm473, %v456, %v458
    %v490 = vsel %vm473, %v453, %v455
    %v491 = vsel %vm473, %v454, %v456
    %v492 = vsel %vm473, %v451, %v453
    %v493 = vsel %vm473, %v452, %v454
    %v494 = vsel %vm473, %v449, %v451
    %v495 = vsel %vm473, %v450, %v452
    %v496 = vsel %vm473, %v447, %v449
    %v497 = vsel %vm473, %v448, %v450
    %v498 = vsel %vm473, %v445, %v447
    %v499 = vsel %vm473, %v446, %v448
    %v500 = vsel %vm473, %v443, %v445
    %v501 = vsel %vm473, %v444, %v446
    %v502 = vsel %vm473, %v441, %v443
    %v503 = vsel %vm473, %v442, %v444
    %v504 = vsel %vm473, %v471, %v441
    %v505 = vsel %vm473, %v472, %v442
    %v506 = vmul.f32 %v502, %v260
    %v507 = vmul.f32 %v500, %v261
    %v508 = vmul.f32 %v498, %v262
    %v509 = vmul.f32 %v496, %v263
    %v510 = vmul.f32 %v494, %v264
    %v511 = vmul.f32 %v492, %v265
    %v512 = vmul.f32 %v490, %v266
    %v513 = vmul.f32 %v488, %v267
    %v514 = vmul.f32 %v486, %v268
    %v515 = vmul.f32 %v484, %v269
    %v516 = vmul.f32 %v482, %v270
    %v517 = vmul.f32 %v480, %v271
    %v518 = vmul.f32 %v478, %v272
    %v519 = vmul.f32 %v476, %v273
    %v520 = vmul.f32 %v474, %v274
    %v521 = vmul.f32 %v504, %v275
    %v522 = vmul.f32 %v503, %v260
    %v523 = vmul.f32 %v501, %v261
    %v524 = vmul.f32 %v499, %v262
    %v525 = vmul.f32 %v497, %v263
    %v526 = vmul.f32 %v495, %v264
    %v527 = vmul.f32 %v493, %v265
    %v528 = vmul.f32 %v491, %v266
    %v529 = vmul.f32 %v489, %v267
    %v530 = vmul.f32 %v487, %v268
    %v531 = vmul.f32 %v485, %v269
    %v532 = vmul.f32 %v483, %v270
    %v533 = vmul.f32 %v481, %v271
    %v534 = vmul.f32 %v479, %v272
    %v535 = vmul.f32 %v477, %v273
    %v536 = vmul.f32 %v475, %v274
    %v537 = vmul.f32 %v505, %v275
    %v538 = vadd.f32 %v409, %v506
    %v539 = vadd.f32 %v410, %v507
    %v540 = vadd.f32 %v411, %v508
    %v541 = vadd.f32 %v412, %v509
    %v542 = vadd.f32 %v413, %v510
    %v543 = vadd.f32 %v414, %v511
    %v544 = vadd.f32 %v415, %v512
    %v545 = vadd.f32 %v416, %v513
    %v546 = vadd.f32 %v417, %v514
    %v547 = vadd.f32 %v418, %v515
    %v548 = vadd.f32 %v419, %v516
    %v549 = vadd.f32 %v420, %v517
    %v550 = vadd.f32 %v421, %v518
    %v551 = vadd.f32 %v422, %v519
    %v552 = vadd.f32 %v423, %v520
    %v553 = vadd.f32 %v424, %v521
    %v554 = vadd.f32 %v425, %v522
    %v555 = vadd.f32 %v426, %v523
    %v556 = vadd.f32 %v427, %v524
    %v557 = vadd.f32 %v428, %v525
    %v558 = vadd.f32 %v429, %v526
    %v559 = vadd.f32 %v430, %v527
    %v560 = vadd.f32 %v431, %v528
    %v561 = vadd.f32 %v432, %v529
    %v562 = vadd.f32 %v433, %v530
    %v563 = vadd.f32 %v434, %v531
    %v564 = vadd.f32 %v435, %v532
    %v565 = vadd.f32 %v436, %v533
    %v566 = vadd.f32 %v437, %v534
    %v567 = vadd.f32 %v438, %v535
    %v568 = vadd.f32 %v439, %v536
    %v569 = vadd.f32 %v440, %v537
    %v570 = vadd.f32 %v538, %v539
    %v571 = vadd.f32 %v570, %v540
    %v572 = vadd.f32 %v571, %v541
    %v573 = vadd.f32 %v572, %v542
    %v574 = vadd.f32 %v573, %v543
    %v575 = vadd.f32 %v574, %v544
    %v576 = vadd.f32 %v575, %v545
    %v577 = vadd.f32 %v576, %v546
    %v578 = vadd.f32 %v577, %v547
    %v579 = vadd.f32 %v578, %v548
    %v580 = vadd.f32 %v579, %v549
    %v581 = vadd.f32 %v580, %v550
    %v582 = vadd.f32 %v581, %v551
    %v583 = vadd.f32 %v582, %v552
    %v584 = vadd.f32 %v583, %v553
    %v585 = vadd.f32 %v584, %v554
    %v586 = vadd.f32 %v585, %v555
    %v587 = vadd.f32 %v586, %v556
    %v588 = vadd.f32 %v587, %v557
    %v589 = vadd.f32 %v588, %v558
    %v590 = vadd.f32 %v589, %v559
    %v591 = vadd.f32 %v590, %v560
    %v592 = vadd.f32 %v591, %v561
    %v593 = vadd.f32 %v592, %v562
    %v594 = vadd.f32 %v593, %v563
    %v595 = vadd.f32 %v594, %v564
    %v596 = vadd.f32 %v595, %v565
    %v597 = vadd.f32 %v596, %v566
    %v598 = vadd.f32 %v597, %v567
    %v599 = vadd.f32 %v598, %v568
    %v600 = vadd.f32 %v599, %v569
    %v601 = vrot.slane %v600, 4
    %v602 = vadd.f32 %v600, %v601
    %v603 = vrot.slane %v602, 2
    %v604 = vadd.f32 %v602, %v603
    %v605 = vrot.slane %v604, 1
    %v606 = vadd.f32 %v604, %v605
    %v607 = vmul.f32 %v606, 0.00390625
    %v608 = vmul.f32 %v538, %v538
    %v609 = vmul.f32 %v539, %v539
    %v610 = vmul.f32 %v540, %v540
    %v611 = vmul.f32 %v541, %v541
    %v612 = vmul.f32 %v542, %v542
    %v613 = vmul.f32 %v543, %v543
    %v614 = vmul.f32 %v544, %v544
    %v615 = vmul.f32 %v545, %v545
    %v616 = vmul.f32 %v546, %v546
    %v617 = vmul.f32 %v547, %v547
    %v618 = vmul.f32 %v548, %v548
    %v619 = vmul.f32 %v549, %v549
    %v620 = vmul.f32 %v550, %v550
    %v621 = vmul.f32 %v551, %v551
    %v622 = vmul.f32 %v552, %v552
    %v623 = vmul.f32 %v553, %v553
    %v624 = vmul.f32 %v554, %v554
    %v625 = vmul.f32 %v555, %v555
    %v626 = vmul.f32 %v556, %v556
    %v627 = vmul.f32 %v557, %v557
    %v628 = vmul.f32 %v558, %v558
    %v629 = vmul.f32 %v559, %v559
    %v630 = vmul.f32 %v560, %v560
    %v631 = vmul.f32 %v561, %v561
    %v632 = vmul.f32 %v562, %v562
    %v633 = vmul.f32 %v563, %v563
    %v634 = vmul.f32 %v564, %v564
    %v635 = vmul.f32 %v565, %v565
    %v636 = vmul.f32 %v566, %v566
    %v637 = vmul.f32 %v567, %v567
    %v638 = vmul.f32 %v568, %v568
    %v639 = vmul.f32 %v569, %v569
    %v640 = vadd.f32 %v608, %v609
    %v641 = vadd.f32 %v640, %v610
    %v642 = vadd.f32 %v641, %v611
    %v643 = vadd.f32 %v642, %v612
    %v644 = vadd.f32 %v643, %v613
    %v645 = vadd.f32 %v644, %v614
    %v646 = vadd.f32 %v645, %v615
    %v647 = vadd.f32 %v646, %v616
    %v648 = vadd.f32 %v647, %v617
    %v649 = vadd.f32 %v648, %v618
    %v650 = vadd.f32 %v649, %v619
    %v651 = vadd.f32 %v650, %v620
    %v652 = vadd.f32 %v651, %v621
    %v653 = vadd.f32 %v652, %v622
    %v654 = vadd.f32 %v653, %v623
    %v655 = vadd.f32 %v654, %v624
    %v656 = vadd.f32 %v655, %v625
    %v657 = vadd.f32 %v656, %v626
    %v658 = vadd.f32 %v657, %v627
    %v659 = vadd.f32 %v658, %v628
    %v660 = vadd.f32 %v659, %v629
    %v661 = vadd.f32 %v660, %v630
    %v662 = vadd.f32 %v661, %v631
    %v663 = vadd.f32 %v662, %v632
    %v664 = vadd.f32 %v663, %v633
    %v665 = vadd.f32 %v664, %v634
    %v666 = vadd.f32 %v665, %v635
    %v667 = vadd.f32 %v666, %v636
    %v668 = vadd.f32 %v667, %v637
    %v669 = vadd.f32 %v668, %v638
    %v670 = vadd.f32 %v669, %v639
    %v671 = vrot.slane %v670, 4
    %v672 = vadd.f32 %v670, %v671
    %v673 = vrot.slane %v672, 2
    %v674 = vadd.f32 %v672, %v673
    %v675 = vrot.slane %v674, 1
    %v676 = vadd.f32 %v674, %v675
    %v677 = vmul.f32 %v676, 0.00390625
    %v678 = vmul.f32 %v607, %v607
    %v679 = vsub.f32 %v677, %v678
    %v680 = vmax.f32 %v679, 0.0
    %v681 = vadd.f32 %v680, 1e-05
    %v682 = vrsqrt.pop %v681
    %v683 = vmul.f32 %v118, %v682
    %v684 = vmul.f32 %v607, %v683
    %v686 = vrot.slane %v684, 7
    %v688 = vsub.f32 %v118, %v686
    %v689 = vlaneseq
    %v690 = vshrl.u32 %v689, 7
    %v691 = vsub.s32 3, %v690
    %v692 = vrot.slane %v683, %v691
    %v693 = vmul.f32 %v538, %v692
    %v694 = vmul.f32 %v539, %v692
    %v695 = vmul.f32 %v540, %v692
    %v696 = vmul.f32 %v541, %v692
    %v697 = vmul.f32 %v542, %v692
    %v698 = vmul.f32 %v543, %v692
    %v699 = vmul.f32 %v544, %v692
    %v700 = vmul.f32 %v545, %v692
    %v701 = vmul.f32 %v546, %v692
    %v702 = vmul.f32 %v547, %v692
    %v703 = vmul.f32 %v548, %v692
    %v704 = vmul.f32 %v549, %v692
    %v705 = vmul.f32 %v550, %v692
    %v706 = vmul.f32 %v551, %v692
    %v707 = vmul.f32 %v552, %v692
    %v708 = vmul.f32 %v553, %v692
    %v709 = vmul.f32 %v554, %v692
    %v710 = vmul.f32 %v555, %v692
    %v711 = vmul.f32 %v556, %v692
    %v712 = vmul.f32 %v557, %v692
    %v713 = vmul.f32 %v558, %v692
    %v714 = vmul.f32 %v559, %v692
    %v715 = vmul.f32 %v560, %v692
    %v716 = vmul.f32 %v561, %v692
    %v717 = vmul.f32 %v562, %v692
    %v718 = vmul.f32 %v563, %v692
    %v719 = vmul.f32 %v564, %v692
    %v720 = vmul.f32 %v565, %v692
    %v721 = vmul.f32 %v566, %v692
    %v722 = vmul.f32 %v567, %v692
    %v723 = vmul.f32 %v568, %v692
    %v724 = vmul.f32 %v569, %v692
    %v725 = vlaneseq
    %v726 = vshrl.u32 %v725, 7
    %v727 = vsub.s32 4, %v726
    %v728 = vrot.slane %v688, %v727
    %v729 = vadd.f32 %v693, %v728
    %v730 = vadd.f32 %v694, %v728
    %v731 = vadd.f32 %v695, %v728
    %v732 = vadd.f32 %v696, %v728
    %v733 = vadd.f32 %v697, %v728
    %v734 = vadd.f32 %v698, %v728
    %v735 = vadd.f32 %v699, %v728
    %v736 = vadd.f32 %v700, %v728
    %v737 = vadd.f32 %v701, %v728
    %v738 = vadd.f32 %v702, %v728
    %v739 = vadd.f32 %v703, %v728
    %v740 = vadd.f32 %v704, %v728
    %v741 = vadd.f32 %v705, %v728
    %v742 = vadd.f32 %v706, %v728
    %v743 = vadd.f32 %v707, %v728
    %v744 = vadd.f32 %v708, %v728
    %v745 = vadd.f32 %v709, %v728
    %v746 = vadd.f32 %v710, %v728
    %v747 = vadd.f32 %v711, %v728
    %v748 = vadd.f32 %v712, %v728
    %v749 = vadd.f32 %v713, %v728
    %v750 = vadd.f32 %v714, %v728
    %v751 = vadd.f32 %v715, %v728
    %v752 = vadd.f32 %v716, %v728
    %v753 = vadd.f32 %v717, %v728
    %v754 = vadd.f32 %v718, %v728
    %v755 = vadd.f32 %v719, %v728
    %v756 = vadd.f32 %v720, %v728
    %v757 = vadd.f32 %v721, %v728
    %v758 = vadd.f32 %v722, %v728
    %v759 = vadd.f32 %v723, %v728
    %v760 = vadd.f32 %v724, %v728
    %v761 = vmax.f32 %v729, 0.0
    %v762 = vmax.f32 %v730, 0.0
    %v763 = vmax.f32 %v731, 0.0
    %v764 = vmax.f32 %v732, 0.0
    %v765 = vmax.f32 %v733, 0.0
    %v766 = vmax.f32 %v734, 0.0
    %v767 = vmax.f32 %v735, 0.0
    %v768 = vmax.f32 %v736, 0.0
    %v769 = vmax.f32 %v737, 0.0
    %v770 = vmax.f32 %v738, 0.0
    %v771 = vmax.f32 %v739, 0.0
    %v772 = vmax.f32 %v740, 0.0
    %v773 = vmax.f32 %v741, 0.0
    %v774 = vmax.f32 %v742, 0.0
    %v775 = vmax.f32 %v743, 0.0
    %v776 = vmax.f32 %v744, 0.0
    %v777 = vmax.f32 %v745, 0.0
    %v778 = vmax.f32 %v746, 0.0
    %v779 = vmax.f32 %v747, 0.0
    %v780 = vmax.f32 %v748, 0.0
    %v781 = vmax.f32 %v749, 0.0
    %v782 = vmax.f32 %v750, 0.0
    %v783 = vmax.f32 %v751, 0.0
    %v784 = vmax.f32 %v752, 0.0
    %v785 = vmax.f32 %v753, 0.0
    %v786 = vmax.f32 %v754, 0.0
    %v787 = vmax.f32 %v755, 0.0
    %v788 = vmax.f32 %v756, 0.0
    %v789 = vmax.f32 %v757, 0.0
    %v790 = vmax.f32 %v758, 0.0
    %v791 = vmax.f32 %v759, 0.0
    %v792 = vmax.f32 %v760, 0.0
    %v793 = vld [vmem:[%s2] sm:$0xff]
    %v794 = vld [vmem:[%s2 + $0x8] sm:$0xff]
    %v795 = vld [vmem:[%s2 + $0x10] sm:$0xff]
    %v796 = vld [vmem:[%s2 + $0x18] sm:$0xff]
    %v797 = vld [vmem:[%s2 + $0x20] sm:$0xff]
    %v798 = vld [vmem:[%s2 + $0x28] sm:$0xff]
    %v799 = vld [vmem:[%s2 + $0x30] sm:$0xff]
    %v800 = vld [vmem:[%s2 + $0x38] sm:$0xff]
    %v801 = vld [vmem:[%s2 + $0x40] sm:$0xff]
    %v802 = vld [vmem:[%s2 + $0x48] sm:$0xff]
    %v803 = vld [vmem:[%s2 + $0x50] sm:$0xff]
    %v804 = vld [vmem:[%s2 + $0x58] sm:$0xff]
    %v805 = vld [vmem:[%s2 + $0x60] sm:$0xff]
    %v806 = vld [vmem:[%s2 + $0x68] sm:$0xff]
    %v807 = vld [vmem:[%s2 + $0x70] sm:$0xff]
    %v808 = vld [vmem:[%s2 + $0x78] sm:$0xff]
    %v809 = vpack.c.bf16 %v762, %v761
    %v810 = vpack.c.bf16 %v764, %v763
    %v811 = vpack.c.bf16 %v766, %v765
    %v812 = vpack.c.bf16 %v768, %v767
    %v813 = vpack.c.bf16 %v770, %v769
    %v814 = vpack.c.bf16 %v772, %v771
    %v815 = vpack.c.bf16 %v774, %v773
    %v816 = vpack.c.bf16 %v776, %v775
    %v817 = vpack.c.bf16 %v778, %v777
    %v818 = vpack.c.bf16 %v780, %v779
    %v819 = vpack.c.bf16 %v782, %v781
    %v820 = vpack.c.bf16 %v784, %v783
    %v821 = vpack.c.bf16 %v786, %v785
    %v822 = vpack.c.bf16 %v788, %v787
    %v823 = vpack.c.bf16 %v790, %v789
    %v824 = vpack.c.bf16 %v792, %v791
    %v841 = vunpack.c.l.b16 %v793
    %v842 = vunpack.c.h.b16 %v793
    %v843 = vunpack.c.l.b16 %v794
    %v844 = vunpack.c.h.b16 %v794
    %v845 = vunpack.c.l.b16 %v795
    %v846 = vunpack.c.h.b16 %v795
    %v847 = vunpack.c.l.b16 %v796
    %v848 = vunpack.c.h.b16 %v796
    %v849 = vunpack.c.l.b16 %v797
    %v850 = vunpack.c.h.b16 %v797
    %v851 = vunpack.c.l.b16 %v798
    %v852 = vunpack.c.h.b16 %v798
    %v853 = vunpack.c.l.b16 %v799
    %v854 = vunpack.c.h.b16 %v799
    %v855 = vunpack.c.l.b16 %v800
    %v856 = vunpack.c.h.b16 %v800
    %v857 = vunpack.c.l.b16 %v801
    %v858 = vunpack.c.h.b16 %v801
    %v859 = vunpack.c.l.b16 %v802
    %v860 = vunpack.c.h.b16 %v802
    %v861 = vunpack.c.l.b16 %v803
    %v862 = vunpack.c.h.b16 %v803
    %v863 = vunpack.c.l.b16 %v804
    %v864 = vunpack.c.h.b16 %v804
    %v865 = vunpack.c.l.b16 %v805
    %v866 = vunpack.c.h.b16 %v805
    %v867 = vunpack.c.l.b16 %v806
    %v868 = vunpack.c.h.b16 %v806
    %v869 = vunpack.c.l.b16 %v807
    %v870 = vunpack.c.h.b16 %v807
    %v871 = vunpack.c.l.b16 %v808
    %v872 = vunpack.c.h.b16 %v808
    %v873 = vpack.c.b16 %v843, %v841
    %v874 = vpack.c.b16 %v844, %v842
    %v875 = vpack.c.b16 %v847, %v845
    %v876 = vpack.c.b16 %v848, %v846
    %v877 = vpack.c.b16 %v851, %v849
    %v878 = vpack.c.b16 %v852, %v850
    %v879 = vpack.c.b16 %v855, %v853
    %v880 = vpack.c.b16 %v856, %v854
    %v881 = vpack.c.b16 %v859, %v857
    %v882 = vpack.c.b16 %v860, %v858
    %v883 = vpack.c.b16 %v863, %v861
    %v884 = vpack.c.b16 %v864, %v862
    %v885 = vpack.c.b16 %v867, %v865
    %v886 = vpack.c.b16 %v868, %v866
    %v887 = vpack.c.b16 %v871, %v869
    %v888 = vpack.c.b16 %v872, %v870
    %905 = vmatprep.subr.bf16.mxu0 %v888
    %906 = vmatpush1.bf16.msra.mxu0 %v887
    %907 = vmatprep.subr.bf16.mxu0 %v886
    %908 = vmatpush1.bf16.msra.mxu0 %v885
    %909 = vmatprep.subr.bf16.mxu0 %v884
    %910 = vmatpush1.bf16.msra.mxu0 %v883
    %911 = vmatprep.subr.bf16.mxu0 %v882
    %912 = vmatpush1.bf16.msra.mxu0 %v881
    %913 = vmatprep.subr.bf16.mxu0 %v880
    %914 = vmatpush1.bf16.msra.mxu0 %v879
    %915 = vmatprep.subr.bf16.mxu0 %v878
    %916 = vmatpush1.bf16.msra.mxu0 %v877
    %917 = vmatprep.subr.bf16.mxu0 %v876
    %918 = vmatpush1.bf16.msra.mxu0 %v875
    %919 = vmatprep.subr.bf16.mxu0 %v874
    %920 = vmatpush1.bf16.msra.mxu0 %v873
    %921 = vmatprep.subr.bf16.mxu0 0
    %922 = vmatpush2.bf16.msra.mxu0 0
    %923 = vmatprep.subr.bf16.mxu0 0
    %924 = vmatpush2.bf16.msra.mxu0 0
    %925 = vmatprep.subr.bf16.mxu0 0
    %926 = vmatpush2.bf16.msra.mxu0 0
    %927 = vmatprep.subr.bf16.mxu0 0
    %928 = vmatpush2.bf16.msra.mxu0 0
    %929 = vmatprep.subr.bf16.mxu0 0
    %930 = vmatpush2.bf16.msra.mxu0 0
    %931 = vmatprep.subr.bf16.mxu0 0
    %932 = vmatpush2.bf16.msra.mxu0 0
    %933 = vmatprep.subr.bf16.mxu0 0
    %934 = vmatpush2.bf16.msra.mxu0 0
    %935 = vmatprep.subr.bf16.mxu0 0
    %936 = vmatpush2.bf16.msra.mxu0 0
    %937 = vmatprep.mubr.bf16.mxu0 0
    %938 = vmatmul.mubr.bf16.gmra.mxu0 %v809
    %v939 = vpop.f32.mrf.mxu0
    %v940 = vadd.f32 0.0, %v939
    %v941 = vpop.f32.mrf.mxu0
    %v942 = vadd.f32 0.0, %v941
    %v943 = vpop.f32.mrf.mxu0
    %v944 = vadd.f32 0.0, %v943
    %v945 = vpop.f32.mrf.mxu0
    %v946 = vadd.f32 0.0, %v945
    %947 = vmatprep.mubr.bf16.mxu0 0
    %948 = vmatmul.mubr.bf16.gmra.mxu0 %v810
    %v949 = vpop.f32.mrf.mxu0
    %v950 = vadd.f32 0.0, %v949
    %v951 = vpop.f32.mrf.mxu0
    %v952 = vadd.f32 0.0, %v951
    %v953 = vpop.f32.mrf.mxu0
    %v954 = vadd.f32 0.0, %v953
    %v955 = vpop.f32.mrf.mxu0
    %v956 = vadd.f32 0.0, %v955
    %957 = vmatprep.mubr.bf16.mxu0 0
    %958 = vmatmul.mubr.bf16.gmra.mxu0 %v811
    %v959 = vpop.f32.mrf.mxu0
    %v960 = vadd.f32 0.0, %v959
    %v961 = vpop.f32.mrf.mxu0
    %v962 = vadd.f32 0.0, %v961
    %v963 = vpop.f32.mrf.mxu0
    %v964 = vadd.f32 0.0, %v963
    %v965 = vpop.f32.mrf.mxu0
    %v966 = vadd.f32 0.0, %v965
    %967 = vmatprep.mubr.bf16.mxu0 0
    %968 = vmatmul.mubr.bf16.gmra.mxu0 %v812
    %v969 = vpop.f32.mrf.mxu0
    %v970 = vadd.f32 0.0, %v969
    %v971 = vpop.f32.mrf.mxu0
    %v972 = vadd.f32 0.0, %v971
    %v973 = vpop.f32.mrf.mxu0
    %v974 = vadd.f32 0.0, %v973
    %v975 = vpop.f32.mrf.mxu0
    %v976 = vadd.f32 0.0, %v975
    %977 = vmatprep.mubr.bf16.mxu0 0
    %978 = vmatmul.mubr.bf16.gmra.mxu0 %v813
    %v979 = vpop.f32.mrf.mxu0
    %v980 = vadd.f32 0.0, %v979
    %v981 = vpop.f32.mrf.mxu0
    %v982 = vadd.f32 0.0, %v981
    %v983 = vpop.f32.mrf.mxu0
    %v984 = vadd.f32 0.0, %v983
    %v985 = vpop.f32.mrf.mxu0
    %v986 = vadd.f32 0.0, %v985
    %987 = vmatprep.mubr.bf16.mxu0 0
    %988 = vmatmul.mubr.bf16.gmra.mxu0 %v814
    %v989 = vpop.f32.mrf.mxu0
    %v990 = vadd.f32 0.0, %v989
    %v991 = vpop.f32.mrf.mxu0
    %v992 = vadd.f32 0.0, %v991
    %v993 = vpop.f32.mrf.mxu0
    %v994 = vadd.f32 0.0, %v993
    %v995 = vpop.f32.mrf.mxu0
    %v996 = vadd.f32 0.0, %v995
    %997 = vmatprep.mubr.bf16.mxu0 0
    %998 = vmatmul.mubr.bf16.gmra.mxu0 %v815
    %v999 = vpop.f32.mrf.mxu0
    %v1000 = vadd.f32 0.0, %v999
    %v1001 = vpop.f32.mrf.mxu0
    %v1002 = vadd.f32 0.0, %v1001
    %v1003 = vpop.f32.mrf.mxu0
    %v1004 = vadd.f32 0.0, %v1003
    %v1005 = vpop.f32.mrf.mxu0
    %v1006 = vadd.f32 0.0, %v1005
    %1007 = vmatprep.mubr.bf16.mxu0 0
    %1008 = vmatmul.mubr.bf16.gmra.mxu0 %v816
    %v1009 = vpop.f32.mrf.mxu0
    %v1010 = vadd.f32 0.0, %v1009
    %v1011 = vpop.f32.mrf.mxu0
    %v1012 = vadd.f32 0.0, %v1011
    %v1013 = vpop.f32.mrf.mxu0
    %v1014 = vadd.f32 0.0, %v1013
    %v1015 = vpop.f32.mrf.mxu0
    %v1016 = vadd.f32 0.0, %v1015
    %1017 = vmatprep.mubr.bf16.mxu0 0
    %1018 = vmatmul.mubr.bf16.gmra.mxu0 %v817
    %v1019 = vpop.f32.mrf.mxu0
    %v1020 = vadd.f32 0.0, %v1019
    %v1021 = vpop.f32.mrf.mxu0
    %v1022 = vadd.f32 0.0, %v1021
    %v1023 = vpop.f32.mrf.mxu0
    %v1024 = vadd.f32 0.0, %v1023
    %v1025 = vpop.f32.mrf.mxu0
    %v1026 = vadd.f32 0.0, %v1025
    %1027 = vmatprep.mubr.bf16.mxu0 0
    %1028 = vmatmul.mubr.bf16.gmra.mxu0 %v818
    %v1029 = vpop.f32.mrf.mxu0
    %v1030 = vadd.f32 0.0, %v1029
    %v1031 = vpop.f32.mrf.mxu0
    %v1032 = vadd.f32 0.0, %v1031
    %v1033 = vpop.f32.mrf.mxu0
    %v1034 = vadd.f32 0.0, %v1033
    %v1035 = vpop.f32.mrf.mxu0
    %v1036 = vadd.f32 0.0, %v1035
    %1037 = vmatprep.mubr.bf16.mxu0 0
    %1038 = vmatmul.mubr.bf16.gmra.mxu0 %v819
    %v1039 = vpop.f32.mrf.mxu0
    %v1040 = vadd.f32 0.0, %v1039
    %v1041 = vpop.f32.mrf.mxu0
    %v1042 = vadd.f32 0.0, %v1041
    %v1043 = vpop.f32.mrf.mxu0
    %v1044 = vadd.f32 0.0, %v1043
    %v1045 = vpop.f32.mrf.mxu0
    %v1046 = vadd.f32 0.0, %v1045
    %1047 = vmatprep.mubr.bf16.mxu0 0
    %1048 = vmatmul.mubr.bf16.gmra.mxu0 %v820
    %v1049 = vpop.f32.mrf.mxu0
    %v1050 = vadd.f32 0.0, %v1049
    %v1051 = vpop.f32.mrf.mxu0
    %v1052 = vadd.f32 0.0, %v1051
    %v1053 = vpop.f32.mrf.mxu0
    %v1054 = vadd.f32 0.0, %v1053
    %v1055 = vpop.f32.mrf.mxu0
    %v1056 = vadd.f32 0.0, %v1055
    %1057 = vmatprep.mubr.bf16.mxu0 0
    %1058 = vmatmul.mubr.bf16.gmra.mxu0 %v821
    %v1059 = vpop.f32.mrf.mxu0
    %v1060 = vadd.f32 0.0, %v1059
    %v1061 = vpop.f32.mrf.mxu0
    %v1062 = vadd.f32 0.0, %v1061
    %v1063 = vpop.f32.mrf.mxu0
    %v1064 = vadd.f32 0.0, %v1063
    %v1065 = vpop.f32.mrf.mxu0
    %v1066 = vadd.f32 0.0, %v1065
    %1067 = vmatprep.mubr.bf16.mxu0 0
    %1068 = vmatmul.mubr.bf16.gmra.mxu0 %v822
    %v1069 = vpop.f32.mrf.mxu0
    %v1070 = vadd.f32 0.0, %v1069
    %v1071 = vpop.f32.mrf.mxu0
    %v1072 = vadd.f32 0.0, %v1071
    %v1073 = vpop.f32.mrf.mxu0
    %v1074 = vadd.f32 0.0, %v1073
    %v1075 = vpop.f32.mrf.mxu0
    %v1076 = vadd.f32 0.0, %v1075
    %1077 = vmatprep.mubr.bf16.mxu0 0
    %1078 = vmatmul.mubr.bf16.gmra.mxu0 %v823
    %v1079 = vpop.f32.mrf.mxu0
    %v1080 = vadd.f32 0.0, %v1079
    %v1081 = vpop.f32.mrf.mxu0
    %v1082 = vadd.f32 0.0, %v1081
    %v1083 = vpop.f32.mrf.mxu0
    %v1084 = vadd.f32 0.0, %v1083
    %v1085 = vpop.f32.mrf.mxu0
    %v1086 = vadd.f32 0.0, %v1085
    %1087 = vmatprep.mubr.bf16.mxu0 0
    %1088 = vmatmul.mubr.bf16.gmra.mxu0 %v824
    %v1089 = vpop.f32.mrf.mxu0
    %v1090 = vadd.f32 0.0, %v1089
    %v1091 = vpop.f32.mrf.mxu0
    %v1092 = vadd.f32 0.0, %v1091
    %v1093 = vpop.f32.mrf.mxu0
    %v1094 = vadd.f32 0.0, %v1093
    %v1095 = vpop.f32.mrf.mxu0
    %v1096 = vadd.f32 0.0, %v1095
    %1097 = vdwg.mxu0
    %v1098 = vadd.f32 %v940, %v944
    %v1099 = vadd.f32 %v1098, %v950
    %v1100 = vadd.f32 %v1099, %v954
    %v1101 = vadd.f32 %v1100, %v960
    %v1102 = vadd.f32 %v1101, %v964
    %v1103 = vadd.f32 %v1102, %v970
    %v1104 = vadd.f32 %v1103, %v974
    %v1105 = vadd.f32 %v1104, %v980
    %v1106 = vadd.f32 %v1105, %v984
    %v1107 = vadd.f32 %v1106, %v990
    %v1108 = vadd.f32 %v1107, %v994
    %v1109 = vadd.f32 %v1108, %v1000
    %v1110 = vadd.f32 %v1109, %v1004
    %v1111 = vadd.f32 %v1110, %v1010
    %v1112 = vadd.f32 %v1111, %v1014
    %v1113 = vadd.f32 %v1112, %v1020
    %v1114 = vadd.f32 %v1113, %v1024
    %v1115 = vadd.f32 %v1114, %v1030
    %v1116 = vadd.f32 %v1115, %v1034
    %v1117 = vadd.f32 %v1116, %v1040
    %v1118 = vadd.f32 %v1117, %v1044
    %v1119 = vadd.f32 %v1118, %v1050
    %v1120 = vadd.f32 %v1119, %v1054
    %v1121 = vadd.f32 %v1120, %v1060
    %v1122 = vadd.f32 %v1121, %v1064
    %v1123 = vadd.f32 %v1122, %v1070
    %v1124 = vadd.f32 %v1123, %v1074
    %v1125 = vadd.f32 %v1124, %v1080
    %v1126 = vadd.f32 %v1125, %v1084
    %v1127 = vadd.f32 %v1126, %v1090
    %v1128 = vadd.f32 %v1127, %v1094
    %v1129 = vrot.slane %v1128, 4
    %v1130 = vadd.f32 %v1128, %v1129
    %v1131 = vrot.slane %v1130, 2
    %v1132 = vadd.f32 %v1130, %v1131
    %v1133 = vrot.slane %v1132, 1
    %v1134 = vadd.f32 %v1132, %v1133
    %v1135 = vadd.f32 %v942, %v946
    %v1136 = vadd.f32 %v1135, %v952
    %v1137 = vadd.f32 %v1136, %v956
    %v1138 = vadd.f32 %v1137, %v962
    %v1139 = vadd.f32 %v1138, %v966
    %v1140 = vadd.f32 %v1139, %v972
    %v1141 = vadd.f32 %v1140, %v976
    %v1142 = vadd.f32 %v1141, %v982
    %v1143 = vadd.f32 %v1142, %v986
    %v1144 = vadd.f32 %v1143, %v992
    %v1145 = vadd.f32 %v1144, %v996
    %v1146 = vadd.f32 %v1145, %v1002
    %v1147 = vadd.f32 %v1146, %v1006
    %v1148 = vadd.f32 %v1147, %v1012
    %v1149 = vadd.f32 %v1148, %v1016
    %v1150 = vadd.f32 %v1149, %v1022
    %v1151 = vadd.f32 %v1150, %v1026
    %v1152 = vadd.f32 %v1151, %v1032
    %v1153 = vadd.f32 %v1152, %v1036
    %v1154 = vadd.f32 %v1153, %v1042
    %v1155 = vadd.f32 %v1154, %v1046
    %v1156 = vadd.f32 %v1155, %v1052
    %v1157 = vadd.f32 %v1156, %v1056
    %v1158 = vadd.f32 %v1157, %v1062
    %v1159 = vadd.f32 %v1158, %v1066
    %v1160 = vadd.f32 %v1159, %v1072
    %v1161 = vadd.f32 %v1160, %v1076
    %v1162 = vadd.f32 %v1161, %v1082
    %v1163 = vadd.f32 %v1162, %v1086
    %v1164 = vadd.f32 %v1163, %v1092
    %v1165 = vadd.f32 %v1164, %v1096
    %v1166 = vrot.slane %v1165, 4
    %v1167 = vadd.f32 %v1165, %v1166
    %v1168 = vrot.slane %v1167, 2
    %v1169 = vadd.f32 %v1167, %v1168
    %v1170 = vrot.slane %v1169, 1
    %v1171 = vadd.f32 %v1169, %v1170
    %v1172 = vmul.f32 %v1134, 0.00390625
    %v1173 = vmul.f32 %v1171, 0.00390625
    %v1174 = vmul.f32 %v940, %v940
    %v1175 = vmul.f32 %v942, %v942
    %v1176 = vmul.f32 %v944, %v944
    %v1177 = vmul.f32 %v946, %v946
    %v1178 = vmul.f32 %v950, %v950
    %v1179 = vmul.f32 %v952, %v952
    %v1180 = vmul.f32 %v954, %v954
    %v1181 = vmul.f32 %v956, %v956
    %v1182 = vmul.f32 %v960, %v960
    %v1183 = vmul.f32 %v962, %v962
    %v1184 = vmul.f32 %v964, %v964
    %v1185 = vmul.f32 %v966, %v966
    %v1186 = vmul.f32 %v970, %v970
    %v1187 = vmul.f32 %v972, %v972
    %v1188 = vmul.f32 %v974, %v974
    %v1189 = vmul.f32 %v976, %v976
    %v1190 = vmul.f32 %v980, %v980
    %v1191 = vmul.f32 %v982, %v982
    %v1192 = vmul.f32 %v984, %v984
    %v1193 = vmul.f32 %v986, %v986
    %v1194 = vmul.f32 %v990, %v990
    %v1195 = vmul.f32 %v992, %v992
    %v1196 = vmul.f32 %v994, %v994
    %v1197 = vmul.f32 %v996, %v996
    %v1198 = vmul.f32 %v1000, %v1000
    %v1199 = vmul.f32 %v1002, %v1002
    %v1200 = vmul.f32 %v1004, %v1004
    %v1201 = vmul.f32 %v1006, %v1006
    %v1202 = vmul.f32 %v1010, %v1010
    %v1203 = vmul.f32 %v1012, %v1012
    %v1204 = vmul.f32 %v1014, %v1014
    %v1205 = vmul.f32 %v1016, %v1016
    %v1206 = vmul.f32 %v1020, %v1020
    %v1207 = vmul.f32 %v1022, %v1022
    %v1208 = vmul.f32 %v1024, %v1024
    %v1209 = vmul.f32 %v1026, %v1026
    %v1210 = vmul.f32 %v1030, %v1030
    %v1211 = vmul.f32 %v1032, %v1032
    %v1212 = vmul.f32 %v1034, %v1034
    %v1213 = vmul.f32 %v1036, %v1036
    %v1214 = vmul.f32 %v1040, %v1040
    %v1215 = vmul.f32 %v1042, %v1042
    %v1216 = vmul.f32 %v1044, %v1044
    %v1217 = vmul.f32 %v1046, %v1046
    %v1218 = vmul.f32 %v1050, %v1050
    %v1219 = vmul.f32 %v1052, %v1052
    %v1220 = vmul.f32 %v1054, %v1054
    %v1221 = vmul.f32 %v1056, %v1056
    %v1222 = vmul.f32 %v1060, %v1060
    %v1223 = vmul.f32 %v1062, %v1062
    %v1224 = vmul.f32 %v1064, %v1064
    %v1225 = vmul.f32 %v1066, %v1066
    %v1226 = vmul.f32 %v1070, %v1070
    %v1227 = vmul.f32 %v1072, %v1072
    %v1228 = vmul.f32 %v1074, %v1074
    %v1229 = vmul.f32 %v1076, %v1076
    %v1230 = vmul.f32 %v1080, %v1080
    %v1231 = vmul.f32 %v1082, %v1082
    %v1232 = vmul.f32 %v1084, %v1084
    %v1233 = vmul.f32 %v1086, %v1086
    %v1234 = vmul.f32 %v1090, %v1090
    %v1235 = vmul.f32 %v1092, %v1092
    %v1236 = vmul.f32 %v1094, %v1094
    %v1237 = vmul.f32 %v1096, %v1096
    %v1238 = vadd.f32 %v1174, %v1176
    %v1239 = vadd.f32 %v1238, %v1178
    %v1240 = vadd.f32 %v1239, %v1180
    %v1241 = vadd.f32 %v1240, %v1182
    %v1242 = vadd.f32 %v1241, %v1184
    %v1243 = vadd.f32 %v1242, %v1186
    %v1244 = vadd.f32 %v1243, %v1188
    %v1245 = vadd.f32 %v1244, %v1190
    %v1246 = vadd.f32 %v1245, %v1192
    %v1247 = vadd.f32 %v1246, %v1194
    %v1248 = vadd.f32 %v1247, %v1196
    %v1249 = vadd.f32 %v1248, %v1198
    %v1250 = vadd.f32 %v1249, %v1200
    %v1251 = vadd.f32 %v1250, %v1202
    %v1252 = vadd.f32 %v1251, %v1204
    %v1253 = vadd.f32 %v1252, %v1206
    %v1254 = vadd.f32 %v1253, %v1208
    %v1255 = vadd.f32 %v1254, %v1210
    %v1256 = vadd.f32 %v1255, %v1212
    %v1257 = vadd.f32 %v1256, %v1214
    %v1258 = vadd.f32 %v1257, %v1216
    %v1259 = vadd.f32 %v1258, %v1218
    %v1260 = vadd.f32 %v1259, %v1220
    %v1261 = vadd.f32 %v1260, %v1222
    %v1262 = vadd.f32 %v1261, %v1224
    %v1263 = vadd.f32 %v1262, %v1226
    %v1264 = vadd.f32 %v1263, %v1228
    %v1265 = vadd.f32 %v1264, %v1230
    %v1266 = vadd.f32 %v1265, %v1232
    %v1267 = vadd.f32 %v1266, %v1234
    %v1268 = vadd.f32 %v1267, %v1236
    %v1269 = vrot.slane %v1268, 4
    %v1270 = vadd.f32 %v1268, %v1269
    %v1271 = vrot.slane %v1270, 2
    %v1272 = vadd.f32 %v1270, %v1271
    %v1273 = vrot.slane %v1272, 1
    %v1274 = vadd.f32 %v1272, %v1273
    %v1275 = vadd.f32 %v1175, %v1177
    %v1276 = vadd.f32 %v1275, %v1179
    %v1277 = vadd.f32 %v1276, %v1181
    %v1278 = vadd.f32 %v1277, %v1183
    %v1279 = vadd.f32 %v1278, %v1185
    %v1280 = vadd.f32 %v1279, %v1187
    %v1281 = vadd.f32 %v1280, %v1189
    %v1282 = vadd.f32 %v1281, %v1191
    %v1283 = vadd.f32 %v1282, %v1193
    %v1284 = vadd.f32 %v1283, %v1195
    %v1285 = vadd.f32 %v1284, %v1197
    %v1286 = vadd.f32 %v1285, %v1199
    %v1287 = vadd.f32 %v1286, %v1201
    %v1288 = vadd.f32 %v1287, %v1203
    %v1289 = vadd.f32 %v1288, %v1205
    %v1290 = vadd.f32 %v1289, %v1207
    %v1291 = vadd.f32 %v1290, %v1209
    %v1292 = vadd.f32 %v1291, %v1211
    %v1293 = vadd.f32 %v1292, %v1213
    %v1294 = vadd.f32 %v1293, %v1215
    %v1295 = vadd.f32 %v1294, %v1217
    %v1296 = vadd.f32 %v1295, %v1219
    %v1297 = vadd.f32 %v1296, %v1221
    %v1298 = vadd.f32 %v1297, %v1223
    %v1299 = vadd.f32 %v1298, %v1225
    %v1300 = vadd.f32 %v1299, %v1227
    %v1301 = vadd.f32 %v1300, %v1229
    %v1302 = vadd.f32 %v1301, %v1231
    %v1303 = vadd.f32 %v1302, %v1233
    %v1304 = vadd.f32 %v1303, %v1235
    %v1305 = vadd.f32 %v1304, %v1237
    %v1306 = vrot.slane %v1305, 4
    %v1307 = vadd.f32 %v1305, %v1306
    %v1308 = vrot.slane %v1307, 2
    %v1309 = vadd.f32 %v1307, %v1308
    %v1310 = vrot.slane %v1309, 1
    %v1311 = vadd.f32 %v1309, %v1310
    %v1312 = vmul.f32 %v1274, 0.00390625
    %v1313 = vmul.f32 %v1311, 0.00390625
    %v1314 = vmul.f32 %v1172, %v1172
    %v1315 = vmul.f32 %v1173, %v1173
    %v1316 = vsub.f32 %v1312, %v1314
    %v1317 = vsub.f32 %v1313, %v1315
    %v1318 = vmax.f32 %v1316, 0.0
    %v1319 = vmax.f32 %v1317, 0.0
    %v1320 = vadd.f32 %v1318, 1e-05
    %v1321 = vadd.f32 %v1319, 1e-05
    %v1322 = vrsqrt.pop %v1320
    %v1323 = vrsqrt.pop %v1321
    %v1324 = vmul.f32 %v119, %v1322
    %v1325 = vmul.f32 %v120, %v1323
    %v1326 = vmul.f32 %v1172, %v1324
    %v1327 = vmul.f32 %v1173, %v1325
    %v1330 = vrot.slane %v1326, 7
    %v1331 = vrot.slane %v1327, 7
    %v1334 = vsub.f32 %v119, %v1330
    %v1335 = vsub.f32 %v120, %v1331
    %v1336 = vlaneseq
    %v1337 = vshrl.u32 %v1336, 7
    %v1338 = vsub.s32 0, %v1337
    %v1339 = vrot.slane %v1324, %v1338
    %v1340 = vlaneseq
    %v1341 = vshrl.u32 %v1340, 7
    %v1342 = vsub.s32 0, %v1341
    %v1343 = vrot.slane %v1325, %v1342
    %v1344 = vmul.f32 %v940, %v1339
    %v1345 = vmul.f32 %v942, %v1343
    %v1346 = vmul.f32 %v944, %v1339
    %v1347 = vmul.f32 %v946, %v1343
    %v1348 = vmul.f32 %v950, %v1339
    %v1349 = vmul.f32 %v952, %v1343
    %v1350 = vmul.f32 %v954, %v1339
    %v1351 = vmul.f32 %v956, %v1343
    %v1352 = vmul.f32 %v960, %v1339
    %v1353 = vmul.f32 %v962, %v1343
    %v1354 = vmul.f32 %v964, %v1339
    %v1355 = vmul.f32 %v966, %v1343
    %v1356 = vmul.f32 %v970, %v1339
    %v1357 = vmul.f32 %v972, %v1343
    %v1358 = vmul.f32 %v974, %v1339
    %v1359 = vmul.f32 %v976, %v1343
    %v1360 = vmul.f32 %v980, %v1339
    %v1361 = vmul.f32 %v982, %v1343
    %v1362 = vmul.f32 %v984, %v1339
    %v1363 = vmul.f32 %v986, %v1343
    %v1364 = vmul.f32 %v990, %v1339
    %v1365 = vmul.f32 %v992, %v1343
    %v1366 = vmul.f32 %v994, %v1339
    %v1367 = vmul.f32 %v996, %v1343
    %v1368 = vmul.f32 %v1000, %v1339
    %v1369 = vmul.f32 %v1002, %v1343
    %v1370 = vmul.f32 %v1004, %v1339
    %v1371 = vmul.f32 %v1006, %v1343
    %v1372 = vmul.f32 %v1010, %v1339
    %v1373 = vmul.f32 %v1012, %v1343
    %v1374 = vmul.f32 %v1014, %v1339
    %v1375 = vmul.f32 %v1016, %v1343
    %v1376 = vmul.f32 %v1020, %v1339
    %v1377 = vmul.f32 %v1022, %v1343
    %v1378 = vmul.f32 %v1024, %v1339
    %v1379 = vmul.f32 %v1026, %v1343
    %v1380 = vmul.f32 %v1030, %v1339
    %v1381 = vmul.f32 %v1032, %v1343
    %v1382 = vmul.f32 %v1034, %v1339
    %v1383 = vmul.f32 %v1036, %v1343
    %v1384 = vmul.f32 %v1040, %v1339
    %v1385 = vmul.f32 %v1042, %v1343
    %v1386 = vmul.f32 %v1044, %v1339
    %v1387 = vmul.f32 %v1046, %v1343
    %v1388 = vmul.f32 %v1050, %v1339
    %v1389 = vmul.f32 %v1052, %v1343
    %v1390 = vmul.f32 %v1054, %v1339
    %v1391 = vmul.f32 %v1056, %v1343
    %v1392 = vmul.f32 %v1060, %v1339
    %v1393 = vmul.f32 %v1062, %v1343
    %v1394 = vmul.f32 %v1064, %v1339
    %v1395 = vmul.f32 %v1066, %v1343
    %v1396 = vmul.f32 %v1070, %v1339
    %v1397 = vmul.f32 %v1072, %v1343
    %v1398 = vmul.f32 %v1074, %v1339
    %v1399 = vmul.f32 %v1076, %v1343
    %v1400 = vmul.f32 %v1080, %v1339
    %v1401 = vmul.f32 %v1082, %v1343
    %v1402 = vmul.f32 %v1084, %v1339
    %v1403 = vmul.f32 %v1086, %v1343
    %v1404 = vmul.f32 %v1090, %v1339
    %v1405 = vmul.f32 %v1092, %v1343
    %v1406 = vmul.f32 %v1094, %v1339
    %v1407 = vmul.f32 %v1096, %v1343
    %v1408 = vlaneseq
    %v1409 = vshrl.u32 %v1408, 7
    %v1410 = vsub.s32 1, %v1409
    %v1411 = vrot.slane %v1334, %v1410
    %v1412 = vlaneseq
    %v1413 = vshrl.u32 %v1412, 7
    %v1414 = vsub.s32 1, %v1413
    %v1415 = vrot.slane %v1335, %v1414
    %v1416 = vadd.f32 %v1344, %v1411
    %v1417 = vadd.f32 %v1345, %v1415
    %v1418 = vadd.f32 %v1346, %v1411
    %v1419 = vadd.f32 %v1347, %v1415
    %v1420 = vadd.f32 %v1348, %v1411
    %v1421 = vadd.f32 %v1349, %v1415
    %v1422 = vadd.f32 %v1350, %v1411
    %v1423 = vadd.f32 %v1351, %v1415
    %v1424 = vadd.f32 %v1352, %v1411
    %v1425 = vadd.f32 %v1353, %v1415
    %v1426 = vadd.f32 %v1354, %v1411
    %v1427 = vadd.f32 %v1355, %v1415
    %v1428 = vadd.f32 %v1356, %v1411
    %v1429 = vadd.f32 %v1357, %v1415
    %v1430 = vadd.f32 %v1358, %v1411
    %v1431 = vadd.f32 %v1359, %v1415
    %v1432 = vadd.f32 %v1360, %v1411
    %v1433 = vadd.f32 %v1361, %v1415
    %v1434 = vadd.f32 %v1362, %v1411
    %v1435 = vadd.f32 %v1363, %v1415
    %v1436 = vadd.f32 %v1364, %v1411
    %v1437 = vadd.f32 %v1365, %v1415
    %v1438 = vadd.f32 %v1366, %v1411
    %v1439 = vadd.f32 %v1367, %v1415
    %v1440 = vadd.f32 %v1368, %v1411
    %v1441 = vadd.f32 %v1369, %v1415
    %v1442 = vadd.f32 %v1370, %v1411
    %v1443 = vadd.f32 %v1371, %v1415
    %v1444 = vadd.f32 %v1372, %v1411
    %v1445 = vadd.f32 %v1373, %v1415
    %v1446 = vadd.f32 %v1374, %v1411
    %v1447 = vadd.f32 %v1375, %v1415
    %v1448 = vadd.f32 %v1376, %v1411
    %v1449 = vadd.f32 %v1377, %v1415
    %v1450 = vadd.f32 %v1378, %v1411
    %v1451 = vadd.f32 %v1379, %v1415
    %v1452 = vadd.f32 %v1380, %v1411
    %v1453 = vadd.f32 %v1381, %v1415
    %v1454 = vadd.f32 %v1382, %v1411
    %v1455 = vadd.f32 %v1383, %v1415
    %v1456 = vadd.f32 %v1384, %v1411
    %v1457 = vadd.f32 %v1385, %v1415
    %v1458 = vadd.f32 %v1386, %v1411
    %v1459 = vadd.f32 %v1387, %v1415
    %v1460 = vadd.f32 %v1388, %v1411
    %v1461 = vadd.f32 %v1389, %v1415
    %v1462 = vadd.f32 %v1390, %v1411
    %v1463 = vadd.f32 %v1391, %v1415
    %v1464 = vadd.f32 %v1392, %v1411
    %v1465 = vadd.f32 %v1393, %v1415
    %v1466 = vadd.f32 %v1394, %v1411
    %v1467 = vadd.f32 %v1395, %v1415
    %v1468 = vadd.f32 %v1396, %v1411
    %v1469 = vadd.f32 %v1397, %v1415
    %v1470 = vadd.f32 %v1398, %v1411
    %v1471 = vadd.f32 %v1399, %v1415
    %v1472 = vadd.f32 %v1400, %v1411
    %v1473 = vadd.f32 %v1401, %v1415
    %v1474 = vadd.f32 %v1402, %v1411
    %v1475 = vadd.f32 %v1403, %v1415
    %v1476 = vadd.f32 %v1404, %v1411
    %v1477 = vadd.f32 %v1405, %v1415
    %v1478 = vadd.f32 %v1406, %v1411
    %v1479 = vadd.f32 %v1407, %v1415
    %v1480 = vmax.f32 %v1416, 0.0
    %v1481 = vmax.f32 %v1417, 0.0
    %v1482 = vmax.f32 %v1418, 0.0
    %v1483 = vmax.f32 %v1419, 0.0
    %v1484 = vmax.f32 %v1420, 0.0
    %v1485 = vmax.f32 %v1421, 0.0
    %v1486 = vmax.f32 %v1422, 0.0
    %v1487 = vmax.f32 %v1423, 0.0
    %v1488 = vmax.f32 %v1424, 0.0
    %v1489 = vmax.f32 %v1425, 0.0
    %v1490 = vmax.f32 %v1426, 0.0
    %v1491 = vmax.f32 %v1427, 0.0
    %v1492 = vmax.f32 %v1428, 0.0
    %v1493 = vmax.f32 %v1429, 0.0
    %v1494 = vmax.f32 %v1430, 0.0
    %v1495 = vmax.f32 %v1431, 0.0
    %v1496 = vmax.f32 %v1432, 0.0
    %v1497 = vmax.f32 %v1433, 0.0
    %v1498 = vmax.f32 %v1434, 0.0
    %v1499 = vmax.f32 %v1435, 0.0
    %v1500 = vmax.f32 %v1436, 0.0
    %v1501 = vmax.f32 %v1437, 0.0
    %v1502 = vmax.f32 %v1438, 0.0
    %v1503 = vmax.f32 %v1439, 0.0
    %v1504 = vmax.f32 %v1440, 0.0
    %v1505 = vmax.f32 %v1441, 0.0
    %v1506 = vmax.f32 %v1442, 0.0
    %v1507 = vmax.f32 %v1443, 0.0
    %v1508 = vmax.f32 %v1444, 0.0
    %v1509 = vmax.f32 %v1445, 0.0
    %v1510 = vmax.f32 %v1446, 0.0
    %v1511 = vmax.f32 %v1447, 0.0
    %v1512 = vmax.f32 %v1448, 0.0
    %v1513 = vmax.f32 %v1449, 0.0
    %v1514 = vmax.f32 %v1450, 0.0
    %v1515 = vmax.f32 %v1451, 0.0
    %v1516 = vmax.f32 %v1452, 0.0
    %v1517 = vmax.f32 %v1453, 0.0
    %v1518 = vmax.f32 %v1454, 0.0
    %v1519 = vmax.f32 %v1455, 0.0
    %v1520 = vmax.f32 %v1456, 0.0
    %v1521 = vmax.f32 %v1457, 0.0
    %v1522 = vmax.f32 %v1458, 0.0
    %v1523 = vmax.f32 %v1459, 0.0
    %v1524 = vmax.f32 %v1460, 0.0
    %v1525 = vmax.f32 %v1461, 0.0
    %v1526 = vmax.f32 %v1462, 0.0
    %v1527 = vmax.f32 %v1463, 0.0
    %v1528 = vmax.f32 %v1464, 0.0
    %v1529 = vmax.f32 %v1465, 0.0
    %v1530 = vmax.f32 %v1466, 0.0
    %v1531 = vmax.f32 %v1467, 0.0
    %v1532 = vmax.f32 %v1468, 0.0
    %v1533 = vmax.f32 %v1469, 0.0
    %v1534 = vmax.f32 %v1470, 0.0
    %v1535 = vmax.f32 %v1471, 0.0
    %v1536 = vmax.f32 %v1472, 0.0
    %v1537 = vmax.f32 %v1473, 0.0
    %v1538 = vmax.f32 %v1474, 0.0
    %v1539 = vmax.f32 %v1475, 0.0
    %v1540 = vmax.f32 %v1476, 0.0
    %v1541 = vmax.f32 %v1477, 0.0
    %v1542 = vmax.f32 %v1478, 0.0
    %v1543 = vmax.f32 %v1479, 0.0
    %v1544 = vlaneseq
    %v1545 = vshrl.u32 %v1544, 7
    %v1546 = vsub.s32 2, %v1545
    %v1547 = vrot.slane %v119, %v1546
    %v1548 = vlaneseq
    %v1549 = vshrl.u32 %v1548, 7
    %v1550 = vsub.s32 2, %v1549
    %v1551 = vrot.slane %v120, %v1550
    %v1552 = vsel %vm188, %v1547, 0.0
    %v1553 = vsel %vm188, %v1551, 0.0
    %v1554 = vsel %vm189, %v1547, 0.0
    %v1555 = vsel %vm189, %v1551, 0.0
    %v1556 = vsel %vm190, %v1547, 0.0
    %v1557 = vsel %vm190, %v1551, 0.0
    %v1558 = vsel %vm191, %v1547, 0.0
    %v1559 = vsel %vm191, %v1551, 0.0
    %v1560 = vsel %vm192, %v1547, 0.0
    %v1561 = vsel %vm192, %v1551, 0.0
    %v1562 = vsel %vm193, %v1547, 0.0
    %v1563 = vsel %vm193, %v1551, 0.0
    %v1564 = vsel %vm194, %v1547, 0.0
    %v1565 = vsel %vm194, %v1551, 0.0
    %v1566 = vsel %vm195, %v1547, 0.0
    %v1567 = vsel %vm195, %v1551, 0.0
    %v1568 = vsel %vm196, %v1547, 0.0
    %v1569 = vsel %vm196, %v1551, 0.0
    %v1570 = vsel %vm197, %v1547, 0.0
    %v1571 = vsel %vm197, %v1551, 0.0
    %v1572 = vsel %vm198, %v1547, 0.0
    %v1573 = vsel %vm198, %v1551, 0.0
    %v1574 = vsel %vm199, %v1547, 0.0
    %v1575 = vsel %vm199, %v1551, 0.0
    %v1576 = vsel %vm200, %v1547, 0.0
    %v1577 = vsel %vm200, %v1551, 0.0
    %v1578 = vsel %vm201, %v1547, 0.0
    %v1579 = vsel %vm201, %v1551, 0.0
    %v1580 = vsel %vm202, %v1547, 0.0
    %v1581 = vsel %vm202, %v1551, 0.0
    %v1582 = vsel %vm203, %v1547, 0.0
    %v1583 = vsel %vm203, %v1551, 0.0
    %v1584 = vlaneseq
    %v1585 = vshrl.u32 %v1584, 7
    %v1586 = vsub.s32 4, %v1585
    %v1587 = vrot.slane %v119, %v1586
    %v1588 = vlaneseq
    %v1589 = vshrl.u32 %v1588, 7
    %v1590 = vsub.s32 4, %v1589
    %v1591 = vrot.slane %v120, %v1590
    %v1592 = vsel %vm240, %v1587, 0.0
    %v1593 = vsel %vm240, %v1591, 0.0
    %v1594 = vsel %vm241, %v1587, 0.0
    %v1595 = vsel %vm241, %v1591, 0.0
    %v1596 = vsel %vm242, %v1587, 0.0
    %v1597 = vsel %vm242, %v1591, 0.0
    %v1598 = vsel %vm243, %v1587, 0.0
    %v1599 = vsel %vm243, %v1591, 0.0
    %v1600 = vsel %vm244, %v1587, 0.0
    %v1601 = vsel %vm244, %v1591, 0.0
    %v1602 = vsel %vm245, %v1587, 0.0
    %v1603 = vsel %vm245, %v1591, 0.0
    %v1604 = vsel %vm246, %v1587, 0.0
    %v1605 = vsel %vm246, %v1591, 0.0
    %v1606 = vsel %vm247, %v1587, 0.0
    %v1607 = vsel %vm247, %v1591, 0.0
    %v1608 = vsel %vm248, %v1587, 0.0
    %v1609 = vsel %vm248, %v1591, 0.0
    %v1610 = vsel %vm249, %v1587, 0.0
    %v1611 = vsel %vm249, %v1591, 0.0
    %v1612 = vsel %vm250, %v1587, 0.0
    %v1613 = vsel %vm250, %v1591, 0.0
    %v1614 = vsel %vm251, %v1587, 0.0
    %v1615 = vsel %vm251, %v1591, 0.0
    %v1616 = vsel %vm252, %v1587, 0.0
    %v1617 = vsel %vm252, %v1591, 0.0
    %v1618 = vsel %vm253, %v1587, 0.0
    %v1619 = vsel %vm253, %v1591, 0.0
    %v1620 = vsel %vm254, %v1587, 0.0
    %v1621 = vsel %vm254, %v1591, 0.0
    %v1622 = vsel %vm255, %v1587, 0.0
    %v1623 = vsel %vm255, %v1591, 0.0
    %v1624 = vrot.slane %v1480, 7
    %v1625 = vrot.slane %v1481, 7
    %v1626 = vrot.slane %v1512, 7
    %v1627 = vrot.slane %v1513, 7
    %v1628 = vrot.slane %v1482, 7
    %v1629 = vrot.slane %v1483, 7
    %v1630 = vrot.slane %v1514, 7
    %v1631 = vrot.slane %v1515, 7
    %v1632 = vrot.slane %v1484, 7
    %v1633 = vrot.slane %v1485, 7
    %v1634 = vrot.slane %v1516, 7
    %v1635 = vrot.slane %v1517, 7
    %v1636 = vrot.slane %v1486, 7
    %v1637 = vrot.slane %v1487, 7
    %v1638 = vrot.slane %v1518, 7
    %v1639 = vrot.slane %v1519, 7
    %v1640 = vrot.slane %v1488, 7
    %v1641 = vrot.slane %v1489, 7
    %v1642 = vrot.slane %v1520, 7
    %v1643 = vrot.slane %v1521, 7
    %v1644 = vrot.slane %v1490, 7
    %v1645 = vrot.slane %v1491, 7
    %v1646 = vrot.slane %v1522, 7
    %v1647 = vrot.slane %v1523, 7
    %v1648 = vrot.slane %v1492, 7
    %v1649 = vrot.slane %v1493, 7
    %v1650 = vrot.slane %v1524, 7
    %v1651 = vrot.slane %v1525, 7
    %v1652 = vrot.slane %v1494, 7
    %v1653 = vrot.slane %v1495, 7
    %v1654 = vrot.slane %v1526, 7
    %v1655 = vrot.slane %v1527, 7
    %v1656 = vrot.slane %v1496, 7
    %v1657 = vrot.slane %v1497, 7
    %v1658 = vrot.slane %v1528, 7
    %v1659 = vrot.slane %v1529, 7
    %v1660 = vrot.slane %v1498, 7
    %v1661 = vrot.slane %v1499, 7
    %v1662 = vrot.slane %v1530, 7
    %v1663 = vrot.slane %v1531, 7
    %v1664 = vrot.slane %v1500, 7
    %v1665 = vrot.slane %v1501, 7
    %v1666 = vrot.slane %v1532, 7
    %v1667 = vrot.slane %v1533, 7
    %v1668 = vrot.slane %v1502, 7
    %v1669 = vrot.slane %v1503, 7
    %v1670 = vrot.slane %v1534, 7
    %v1671 = vrot.slane %v1535, 7
    %v1672 = vrot.slane %v1504, 7
    %v1673 = vrot.slane %v1505, 7
    %v1674 = vrot.slane %v1536, 7
    %v1675 = vrot.slane %v1537, 7
    %v1676 = vrot.slane %v1506, 7
    %v1677 = vrot.slane %v1507, 7
    %v1678 = vrot.slane %v1538, 7
    %v1679 = vrot.slane %v1539, 7
    %v1680 = vrot.slane %v1508, 7
    %v1681 = vrot.slane %v1509, 7
    %v1682 = vrot.slane %v1540, 7
    %v1683 = vrot.slane %v1541, 7
    %v1684 = vrot.slane %v1510, 7
    %v1685 = vrot.slane %v1511, 7
    %v1686 = vrot.slane %v1542, 7
    %v1687 = vrot.slane %v1543, 7
    %v1688 = vsel %vm308, %v1680, %v1684
    %v1689 = vsel %vm308, %v1681, %v1685
    %v1690 = vsel %vm308, %v1682, %v1686
    %v1691 = vsel %vm308, %v1683, %v1687
    %v1692 = vsel %vm308, %v1676, %v1680
    %v1693 = vsel %vm308, %v1677, %v1681
    %v1694 = vsel %vm308, %v1678, %v1682
    %v1695 = vsel %vm308, %v1679, %v1683
    %v1696 = vsel %vm308, %v1672, %v1676
    %v1697 = vsel %vm308, %v1673, %v1677
    %v1698 = vsel %vm308, %v1674, %v1678
    %v1699 = vsel %vm308, %v1675, %v1679
    %v1700 = vsel %vm308, %v1668, %v1672
    %v1701 = vsel %vm308, %v1669, %v1673
    %v1702 = vsel %vm308, %v1670, %v1674
    %v1703 = vsel %vm308, %v1671, %v1675
    %v1704 = vsel %vm308, %v1664, %v1668
    %v1705 = vsel %vm308, %v1665, %v1669
    %v1706 = vsel %vm308, %v1666, %v1670
    %v1707 = vsel %vm308, %v1667, %v1671
    %v1708 = vsel %vm308, %v1660, %v1664
    %v1709 = vsel %vm308, %v1661, %v1665
    %v1710 = vsel %vm308, %v1662, %v1666
    %v1711 = vsel %vm308, %v1663, %v1667
    %v1712 = vsel %vm308, %v1656, %v1660
    %v1713 = vsel %vm308, %v1657, %v1661
    %v1714 = vsel %vm308, %v1658, %v1662
    %v1715 = vsel %vm308, %v1659, %v1663
    %v1716 = vsel %vm308, %v1652, %v1656
    %v1717 = vsel %vm308, %v1653, %v1657
    %v1718 = vsel %vm308, %v1654, %v1658
    %v1719 = vsel %vm308, %v1655, %v1659
    %v1720 = vsel %vm308, %v1648, %v1652
    %v1721 = vsel %vm308, %v1649, %v1653
    %v1722 = vsel %vm308, %v1650, %v1654
    %v1723 = vsel %vm308, %v1651, %v1655
    %v1724 = vsel %vm308, %v1644, %v1648
    %v1725 = vsel %vm308, %v1645, %v1649
    %v1726 = vsel %vm308, %v1646, %v1650
    %v1727 = vsel %vm308, %v1647, %v1651
    %v1728 = vsel %vm308, %v1640, %v1644
    %v1729 = vsel %vm308, %v1641, %v1645
    %v1730 = vsel %vm308, %v1642, %v1646
    %v1731 = vsel %vm308, %v1643, %v1647
    %v1732 = vsel %vm308, %v1636, %v1640
    %v1733 = vsel %vm308, %v1637, %v1641
    %v1734 = vsel %vm308, %v1638, %v1642
    %v1735 = vsel %vm308, %v1639, %v1643
    %v1736 = vsel %vm308, %v1632, %v1636
    %v1737 = vsel %vm308, %v1633, %v1637
    %v1738 = vsel %vm308, %v1634, %v1638
    %v1739 = vsel %vm308, %v1635, %v1639
    %v1740 = vsel %vm308, %v1628, %v1632
    %v1741 = vsel %vm308, %v1629, %v1633
    %v1742 = vsel %vm308, %v1630, %v1634
    %v1743 = vsel %vm308, %v1631, %v1635
    %v1744 = vsel %vm308, %v1624, %v1628
    %v1745 = vsel %vm308, %v1625, %v1629
    %v1746 = vsel %vm308, %v1626, %v1630
    %v1747 = vsel %vm308, %v1627, %v1631
    %v1748 = vsel %vm308, %v1684, %v1624
    %v1749 = vsel %vm308, %v1685, %v1625
    %v1750 = vsel %vm308, %v1686, %v1626
    %v1751 = vsel %vm308, %v1687, %v1627
    %v1752 = vmul.f32 %v1748, %v1552
    %v1753 = vmul.f32 %v1749, %v1553
    %v1754 = vmul.f32 %v1744, %v1554
    %v1755 = vmul.f32 %v1745, %v1555
    %v1756 = vmul.f32 %v1740, %v1556
    %v1757 = vmul.f32 %v1741, %v1557
    %v1758 = vmul.f32 %v1736, %v1558
    %v1759 = vmul.f32 %v1737, %v1559
    %v1760 = vmul.f32 %v1732, %v1560
    %v1761 = vmul.f32 %v1733, %v1561
    %v1762 = vmul.f32 %v1728, %v1562
    %v1763 = vmul.f32 %v1729, %v1563
    %v1764 = vmul.f32 %v1724, %v1564
    %v1765 = vmul.f32 %v1725, %v1565
    %v1766 = vmul.f32 %v1720, %v1566
    %v1767 = vmul.f32 %v1721, %v1567
    %v1768 = vmul.f32 %v1716, %v1568
    %v1769 = vmul.f32 %v1717, %v1569
    %v1770 = vmul.f32 %v1712, %v1570
    %v1771 = vmul.f32 %v1713, %v1571
    %v1772 = vmul.f32 %v1708, %v1572
    %v1773 = vmul.f32 %v1709, %v1573
    %v1774 = vmul.f32 %v1704, %v1574
    %v1775 = vmul.f32 %v1705, %v1575
    %v1776 = vmul.f32 %v1700, %v1576
    %v1777 = vmul.f32 %v1701, %v1577
    %v1778 = vmul.f32 %v1696, %v1578
    %v1779 = vmul.f32 %v1697, %v1579
    %v1780 = vmul.f32 %v1692, %v1580
    %v1781 = vmul.f32 %v1693, %v1581
    %v1782 = vmul.f32 %v1688, %v1582
    %v1783 = vmul.f32 %v1689, %v1583
    %v1784 = vmul.f32 %v1750, %v1552
    %v1785 = vmul.f32 %v1751, %v1553
    %v1786 = vmul.f32 %v1746, %v1554
    %v1787 = vmul.f32 %v1747, %v1555
    %v1788 = vmul.f32 %v1742, %v1556
    %v1789 = vmul.f32 %v1743, %v1557
    %v1790 = vmul.f32 %v1738, %v1558
    %v1791 = vmul.f32 %v1739, %v1559
    %v1792 = vmul.f32 %v1734, %v1560
    %v1793 = vmul.f32 %v1735, %v1561
    %v1794 = vmul.f32 %v1730, %v1562
    %v1795 = vmul.f32 %v1731, %v1563
    %v1796 = vmul.f32 %v1726, %v1564
    %v1797 = vmul.f32 %v1727, %v1565
    %v1798 = vmul.f32 %v1722, %v1566
    %v1799 = vmul.f32 %v1723, %v1567
    %v1800 = vmul.f32 %v1718, %v1568
    %v1801 = vmul.f32 %v1719, %v1569
    %v1802 = vmul.f32 %v1714, %v1570
    %v1803 = vmul.f32 %v1715, %v1571
    %v1804 = vmul.f32 %v1710, %v1572
    %v1805 = vmul.f32 %v1711, %v1573
    %v1806 = vmul.f32 %v1706, %v1574
    %v1807 = vmul.f32 %v1707, %v1575
    %v1808 = vmul.f32 %v1702, %v1576
    %v1809 = vmul.f32 %v1703, %v1577
    %v1810 = vmul.f32 %v1698, %v1578
    %v1811 = vmul.f32 %v1699, %v1579
    %v1812 = vmul.f32 %v1694, %v1580
    %v1813 = vmul.f32 %v1695, %v1581
    %v1814 = vmul.f32 %v1690, %v1582
    %v1815 = vmul.f32 %v1691, %v1583
    %v1816 = vlaneseq
    %v1817 = vshrl.u32 %v1816, 7
    %v1818 = vsub.s32 3, %v1817
    %v1819 = vrot.slane %v119, %v1818
    %v1820 = vlaneseq
    %v1821 = vshrl.u32 %v1820, 7
    %v1822 = vsub.s32 3, %v1821
    %v1823 = vrot.slane %v120, %v1822
    %v1824 = vmul.f32 %v1480, %v1819
    %v1825 = vmul.f32 %v1481, %v1823
    %v1826 = vmul.f32 %v1482, %v1819
    %v1827 = vmul.f32 %v1483, %v1823
    %v1828 = vmul.f32 %v1484, %v1819
    %v1829 = vmul.f32 %v1485, %v1823
    %v1830 = vmul.f32 %v1486, %v1819
    %v1831 = vmul.f32 %v1487, %v1823
    %v1832 = vmul.f32 %v1488, %v1819
    %v1833 = vmul.f32 %v1489, %v1823
    %v1834 = vmul.f32 %v1490, %v1819
    %v1835 = vmul.f32 %v1491, %v1823
    %v1836 = vmul.f32 %v1492, %v1819
    %v1837 = vmul.f32 %v1493, %v1823
    %v1838 = vmul.f32 %v1494, %v1819
    %v1839 = vmul.f32 %v1495, %v1823
    %v1840 = vmul.f32 %v1496, %v1819
    %v1841 = vmul.f32 %v1497, %v1823
    %v1842 = vmul.f32 %v1498, %v1819
    %v1843 = vmul.f32 %v1499, %v1823
    %v1844 = vmul.f32 %v1500, %v1819
    %v1845 = vmul.f32 %v1501, %v1823
    %v1846 = vmul.f32 %v1502, %v1819
    %v1847 = vmul.f32 %v1503, %v1823
    %v1848 = vmul.f32 %v1504, %v1819
    %v1849 = vmul.f32 %v1505, %v1823
    %v1850 = vmul.f32 %v1506, %v1819
    %v1851 = vmul.f32 %v1507, %v1823
    %v1852 = vmul.f32 %v1508, %v1819
    %v1853 = vmul.f32 %v1509, %v1823
    %v1854 = vmul.f32 %v1510, %v1819
    %v1855 = vmul.f32 %v1511, %v1823
    %v1856 = vmul.f32 %v1512, %v1819
    %v1857 = vmul.f32 %v1513, %v1823
    %v1858 = vmul.f32 %v1514, %v1819
    %v1859 = vmul.f32 %v1515, %v1823
    %v1860 = vmul.f32 %v1516, %v1819
    %v1861 = vmul.f32 %v1517, %v1823
    %v1862 = vmul.f32 %v1518, %v1819
    %v1863 = vmul.f32 %v1519, %v1823
    %v1864 = vmul.f32 %v1520, %v1819
    %v1865 = vmul.f32 %v1521, %v1823
    %v1866 = vmul.f32 %v1522, %v1819
    %v1867 = vmul.f32 %v1523, %v1823
    %v1868 = vmul.f32 %v1524, %v1819
    %v1869 = vmul.f32 %v1525, %v1823
    %v1870 = vmul.f32 %v1526, %v1819
    %v1871 = vmul.f32 %v1527, %v1823
    %v1872 = vmul.f32 %v1528, %v1819
    %v1873 = vmul.f32 %v1529, %v1823
    %v1874 = vmul.f32 %v1530, %v1819
    %v1875 = vmul.f32 %v1531, %v1823
    %v1876 = vmul.f32 %v1532, %v1819
    %v1877 = vmul.f32 %v1533, %v1823
    %v1878 = vmul.f32 %v1534, %v1819
    %v1879 = vmul.f32 %v1535, %v1823
    %v1880 = vmul.f32 %v1536, %v1819
    %v1881 = vmul.f32 %v1537, %v1823
    %v1882 = vmul.f32 %v1538, %v1819
    %v1883 = vmul.f32 %v1539, %v1823
    %v1884 = vmul.f32 %v1540, %v1819
    %v1885 = vmul.f32 %v1541, %v1823
    %v1886 = vmul.f32 %v1542, %v1819
    %v1887 = vmul.f32 %v1543, %v1823
    %v1888 = vadd.f32 %v1752, %v1824
    %v1889 = vadd.f32 %v1753, %v1825
    %v1890 = vadd.f32 %v1754, %v1826
    %v1891 = vadd.f32 %v1755, %v1827
    %v1892 = vadd.f32 %v1756, %v1828
    %v1893 = vadd.f32 %v1757, %v1829
    %v1894 = vadd.f32 %v1758, %v1830
    %v1895 = vadd.f32 %v1759, %v1831
    %v1896 = vadd.f32 %v1760, %v1832
    %v1897 = vadd.f32 %v1761, %v1833
    %v1898 = vadd.f32 %v1762, %v1834
    %v1899 = vadd.f32 %v1763, %v1835
    %v1900 = vadd.f32 %v1764, %v1836
    %v1901 = vadd.f32 %v1765, %v1837
    %v1902 = vadd.f32 %v1766, %v1838
    %v1903 = vadd.f32 %v1767, %v1839
    %v1904 = vadd.f32 %v1768, %v1840
    %v1905 = vadd.f32 %v1769, %v1841
    %v1906 = vadd.f32 %v1770, %v1842
    %v1907 = vadd.f32 %v1771, %v1843
    %v1908 = vadd.f32 %v1772, %v1844
    %v1909 = vadd.f32 %v1773, %v1845
    %v1910 = vadd.f32 %v1774, %v1846
    %v1911 = vadd.f32 %v1775, %v1847
    %v1912 = vadd.f32 %v1776, %v1848
    %v1913 = vadd.f32 %v1777, %v1849
    %v1914 = vadd.f32 %v1778, %v1850
    %v1915 = vadd.f32 %v1779, %v1851
    %v1916 = vadd.f32 %v1780, %v1852
    %v1917 = vadd.f32 %v1781, %v1853
    %v1918 = vadd.f32 %v1782, %v1854
    %v1919 = vadd.f32 %v1783, %v1855
    %v1920 = vadd.f32 %v1784, %v1856
    %v1921 = vadd.f32 %v1785, %v1857
    %v1922 = vadd.f32 %v1786, %v1858
    %v1923 = vadd.f32 %v1787, %v1859
    %v1924 = vadd.f32 %v1788, %v1860
    %v1925 = vadd.f32 %v1789, %v1861
    %v1926 = vadd.f32 %v1790, %v1862
    %v1927 = vadd.f32 %v1791, %v1863
    %v1928 = vadd.f32 %v1792, %v1864
    %v1929 = vadd.f32 %v1793, %v1865
    %v1930 = vadd.f32 %v1794, %v1866
    %v1931 = vadd.f32 %v1795, %v1867
    %v1932 = vadd.f32 %v1796, %v1868
    %v1933 = vadd.f32 %v1797, %v1869
    %v1934 = vadd.f32 %v1798, %v1870
    %v1935 = vadd.f32 %v1799, %v1871
    %v1936 = vadd.f32 %v1800, %v1872
    %v1937 = vadd.f32 %v1801, %v1873
    %v1938 = vadd.f32 %v1802, %v1874
    %v1939 = vadd.f32 %v1803, %v1875
    %v1940 = vadd.f32 %v1804, %v1876
    %v1941 = vadd.f32 %v1805, %v1877
    %v1942 = vadd.f32 %v1806, %v1878
    %v1943 = vadd.f32 %v1807, %v1879
    %v1944 = vadd.f32 %v1808, %v1880
    %v1945 = vadd.f32 %v1809, %v1881
    %v1946 = vadd.f32 %v1810, %v1882
    %v1947 = vadd.f32 %v1811, %v1883
    %v1948 = vadd.f32 %v1812, %v1884
    %v1949 = vadd.f32 %v1813, %v1885
    %v1950 = vadd.f32 %v1814, %v1886
    %v1951 = vadd.f32 %v1815, %v1887
    %v1952 = vrot.slane %v1480, 1
    %v1953 = vrot.slane %v1481, 1
    %v1954 = vrot.slane %v1512, 1
    %v1955 = vrot.slane %v1513, 1
    %v1956 = vrot.slane %v1482, 1
    %v1957 = vrot.slane %v1483, 1
    %v1958 = vrot.slane %v1514, 1
    %v1959 = vrot.slane %v1515, 1
    %v1960 = vrot.slane %v1484, 1
    %v1961 = vrot.slane %v1485, 1
    %v1962 = vrot.slane %v1516, 1
    %v1963 = vrot.slane %v1517, 1
    %v1964 = vrot.slane %v1486, 1
    %v1965 = vrot.slane %v1487, 1
    %v1966 = vrot.slane %v1518, 1
    %v1967 = vrot.slane %v1519, 1
    %v1968 = vrot.slane %v1488, 1
    %v1969 = vrot.slane %v1489, 1
    %v1970 = vrot.slane %v1520, 1
    %v1971 = vrot.slane %v1521, 1
    %v1972 = vrot.slane %v1490, 1
    %v1973 = vrot.slane %v1491, 1
    %v1974 = vrot.slane %v1522, 1
    %v1975 = vrot.slane %v1523, 1
    %v1976 = vrot.slane %v1492, 1
    %v1977 = vrot.slane %v1493, 1
    %v1978 = vrot.slane %v1524, 1
    %v1979 = vrot.slane %v1525, 1
    %v1980 = vrot.slane %v1494, 1
    %v1981 = vrot.slane %v1495, 1
    %v1982 = vrot.slane %v1526, 1
    %v1983 = vrot.slane %v1527, 1
    %v1984 = vrot.slane %v1496, 1
    %v1985 = vrot.slane %v1497, 1
    %v1986 = vrot.slane %v1528, 1
    %v1987 = vrot.slane %v1529, 1
    %v1988 = vrot.slane %v1498, 1
    %v1989 = vrot.slane %v1499, 1
    %v1990 = vrot.slane %v1530, 1
    %v1991 = vrot.slane %v1531, 1
    %v1992 = vrot.slane %v1500, 1
    %v1993 = vrot.slane %v1501, 1
    %v1994 = vrot.slane %v1532, 1
    %v1995 = vrot.slane %v1533, 1
    %v1996 = vrot.slane %v1502, 1
    %v1997 = vrot.slane %v1503, 1
    %v1998 = vrot.slane %v1534, 1
    %v1999 = vrot.slane %v1535, 1
    %v2000 = vrot.slane %v1504, 1
    %v2001 = vrot.slane %v1505, 1
    %v2002 = vrot.slane %v1536, 1
    %v2003 = vrot.slane %v1537, 1
    %v2004 = vrot.slane %v1506, 1
    %v2005 = vrot.slane %v1507, 1
    %v2006 = vrot.slane %v1538, 1
    %v2007 = vrot.slane %v1539, 1
    %v2008 = vrot.slane %v1508, 1
    %v2009 = vrot.slane %v1509, 1
    %v2010 = vrot.slane %v1540, 1
    %v2011 = vrot.slane %v1541, 1
    %v2012 = vrot.slane %v1510, 1
    %v2013 = vrot.slane %v1511, 1
    %v2014 = vrot.slane %v1542, 1
    %v2015 = vrot.slane %v1543, 1
    %v2016 = vsel %vm473, %v2008, %v2012
    %v2017 = vsel %vm473, %v2009, %v2013
    %v2018 = vsel %vm473, %v2010, %v2014
    %v2019 = vsel %vm473, %v2011, %v2015
    %v2020 = vsel %vm473, %v2004, %v2008
    %v2021 = vsel %vm473, %v2005, %v2009
    %v2022 = vsel %vm473, %v2006, %v2010
    %v2023 = vsel %vm473, %v2007, %v2011
    %v2024 = vsel %vm473, %v2000, %v2004
    %v2025 = vsel %vm473, %v2001, %v2005
    %v2026 = vsel %vm473, %v2002, %v2006
    %v2027 = vsel %vm473, %v2003, %v2007
    %v2028 = vsel %vm473, %v1996, %v2000
    %v2029 = vsel %vm473, %v1997, %v2001
    %v2030 = vsel %vm473, %v1998, %v2002
    %v2031 = vsel %vm473, %v1999, %v2003
    %v2032 = vsel %vm473, %v1992, %v1996
    %v2033 = vsel %vm473, %v1993, %v1997
    %v2034 = vsel %vm473, %v1994, %v1998
    %v2035 = vsel %vm473, %v1995, %v1999
    %v2036 = vsel %vm473, %v1988, %v1992
    %v2037 = vsel %vm473, %v1989, %v1993
    %v2038 = vsel %vm473, %v1990, %v1994
    %v2039 = vsel %vm473, %v1991, %v1995
    %v2040 = vsel %vm473, %v1984, %v1988
    %v2041 = vsel %vm473, %v1985, %v1989
    %v2042 = vsel %vm473, %v1986, %v1990
    %v2043 = vsel %vm473, %v1987, %v1991
    %v2044 = vsel %vm473, %v1980, %v1984
    %v2045 = vsel %vm473, %v1981, %v1985
    %v2046 = vsel %vm473, %v1982, %v1986
    %v2047 = vsel %vm473, %v1983, %v1987
    %v2048 = vsel %vm473, %v1976, %v1980
    %v2049 = vsel %vm473, %v1977, %v1981
    %v2050 = vsel %vm473, %v1978, %v1982
    %v2051 = vsel %vm473, %v1979, %v1983
    %v2052 = vsel %vm473, %v1972, %v1976
    %v2053 = vsel %vm473, %v1973, %v1977
    %v2054 = vsel %vm473, %v1974, %v1978
    %v2055 = vsel %vm473, %v1975, %v1979
    %v2056 = vsel %vm473, %v1968, %v1972
    %v2057 = vsel %vm473, %v1969, %v1973
    %v2058 = vsel %vm473, %v1970, %v1974
    %v2059 = vsel %vm473, %v1971, %v1975
    %v2060 = vsel %vm473, %v1964, %v1968
    %v2061 = vsel %vm473, %v1965, %v1969
    %v2062 = vsel %vm473, %v1966, %v1970
    %v2063 = vsel %vm473, %v1967, %v1971
    %v2064 = vsel %vm473, %v1960, %v1964
    %v2065 = vsel %vm473, %v1961, %v1965
    %v2066 = vsel %vm473, %v1962, %v1966
    %v2067 = vsel %vm473, %v1963, %v1967
    %v2068 = vsel %vm473, %v1956, %v1960
    %v2069 = vsel %vm473, %v1957, %v1961
    %v2070 = vsel %vm473, %v1958, %v1962
    %v2071 = vsel %vm473, %v1959, %v1963
    %v2072 = vsel %vm473, %v1952, %v1956
    %v2073 = vsel %vm473, %v1953, %v1957
    %v2074 = vsel %vm473, %v1954, %v1958
    %v2075 = vsel %vm473, %v1955, %v1959
    %v2076 = vsel %vm473, %v2012, %v1952
    %v2077 = vsel %vm473, %v2013, %v1953
    %v2078 = vsel %vm473, %v2014, %v1954
    %v2079 = vsel %vm473, %v2015, %v1955
    %v2080 = vmul.f32 %v2072, %v1592
    %v2081 = vmul.f32 %v2073, %v1593
    %v2082 = vmul.f32 %v2068, %v1594
    %v2083 = vmul.f32 %v2069, %v1595
    %v2084 = vmul.f32 %v2064, %v1596
    %v2085 = vmul.f32 %v2065, %v1597
    %v2086 = vmul.f32 %v2060, %v1598
    %v2087 = vmul.f32 %v2061, %v1599
    %v2088 = vmul.f32 %v2056, %v1600
    %v2089 = vmul.f32 %v2057, %v1601
    %v2090 = vmul.f32 %v2052, %v1602
    %v2091 = vmul.f32 %v2053, %v1603
    %v2092 = vmul.f32 %v2048, %v1604
    %v2093 = vmul.f32 %v2049, %v1605
    %v2094 = vmul.f32 %v2044, %v1606
    %v2095 = vmul.f32 %v2045, %v1607
    %v2096 = vmul.f32 %v2040, %v1608
    %v2097 = vmul.f32 %v2041, %v1609
    %v2098 = vmul.f32 %v2036, %v1610
    %v2099 = vmul.f32 %v2037, %v1611
    %v2100 = vmul.f32 %v2032, %v1612
    %v2101 = vmul.f32 %v2033, %v1613
    %v2102 = vmul.f32 %v2028, %v1614
    %v2103 = vmul.f32 %v2029, %v1615
    %v2104 = vmul.f32 %v2024, %v1616
    %v2105 = vmul.f32 %v2025, %v1617
    %v2106 = vmul.f32 %v2020, %v1618
    %v2107 = vmul.f32 %v2021, %v1619
    %v2108 = vmul.f32 %v2016, %v1620
    %v2109 = vmul.f32 %v2017, %v1621
    %v2110 = vmul.f32 %v2076, %v1622
    %v2111 = vmul.f32 %v2077, %v1623
    %v2112 = vmul.f32 %v2074, %v1592
    %v2113 = vmul.f32 %v2075, %v1593
    %v2114 = vmul.f32 %v2070, %v1594
    %v2115 = vmul.f32 %v2071, %v1595
    %v2116 = vmul.f32 %v2066, %v1596
    %v2117 = vmul.f32 %v2067, %v1597
    %v2118 = vmul.f32 %v2062, %v1598
    %v2119 = vmul.f32 %v2063, %v1599
    %v2120 = vmul.f32 %v2058, %v1600
    %v2121 = vmul.f32 %v2059, %v1601
    %v2122 = vmul.f32 %v2054, %v1602
    %v2123 = vmul.f32 %v2055, %v1603
    %v2124 = vmul.f32 %v2050, %v1604
    %v2125 = vmul.f32 %v2051, %v1605
    %v2126 = vmul.f32 %v2046, %v1606
    %v2127 = vmul.f32 %v2047, %v1607
    %v2128 = vmul.f32 %v2042, %v1608
    %v2129 = vmul.f32 %v2043, %v1609
    %v2130 = vmul.f32 %v2038, %v1610
    %v2131 = vmul.f32 %v2039, %v1611
    %v2132 = vmul.f32 %v2034, %v1612
    %v2133 = vmul.f32 %v2035, %v1613
    %v2134 = vmul.f32 %v2030, %v1614
    %v2135 = vmul.f32 %v2031, %v1615
    %v2136 = vmul.f32 %v2026, %v1616
    %v2137 = vmul.f32 %v2027, %v1617
    %v2138 = vmul.f32 %v2022, %v1618
    %v2139 = vmul.f32 %v2023, %v1619
    %v2140 = vmul.f32 %v2018, %v1620
    %v2141 = vmul.f32 %v2019, %v1621
    %v2142 = vmul.f32 %v2078, %v1622
    %v2143 = vmul.f32 %v2079, %v1623
    %v2144 = vadd.f32 %v1888, %v2080
    %v2145 = vadd.f32 %v1889, %v2081
    %v2146 = vadd.f32 %v1890, %v2082
    %v2147 = vadd.f32 %v1891, %v2083
    %v2148 = vadd.f32 %v1892, %v2084
    %v2149 = vadd.f32 %v1893, %v2085
    %v2150 = vadd.f32 %v1894, %v2086
    %v2151 = vadd.f32 %v1895, %v2087
    %v2152 = vadd.f32 %v1896, %v2088
    %v2153 = vadd.f32 %v1897, %v2089
    %v2154 = vadd.f32 %v1898, %v2090
    %v2155 = vadd.f32 %v1899, %v2091
    %v2156 = vadd.f32 %v1900, %v2092
    %v2157 = vadd.f32 %v1901, %v2093
    %v2158 = vadd.f32 %v1902, %v2094
    %v2159 = vadd.f32 %v1903, %v2095
    %v2160 = vadd.f32 %v1904, %v2096
    %v2161 = vadd.f32 %v1905, %v2097
    %v2162 = vadd.f32 %v1906, %v2098
    %v2163 = vadd.f32 %v1907, %v2099
    %v2164 = vadd.f32 %v1908, %v2100
    %v2165 = vadd.f32 %v1909, %v2101
    %v2166 = vadd.f32 %v1910, %v2102
    %v2167 = vadd.f32 %v1911, %v2103
    %v2168 = vadd.f32 %v1912, %v2104
    %v2169 = vadd.f32 %v1913, %v2105
    %v2170 = vadd.f32 %v1914, %v2106
    %v2171 = vadd.f32 %v1915, %v2107
    %v2172 = vadd.f32 %v1916, %v2108
    %v2173 = vadd.f32 %v1917, %v2109
    %v2174 = vadd.f32 %v1918, %v2110
    %v2175 = vadd.f32 %v1919, %v2111
    %v2176 = vadd.f32 %v1920, %v2112
    %v2177 = vadd.f32 %v1921, %v2113
    %v2178 = vadd.f32 %v1922, %v2114
    %v2179 = vadd.f32 %v1923, %v2115
    %v2180 = vadd.f32 %v1924, %v2116
    %v2181 = vadd.f32 %v1925, %v2117
    %v2182 = vadd.f32 %v1926, %v2118
    %v2183 = vadd.f32 %v1927, %v2119
    %v2184 = vadd.f32 %v1928, %v2120
    %v2185 = vadd.f32 %v1929, %v2121
    %v2186 = vadd.f32 %v1930, %v2122
    %v2187 = vadd.f32 %v1931, %v2123
    %v2188 = vadd.f32 %v1932, %v2124
    %v2189 = vadd.f32 %v1933, %v2125
    %v2190 = vadd.f32 %v1934, %v2126
    %v2191 = vadd.f32 %v1935, %v2127
    %v2192 = vadd.f32 %v1936, %v2128
    %v2193 = vadd.f32 %v1937, %v2129
    %v2194 = vadd.f32 %v1938, %v2130
    %v2195 = vadd.f32 %v1939, %v2131
    %v2196 = vadd.f32 %v1940, %v2132
    %v2197 = vadd.f32 %v1941, %v2133
    %v2198 = vadd.f32 %v1942, %v2134
    %v2199 = vadd.f32 %v1943, %v2135
    %v2200 = vadd.f32 %v1944, %v2136
    %v2201 = vadd.f32 %v1945, %v2137
    %v2202 = vadd.f32 %v1946, %v2138
    %v2203 = vadd.f32 %v1947, %v2139
    %v2204 = vadd.f32 %v1948, %v2140
    %v2205 = vadd.f32 %v1949, %v2141
    %v2206 = vadd.f32 %v1950, %v2142
    %v2207 = vadd.f32 %v1951, %v2143
    %v2208 = vadd.f32 %v2144, %v2146
    %v2209 = vadd.f32 %v2208, %v2148
    %v2210 = vadd.f32 %v2209, %v2150
    %v2211 = vadd.f32 %v2210, %v2152
    %v2212 = vadd.f32 %v2211, %v2154
    %v2213 = vadd.f32 %v2212, %v2156
    %v2214 = vadd.f32 %v2213, %v2158
    %v2215 = vadd.f32 %v2214, %v2160
    %v2216 = vadd.f32 %v2215, %v2162
    %v2217 = vadd.f32 %v2216, %v2164
    %v2218 = vadd.f32 %v2217, %v2166
    %v2219 = vadd.f32 %v2218, %v2168
    %v2220 = vadd.f32 %v2219, %v2170
    %v2221 = vadd.f32 %v2220, %v2172
    %v2222 = vadd.f32 %v2221, %v2174
    %v2223 = vadd.f32 %v2222, %v2176
    %v2224 = vadd.f32 %v2223, %v2178
    %v2225 = vadd.f32 %v2224, %v2180
    %v2226 = vadd.f32 %v2225, %v2182
    %v2227 = vadd.f32 %v2226, %v2184
    %v2228 = vadd.f32 %v2227, %v2186
    %v2229 = vadd.f32 %v2228, %v2188
    %v2230 = vadd.f32 %v2229, %v2190
    %v2231 = vadd.f32 %v2230, %v2192
    %v2232 = vadd.f32 %v2231, %v2194
    %v2233 = vadd.f32 %v2232, %v2196
    %v2234 = vadd.f32 %v2233, %v2198
    %v2235 = vadd.f32 %v2234, %v2200
    %v2236 = vadd.f32 %v2235, %v2202
    %v2237 = vadd.f32 %v2236, %v2204
    %v2238 = vadd.f32 %v2237, %v2206
    %v2239 = vrot.slane %v2238, 4
    %v2240 = vadd.f32 %v2238, %v2239
    %v2241 = vrot.slane %v2240, 2
    %v2242 = vadd.f32 %v2240, %v2241
    %v2243 = vrot.slane %v2242, 1
    %v2244 = vadd.f32 %v2242, %v2243
    %v2245 = vadd.f32 %v2145, %v2147
    %v2246 = vadd.f32 %v2245, %v2149
    %v2247 = vadd.f32 %v2246, %v2151
    %v2248 = vadd.f32 %v2247, %v2153
    %v2249 = vadd.f32 %v2248, %v2155
    %v2250 = vadd.f32 %v2249, %v2157
    %v2251 = vadd.f32 %v2250, %v2159
    %v2252 = vadd.f32 %v2251, %v2161
    %v2253 = vadd.f32 %v2252, %v2163
    %v2254 = vadd.f32 %v2253, %v2165
    %v2255 = vadd.f32 %v2254, %v2167
    %v2256 = vadd.f32 %v2255, %v2169
    %v2257 = vadd.f32 %v2256, %v2171
    %v2258 = vadd.f32 %v2257, %v2173
    %v2259 = vadd.f32 %v2258, %v2175
    %v2260 = vadd.f32 %v2259, %v2177
    %v2261 = vadd.f32 %v2260, %v2179
    %v2262 = vadd.f32 %v2261, %v2181
    %v2263 = vadd.f32 %v2262, %v2183
    %v2264 = vadd.f32 %v2263, %v2185
    %v2265 = vadd.f32 %v2264, %v2187
    %v2266 = vadd.f32 %v2265, %v2189
    %v2267 = vadd.f32 %v2266, %v2191
    %v2268 = vadd.f32 %v2267, %v2193
    %v2269 = vadd.f32 %v2268, %v2195
    %v2270 = vadd.f32 %v2269, %v2197
    %v2271 = vadd.f32 %v2270, %v2199
    %v2272 = vadd.f32 %v2271, %v2201
    %v2273 = vadd.f32 %v2272, %v2203
    %v2274 = vadd.f32 %v2273, %v2205
    %v2275 = vadd.f32 %v2274, %v2207
    %v2276 = vrot.slane %v2275, 4
    %v2277 = vadd.f32 %v2275, %v2276
    %v2278 = vrot.slane %v2277, 2
    %v2279 = vadd.f32 %v2277, %v2278
    %v2280 = vrot.slane %v2279, 1
    %v2281 = vadd.f32 %v2279, %v2280
    %v2282 = vmul.f32 %v2244, 0.00390625
    %v2283 = vmul.f32 %v2281, 0.00390625
    %v2284 = vmul.f32 %v2144, %v2144
    %v2285 = vmul.f32 %v2145, %v2145
    %v2286 = vmul.f32 %v2146, %v2146
    %v2287 = vmul.f32 %v2147, %v2147
    %v2288 = vmul.f32 %v2148, %v2148
    %v2289 = vmul.f32 %v2149, %v2149
    %v2290 = vmul.f32 %v2150, %v2150
    %v2291 = vmul.f32 %v2151, %v2151
    %v2292 = vmul.f32 %v2152, %v2152
    %v2293 = vmul.f32 %v2153, %v2153
    %v2294 = vmul.f32 %v2154, %v2154
    %v2295 = vmul.f32 %v2155, %v2155
    %v2296 = vmul.f32 %v2156, %v2156
    %v2297 = vmul.f32 %v2157, %v2157
    %v2298 = vmul.f32 %v2158, %v2158
    %v2299 = vmul.f32 %v2159, %v2159
    %v2300 = vmul.f32 %v2160, %v2160
    %v2301 = vmul.f32 %v2161, %v2161
    %v2302 = vmul.f32 %v2162, %v2162
    %v2303 = vmul.f32 %v2163, %v2163
    %v2304 = vmul.f32 %v2164, %v2164
    %v2305 = vmul.f32 %v2165, %v2165
    %v2306 = vmul.f32 %v2166, %v2166
    %v2307 = vmul.f32 %v2167, %v2167
    %v2308 = vmul.f32 %v2168, %v2168
    %v2309 = vmul.f32 %v2169, %v2169
    %v2310 = vmul.f32 %v2170, %v2170
    %v2311 = vmul.f32 %v2171, %v2171
    %v2312 = vmul.f32 %v2172, %v2172
    %v2313 = vmul.f32 %v2173, %v2173
    %v2314 = vmul.f32 %v2174, %v2174
    %v2315 = vmul.f32 %v2175, %v2175
    %v2316 = vmul.f32 %v2176, %v2176
    %v2317 = vmul.f32 %v2177, %v2177
    %v2318 = vmul.f32 %v2178, %v2178
    %v2319 = vmul.f32 %v2179, %v2179
    %v2320 = vmul.f32 %v2180, %v2180
    %v2321 = vmul.f32 %v2181, %v2181
    %v2322 = vmul.f32 %v2182, %v2182
    %v2323 = vmul.f32 %v2183, %v2183
    %v2324 = vmul.f32 %v2184, %v2184
    %v2325 = vmul.f32 %v2185, %v2185
    %v2326 = vmul.f32 %v2186, %v2186
    %v2327 = vmul.f32 %v2187, %v2187
    %v2328 = vmul.f32 %v2188, %v2188
    %v2329 = vmul.f32 %v2189, %v2189
    %v2330 = vmul.f32 %v2190, %v2190
    %v2331 = vmul.f32 %v2191, %v2191
    %v2332 = vmul.f32 %v2192, %v2192
    %v2333 = vmul.f32 %v2193, %v2193
    %v2334 = vmul.f32 %v2194, %v2194
    %v2335 = vmul.f32 %v2195, %v2195
    %v2336 = vmul.f32 %v2196, %v2196
    %v2337 = vmul.f32 %v2197, %v2197
    %v2338 = vmul.f32 %v2198, %v2198
    %v2339 = vmul.f32 %v2199, %v2199
    %v2340 = vmul.f32 %v2200, %v2200
    %v2341 = vmul.f32 %v2201, %v2201
    %v2342 = vmul.f32 %v2202, %v2202
    %v2343 = vmul.f32 %v2203, %v2203
    %v2344 = vmul.f32 %v2204, %v2204
    %v2345 = vmul.f32 %v2205, %v2205
    %v2346 = vmul.f32 %v2206, %v2206
    %v2347 = vmul.f32 %v2207, %v2207
    %v2348 = vadd.f32 %v2284, %v2286
    %v2349 = vadd.f32 %v2348, %v2288
    %v2350 = vadd.f32 %v2349, %v2290
    %v2351 = vadd.f32 %v2350, %v2292
    %v2352 = vadd.f32 %v2351, %v2294
    %v2353 = vadd.f32 %v2352, %v2296
    %v2354 = vadd.f32 %v2353, %v2298
    %v2355 = vadd.f32 %v2354, %v2300
    %v2356 = vadd.f32 %v2355, %v2302
    %v2357 = vadd.f32 %v2356, %v2304
    %v2358 = vadd.f32 %v2357, %v2306
    %v2359 = vadd.f32 %v2358, %v2308
    %v2360 = vadd.f32 %v2359, %v2310
    %v2361 = vadd.f32 %v2360, %v2312
    %v2362 = vadd.f32 %v2361, %v2314
    %v2363 = vadd.f32 %v2362, %v2316
    %v2364 = vadd.f32 %v2363, %v2318
    %v2365 = vadd.f32 %v2364, %v2320
    %v2366 = vadd.f32 %v2365, %v2322
    %v2367 = vadd.f32 %v2366, %v2324
    %v2368 = vadd.f32 %v2367, %v2326
    %v2369 = vadd.f32 %v2368, %v2328
    %v2370 = vadd.f32 %v2369, %v2330
    %v2371 = vadd.f32 %v2370, %v2332
    %v2372 = vadd.f32 %v2371, %v2334
    %v2373 = vadd.f32 %v2372, %v2336
    %v2374 = vadd.f32 %v2373, %v2338
    %v2375 = vadd.f32 %v2374, %v2340
    %v2376 = vadd.f32 %v2375, %v2342
    %v2377 = vadd.f32 %v2376, %v2344
    %v2378 = vadd.f32 %v2377, %v2346
    %v2379 = vrot.slane %v2378, 4
    %v2380 = vadd.f32 %v2378, %v2379
    %v2381 = vrot.slane %v2380, 2
    %v2382 = vadd.f32 %v2380, %v2381
    %v2383 = vrot.slane %v2382, 1
    %v2384 = vadd.f32 %v2382, %v2383
    %v2385 = vadd.f32 %v2285, %v2287
    %v2386 = vadd.f32 %v2385, %v2289
    %v2387 = vadd.f32 %v2386, %v2291
    %v2388 = vadd.f32 %v2387, %v2293
    %v2389 = vadd.f32 %v2388, %v2295
    %v2390 = vadd.f32 %v2389, %v2297
    %v2391 = vadd.f32 %v2390, %v2299
    %v2392 = vadd.f32 %v2391, %v2301
    %v2393 = vadd.f32 %v2392, %v2303
    %v2394 = vadd.f32 %v2393, %v2305
    %v2395 = vadd.f32 %v2394, %v2307
    %v2396 = vadd.f32 %v2395, %v2309
    %v2397 = vadd.f32 %v2396, %v2311
    %v2398 = vadd.f32 %v2397, %v2313
    %v2399 = vadd.f32 %v2398, %v2315
    %v2400 = vadd.f32 %v2399, %v2317
    %v2401 = vadd.f32 %v2400, %v2319
    %v2402 = vadd.f32 %v2401, %v2321
    %v2403 = vadd.f32 %v2402, %v2323
    %v2404 = vadd.f32 %v2403, %v2325
    %v2405 = vadd.f32 %v2404, %v2327
    %v2406 = vadd.f32 %v2405, %v2329
    %v2407 = vadd.f32 %v2406, %v2331
    %v2408 = vadd.f32 %v2407, %v2333
    %v2409 = vadd.f32 %v2408, %v2335
    %v2410 = vadd.f32 %v2409, %v2337
    %v2411 = vadd.f32 %v2410, %v2339
    %v2412 = vadd.f32 %v2411, %v2341
    %v2413 = vadd.f32 %v2412, %v2343
    %v2414 = vadd.f32 %v2413, %v2345
    %v2415 = vadd.f32 %v2414, %v2347
    %v2416 = vrot.slane %v2415, 4
    %v2417 = vadd.f32 %v2415, %v2416
    %v2418 = vrot.slane %v2417, 2
    %v2419 = vadd.f32 %v2417, %v2418
    %v2420 = vrot.slane %v2419, 1
    %v2421 = vadd.f32 %v2419, %v2420
    %v2422 = vmul.f32 %v2384, 0.00390625
    %v2423 = vmul.f32 %v2421, 0.00390625
    %v2424 = vmul.f32 %v2282, %v2282
    %v2425 = vmul.f32 %v2283, %v2283
    %v2426 = vsub.f32 %v2422, %v2424
    %v2427 = vsub.f32 %v2423, %v2425
    %v2428 = vmax.f32 %v2426, 0.0
    %v2429 = vmax.f32 %v2427, 0.0
    %v2430 = vadd.f32 %v2428, 1e-05
    %v2431 = vadd.f32 %v2429, 1e-05
    %v2432 = vrsqrt.pop %v2430
    %v2433 = vrsqrt.pop %v2431
    %v2434 = vmul.f32 %v119, %v2432
    %v2435 = vmul.f32 %v120, %v2433
    %v2436 = vmul.f32 %v2282, %v2434
    %v2437 = vmul.f32 %v2283, %v2435
    %v2440 = vrot.slane %v2436, 7
    %v2441 = vrot.slane %v2437, 7
    %v2444 = vsub.f32 %v119, %v2440
    %v2445 = vsub.f32 %v120, %v2441
    %v2446 = vlaneseq
    %v2447 = vshrl.u32 %v2446, 7
    %v2448 = vsub.s32 5, %v2447
    %v2449 = vrot.slane %v2434, %v2448
    %v2450 = vlaneseq
    %v2451 = vshrl.u32 %v2450, 7
    %v2452 = vsub.s32 5, %v2451
    %v2453 = vrot.slane %v2435, %v2452
    %v2454 = vmul.f32 %v2144, %v2449
    %v2455 = vmul.f32 %v2145, %v2453
    %v2456 = vmul.f32 %v2146, %v2449
    %v2457 = vmul.f32 %v2147, %v2453
    %v2458 = vmul.f32 %v2148, %v2449
    %v2459 = vmul.f32 %v2149, %v2453
    %v2460 = vmul.f32 %v2150, %v2449
    %v2461 = vmul.f32 %v2151, %v2453
    %v2462 = vmul.f32 %v2152, %v2449
    %v2463 = vmul.f32 %v2153, %v2453
    %v2464 = vmul.f32 %v2154, %v2449
    %v2465 = vmul.f32 %v2155, %v2453
    %v2466 = vmul.f32 %v2156, %v2449
    %v2467 = vmul.f32 %v2157, %v2453
    %v2468 = vmul.f32 %v2158, %v2449
    %v2469 = vmul.f32 %v2159, %v2453
    %v2470 = vmul.f32 %v2160, %v2449
    %v2471 = vmul.f32 %v2161, %v2453
    %v2472 = vmul.f32 %v2162, %v2449
    %v2473 = vmul.f32 %v2163, %v2453
    %v2474 = vmul.f32 %v2164, %v2449
    %v2475 = vmul.f32 %v2165, %v2453
    %v2476 = vmul.f32 %v2166, %v2449
    %v2477 = vmul.f32 %v2167, %v2453
    %v2478 = vmul.f32 %v2168, %v2449
    %v2479 = vmul.f32 %v2169, %v2453
    %v2480 = vmul.f32 %v2170, %v2449
    %v2481 = vmul.f32 %v2171, %v2453
    %v2482 = vmul.f32 %v2172, %v2449
    %v2483 = vmul.f32 %v2173, %v2453
    %v2484 = vmul.f32 %v2174, %v2449
    %v2485 = vmul.f32 %v2175, %v2453
    %v2486 = vmul.f32 %v2176, %v2449
    %v2487 = vmul.f32 %v2177, %v2453
    %v2488 = vmul.f32 %v2178, %v2449
    %v2489 = vmul.f32 %v2179, %v2453
    %v2490 = vmul.f32 %v2180, %v2449
    %v2491 = vmul.f32 %v2181, %v2453
    %v2492 = vmul.f32 %v2182, %v2449
    %v2493 = vmul.f32 %v2183, %v2453
    %v2494 = vmul.f32 %v2184, %v2449
    %v2495 = vmul.f32 %v2185, %v2453
    %v2496 = vmul.f32 %v2186, %v2449
    %v2497 = vmul.f32 %v2187, %v2453
    %v2498 = vmul.f32 %v2188, %v2449
    %v2499 = vmul.f32 %v2189, %v2453
    %v2500 = vmul.f32 %v2190, %v2449
    %v2501 = vmul.f32 %v2191, %v2453
    %v2502 = vmul.f32 %v2192, %v2449
    %v2503 = vmul.f32 %v2193, %v2453
    %v2504 = vmul.f32 %v2194, %v2449
    %v2505 = vmul.f32 %v2195, %v2453
    %v2506 = vmul.f32 %v2196, %v2449
    %v2507 = vmul.f32 %v2197, %v2453
    %v2508 = vmul.f32 %v2198, %v2449
    %v2509 = vmul.f32 %v2199, %v2453
    %v2510 = vmul.f32 %v2200, %v2449
    %v2511 = vmul.f32 %v2201, %v2453
    %v2512 = vmul.f32 %v2202, %v2449
    %v2513 = vmul.f32 %v2203, %v2453
    %v2514 = vmul.f32 %v2204, %v2449
    %v2515 = vmul.f32 %v2205, %v2453
    %v2516 = vmul.f32 %v2206, %v2449
    %v2517 = vmul.f32 %v2207, %v2453
    %v2518 = vlaneseq
    %v2519 = vshrl.u32 %v2518, 7
    %v2520 = vsub.s32 6, %v2519
    %v2521 = vrot.slane %v2444, %v2520
    %v2522 = vlaneseq
    %v2523 = vshrl.u32 %v2522, 7
    %v2524 = vsub.s32 6, %v2523
    %v2525 = vrot.slane %v2445, %v2524
    %v2526 = vadd.f32 %v2454, %v2521
    %v2527 = vadd.f32 %v2455, %v2525
    %v2528 = vadd.f32 %v2456, %v2521
    %v2529 = vadd.f32 %v2457, %v2525
    %v2530 = vadd.f32 %v2458, %v2521
    %v2531 = vadd.f32 %v2459, %v2525
    %v2532 = vadd.f32 %v2460, %v2521
    %v2533 = vadd.f32 %v2461, %v2525
    %v2534 = vadd.f32 %v2462, %v2521
    %v2535 = vadd.f32 %v2463, %v2525
    %v2536 = vadd.f32 %v2464, %v2521
    %v2537 = vadd.f32 %v2465, %v2525
    %v2538 = vadd.f32 %v2466, %v2521
    %v2539 = vadd.f32 %v2467, %v2525
    %v2540 = vadd.f32 %v2468, %v2521
    %v2541 = vadd.f32 %v2469, %v2525
    %v2542 = vadd.f32 %v2470, %v2521
    %v2543 = vadd.f32 %v2471, %v2525
    %v2544 = vadd.f32 %v2472, %v2521
    %v2545 = vadd.f32 %v2473, %v2525
    %v2546 = vadd.f32 %v2474, %v2521
    %v2547 = vadd.f32 %v2475, %v2525
    %v2548 = vadd.f32 %v2476, %v2521
    %v2549 = vadd.f32 %v2477, %v2525
    %v2550 = vadd.f32 %v2478, %v2521
    %v2551 = vadd.f32 %v2479, %v2525
    %v2552 = vadd.f32 %v2480, %v2521
    %v2553 = vadd.f32 %v2481, %v2525
    %v2554 = vadd.f32 %v2482, %v2521
    %v2555 = vadd.f32 %v2483, %v2525
    %v2556 = vadd.f32 %v2484, %v2521
    %v2557 = vadd.f32 %v2485, %v2525
    %v2558 = vadd.f32 %v2486, %v2521
    %v2559 = vadd.f32 %v2487, %v2525
    %v2560 = vadd.f32 %v2488, %v2521
    %v2561 = vadd.f32 %v2489, %v2525
    %v2562 = vadd.f32 %v2490, %v2521
    %v2563 = vadd.f32 %v2491, %v2525
    %v2564 = vadd.f32 %v2492, %v2521
    %v2565 = vadd.f32 %v2493, %v2525
    %v2566 = vadd.f32 %v2494, %v2521
    %v2567 = vadd.f32 %v2495, %v2525
    %v2568 = vadd.f32 %v2496, %v2521
    %v2569 = vadd.f32 %v2497, %v2525
    %v2570 = vadd.f32 %v2498, %v2521
    %v2571 = vadd.f32 %v2499, %v2525
    %v2572 = vadd.f32 %v2500, %v2521
    %v2573 = vadd.f32 %v2501, %v2525
    %v2574 = vadd.f32 %v2502, %v2521
    %v2575 = vadd.f32 %v2503, %v2525
    %v2576 = vadd.f32 %v2504, %v2521
    %v2577 = vadd.f32 %v2505, %v2525
    %v2578 = vadd.f32 %v2506, %v2521
    %v2579 = vadd.f32 %v2507, %v2525
    %v2580 = vadd.f32 %v2508, %v2521
    %v2581 = vadd.f32 %v2509, %v2525
    %v2582 = vadd.f32 %v2510, %v2521
    %v2583 = vadd.f32 %v2511, %v2525
    %v2584 = vadd.f32 %v2512, %v2521
    %v2585 = vadd.f32 %v2513, %v2525
    %v2586 = vadd.f32 %v2514, %v2521
    %v2587 = vadd.f32 %v2515, %v2525
    %v2588 = vadd.f32 %v2516, %v2521
    %v2589 = vadd.f32 %v2517, %v2525
    %v2590 = vmax.f32 %v2526, 0.0
    %v2591 = vmax.f32 %v2527, 0.0
    %v2592 = vmax.f32 %v2528, 0.0
    %v2593 = vmax.f32 %v2529, 0.0
    %v2594 = vmax.f32 %v2530, 0.0
    %v2595 = vmax.f32 %v2531, 0.0
    %v2596 = vmax.f32 %v2532, 0.0
    %v2597 = vmax.f32 %v2533, 0.0
    %v2598 = vmax.f32 %v2534, 0.0
    %v2599 = vmax.f32 %v2535, 0.0
    %v2600 = vmax.f32 %v2536, 0.0
    %v2601 = vmax.f32 %v2537, 0.0
    %v2602 = vmax.f32 %v2538, 0.0
    %v2603 = vmax.f32 %v2539, 0.0
    %v2604 = vmax.f32 %v2540, 0.0
    %v2605 = vmax.f32 %v2541, 0.0
    %v2606 = vmax.f32 %v2542, 0.0
    %v2607 = vmax.f32 %v2543, 0.0
    %v2608 = vmax.f32 %v2544, 0.0
    %v2609 = vmax.f32 %v2545, 0.0
    %v2610 = vmax.f32 %v2546, 0.0
    %v2611 = vmax.f32 %v2547, 0.0
    %v2612 = vmax.f32 %v2548, 0.0
    %v2613 = vmax.f32 %v2549, 0.0
    %v2614 = vmax.f32 %v2550, 0.0
    %v2615 = vmax.f32 %v2551, 0.0
    %v2616 = vmax.f32 %v2552, 0.0
    %v2617 = vmax.f32 %v2553, 0.0
    %v2618 = vmax.f32 %v2554, 0.0
    %v2619 = vmax.f32 %v2555, 0.0
    %v2620 = vmax.f32 %v2556, 0.0
    %v2621 = vmax.f32 %v2557, 0.0
    %v2622 = vmax.f32 %v2558, 0.0
    %v2623 = vmax.f32 %v2559, 0.0
    %v2624 = vmax.f32 %v2560, 0.0
    %v2625 = vmax.f32 %v2561, 0.0
    %v2626 = vmax.f32 %v2562, 0.0
    %v2627 = vmax.f32 %v2563, 0.0
    %v2628 = vmax.f32 %v2564, 0.0
    %v2629 = vmax.f32 %v2565, 0.0
    %v2630 = vmax.f32 %v2566, 0.0
    %v2631 = vmax.f32 %v2567, 0.0
    %v2632 = vmax.f32 %v2568, 0.0
    %v2633 = vmax.f32 %v2569, 0.0
    %v2634 = vmax.f32 %v2570, 0.0
    %v2635 = vmax.f32 %v2571, 0.0
    %v2636 = vmax.f32 %v2572, 0.0
    %v2637 = vmax.f32 %v2573, 0.0
    %v2638 = vmax.f32 %v2574, 0.0
    %v2639 = vmax.f32 %v2575, 0.0
    %v2640 = vmax.f32 %v2576, 0.0
    %v2641 = vmax.f32 %v2577, 0.0
    %v2642 = vmax.f32 %v2578, 0.0
    %v2643 = vmax.f32 %v2579, 0.0
    %v2644 = vmax.f32 %v2580, 0.0
    %v2645 = vmax.f32 %v2581, 0.0
    %v2646 = vmax.f32 %v2582, 0.0
    %v2647 = vmax.f32 %v2583, 0.0
    %v2648 = vmax.f32 %v2584, 0.0
    %v2649 = vmax.f32 %v2585, 0.0
    %v2650 = vmax.f32 %v2586, 0.0
    %v2651 = vmax.f32 %v2587, 0.0
    %v2652 = vmax.f32 %v2588, 0.0
    %v2653 = vmax.f32 %v2589, 0.0
    %v2654 = vld [vmem:[%s4] sm:$0xff]
    %v2655 = vld [vmem:[%s4 + $0x8] sm:$0xff]
    %v2656 = vld [vmem:[%s4 + $0x10] sm:$0xff]
    %v2657 = vld [vmem:[%s4 + $0x18] sm:$0xff]
    %v2658 = vld [vmem:[%s4 + $0x20] sm:$0xff]
    %v2659 = vld [vmem:[%s4 + $0x28] sm:$0xff]
    %v2660 = vld [vmem:[%s4 + $0x30] sm:$0xff]
    %v2661 = vld [vmem:[%s4 + $0x38] sm:$0xff]
    %v2662 = vld [vmem:[%s4 + $0x40] sm:$0xff]
    %v2663 = vld [vmem:[%s4 + $0x48] sm:$0xff]
    %v2664 = vld [vmem:[%s4 + $0x50] sm:$0xff]
    %v2665 = vld [vmem:[%s4 + $0x58] sm:$0xff]
    %v2666 = vld [vmem:[%s4 + $0x60] sm:$0xff]
    %v2667 = vld [vmem:[%s4 + $0x68] sm:$0xff]
    %v2668 = vld [vmem:[%s4 + $0x70] sm:$0xff]
    %v2669 = vld [vmem:[%s4 + $0x78] sm:$0xff]
    %v2670 = vld [vmem:[%s4 + $0x80] sm:$0xff]
    %v2671 = vld [vmem:[%s4 + $0x88] sm:$0xff]
    %v2672 = vld [vmem:[%s4 + $0x90] sm:$0xff]
    %v2673 = vld [vmem:[%s4 + $0x98] sm:$0xff]
    %v2674 = vld [vmem:[%s4 + $0xa0] sm:$0xff]
    %v2675 = vld [vmem:[%s4 + $0xa8] sm:$0xff]
    %v2676 = vld [vmem:[%s4 + $0xb0] sm:$0xff]
    %v2677 = vld [vmem:[%s4 + $0xb8] sm:$0xff]
    %v2678 = vld [vmem:[%s4 + $0xc0] sm:$0xff]
    %v2679 = vld [vmem:[%s4 + $0xc8] sm:$0xff]
    %v2680 = vld [vmem:[%s4 + $0xd0] sm:$0xff]
    %v2681 = vld [vmem:[%s4 + $0xd8] sm:$0xff]
    %v2682 = vld [vmem:[%s4 + $0xe0] sm:$0xff]
    %v2683 = vld [vmem:[%s4 + $0xe8] sm:$0xff]
    %v2684 = vld [vmem:[%s4 + $0xf0] sm:$0xff]
    %v2685 = vld [vmem:[%s4 + $0xf8] sm:$0xff]
    %v2686 = vpack.c.bf16 %v2592, %v2590
    %v2687 = vpack.c.bf16 %v2593, %v2591
    %v2688 = vpack.c.bf16 %v2596, %v2594
    %v2689 = vpack.c.bf16 %v2597, %v2595
    %v2690 = vpack.c.bf16 %v2600, %v2598
    %v2691 = vpack.c.bf16 %v2601, %v2599
    %v2692 = vpack.c.bf16 %v2604, %v2602
    %v2693 = vpack.c.bf16 %v2605, %v2603
    %v2694 = vpack.c.bf16 %v2608, %v2606
    %v2695 = vpack.c.bf16 %v2609, %v2607
    %v2696 = vpack.c.bf16 %v2612, %v2610
    %v2697 = vpack.c.bf16 %v2613, %v2611
    %v2698 = vpack.c.bf16 %v2616, %v2614
    %v2699 = vpack.c.bf16 %v2617, %v2615
    %v2700 = vpack.c.bf16 %v2620, %v2618
    %v2701 = vpack.c.bf16 %v2621, %v2619
    %v2702 = vpack.c.bf16 %v2624, %v2622
    %v2703 = vpack.c.bf16 %v2625, %v2623
    %v2704 = vpack.c.bf16 %v2628, %v2626
    %v2705 = vpack.c.bf16 %v2629, %v2627
    %v2706 = vpack.c.bf16 %v2632, %v2630
    %v2707 = vpack.c.bf16 %v2633, %v2631
    %v2708 = vpack.c.bf16 %v2636, %v2634
    %v2709 = vpack.c.bf16 %v2637, %v2635
    %v2710 = vpack.c.bf16 %v2640, %v2638
    %v2711 = vpack.c.bf16 %v2641, %v2639
    %v2712 = vpack.c.bf16 %v2644, %v2642
    %v2713 = vpack.c.bf16 %v2645, %v2643
    %v2714 = vpack.c.bf16 %v2648, %v2646
    %v2715 = vpack.c.bf16 %v2649, %v2647
    %v2716 = vpack.c.bf16 %v2652, %v2650
    %v2717 = vpack.c.bf16 %v2653, %v2651
    %v2750 = vunpack.c.l.b16 %v2654
    %v2751 = vunpack.c.h.b16 %v2654
    %v2752 = vunpack.c.l.b16 %v2655
    %v2753 = vunpack.c.h.b16 %v2655
    %v2754 = vunpack.c.l.b16 %v2656
    %v2755 = vunpack.c.h.b16 %v2656
    %v2756 = vunpack.c.l.b16 %v2657
    %v2757 = vunpack.c.h.b16 %v2657
    %v2758 = vunpack.c.l.b16 %v2658
    %v2759 = vunpack.c.h.b16 %v2658
    %v2760 = vunpack.c.l.b16 %v2659
    %v2761 = vunpack.c.h.b16 %v2659
    %v2762 = vunpack.c.l.b16 %v2660
    %v2763 = vunpack.c.h.b16 %v2660
    %v2764 = vunpack.c.l.b16 %v2661
    %v2765 = vunpack.c.h.b16 %v2661
    %v2766 = vunpack.c.l.b16 %v2662
    %v2767 = vunpack.c.h.b16 %v2662
    %v2768 = vunpack.c.l.b16 %v2663
    %v2769 = vunpack.c.h.b16 %v2663
    %v2770 = vunpack.c.l.b16 %v2664
    %v2771 = vunpack.c.h.b16 %v2664
    %v2772 = vunpack.c.l.b16 %v2665
    %v2773 = vunpack.c.h.b16 %v2665
    %v2774 = vunpack.c.l.b16 %v2666
    %v2775 = vunpack.c.h.b16 %v2666
    %v2776 = vunpack.c.l.b16 %v2667
    %v2777 = vunpack.c.h.b16 %v2667
    %v2778 = vunpack.c.l.b16 %v2668
    %v2779 = vunpack.c.h.b16 %v2668
    %v2780 = vunpack.c.l.b16 %v2669
    %v2781 = vunpack.c.h.b16 %v2669
    %v2782 = vunpack.c.l.b16 %v2670
    %v2783 = vunpack.c.h.b16 %v2670
    %v2784 = vunpack.c.l.b16 %v2671
    %v2785 = vunpack.c.h.b16 %v2671
    %v2786 = vunpack.c.l.b16 %v2672
    %v2787 = vunpack.c.h.b16 %v2672
    %v2788 = vunpack.c.l.b16 %v2673
    %v2789 = vunpack.c.h.b16 %v2673
    %v2790 = vunpack.c.l.b16 %v2674
    %v2791 = vunpack.c.h.b16 %v2674
    %v2792 = vunpack.c.l.b16 %v2675
    %v2793 = vunpack.c.h.b16 %v2675
    %v2794 = vunpack.c.l.b16 %v2676
    %v2795 = vunpack.c.h.b16 %v2676
    %v2796 = vunpack.c.l.b16 %v2677
    %v2797 = vunpack.c.h.b16 %v2677
    %v2798 = vunpack.c.l.b16 %v2678
    %v2799 = vunpack.c.h.b16 %v2678
    %v2800 = vunpack.c.l.b16 %v2679
    %v2801 = vunpack.c.h.b16 %v2679
    %v2802 = vunpack.c.l.b16 %v2680
    %v2803 = vunpack.c.h.b16 %v2680
    %v2804 = vunpack.c.l.b16 %v2681
    %v2805 = vunpack.c.h.b16 %v2681
    %v2806 = vunpack.c.l.b16 %v2682
    %v2807 = vunpack.c.h.b16 %v2682
    %v2808 = vunpack.c.l.b16 %v2683
    %v2809 = vunpack.c.h.b16 %v2683
    %v2810 = vunpack.c.l.b16 %v2684
    %v2811 = vunpack.c.h.b16 %v2684
    %v2812 = vunpack.c.l.b16 %v2685
    %v2813 = vunpack.c.h.b16 %v2685
    %v2814 = vpack.c.b16 %v2752, %v2750
    %v2815 = vpack.c.b16 %v2753, %v2751
    %v2816 = vpack.c.b16 %v2756, %v2754
    %v2817 = vpack.c.b16 %v2757, %v2755
    %v2818 = vpack.c.b16 %v2760, %v2758
    %v2819 = vpack.c.b16 %v2761, %v2759
    %v2820 = vpack.c.b16 %v2764, %v2762
    %v2821 = vpack.c.b16 %v2765, %v2763
    %v2822 = vpack.c.b16 %v2768, %v2766
    %v2823 = vpack.c.b16 %v2769, %v2767
    %v2824 = vpack.c.b16 %v2772, %v2770
    %v2825 = vpack.c.b16 %v2773, %v2771
    %v2826 = vpack.c.b16 %v2776, %v2774
    %v2827 = vpack.c.b16 %v2777, %v2775
    %v2828 = vpack.c.b16 %v2780, %v2778
    %v2829 = vpack.c.b16 %v2781, %v2779
    %v2830 = vpack.c.b16 %v2784, %v2782
    %v2831 = vpack.c.b16 %v2785, %v2783
    %v2832 = vpack.c.b16 %v2788, %v2786
    %v2833 = vpack.c.b16 %v2789, %v2787
    %v2834 = vpack.c.b16 %v2792, %v2790
    %v2835 = vpack.c.b16 %v2793, %v2791
    %v2836 = vpack.c.b16 %v2796, %v2794
    %v2837 = vpack.c.b16 %v2797, %v2795
    %v2838 = vpack.c.b16 %v2800, %v2798
    %v2839 = vpack.c.b16 %v2801, %v2799
    %v2840 = vpack.c.b16 %v2804, %v2802
    %v2841 = vpack.c.b16 %v2805, %v2803
    %v2842 = vpack.c.b16 %v2808, %v2806
    %v2843 = vpack.c.b16 %v2809, %v2807
    %v2844 = vpack.c.b16 %v2812, %v2810
    %v2845 = vpack.c.b16 %v2813, %v2811
    %2878 = vmatprep.subr.bf16.mxu0 %v2829
    %2879 = vmatpush1.bf16.msra.mxu0 %v2828
    %2880 = vmatprep.subr.bf16.mxu0 %v2827
    %2881 = vmatpush1.bf16.msra.mxu0 %v2826
    %2882 = vmatprep.subr.bf16.mxu0 %v2825
    %2883 = vmatpush1.bf16.msra.mxu0 %v2824
    %2884 = vmatprep.subr.bf16.mxu0 %v2823
    %2885 = vmatpush1.bf16.msra.mxu0 %v2822
    %2886 = vmatprep.subr.bf16.mxu0 %v2821
    %2887 = vmatpush1.bf16.msra.mxu0 %v2820
    %2888 = vmatprep.subr.bf16.mxu0 %v2819
    %2889 = vmatpush1.bf16.msra.mxu0 %v2818
    %2890 = vmatprep.subr.bf16.mxu0 %v2817
    %2891 = vmatpush1.bf16.msra.mxu0 %v2816
    %2892 = vmatprep.subr.bf16.mxu0 %v2815
    %2893 = vmatpush1.bf16.msra.mxu0 %v2814
    %2894 = vmatprep.subr.bf16.mxu0 %v2845
    %2895 = vmatpush2.bf16.msra.mxu0 %v2844
    %2896 = vmatprep.subr.bf16.mxu0 %v2843
    %2897 = vmatpush2.bf16.msra.mxu0 %v2842
    %2898 = vmatprep.subr.bf16.mxu0 %v2841
    %2899 = vmatpush2.bf16.msra.mxu0 %v2840
    %2900 = vmatprep.subr.bf16.mxu0 %v2839
    %2901 = vmatpush2.bf16.msra.mxu0 %v2838
    %2902 = vmatprep.subr.bf16.mxu0 %v2837
    %2903 = vmatpush2.bf16.msra.mxu0 %v2836
    %2904 = vmatprep.subr.bf16.mxu0 %v2835
    %2905 = vmatpush2.bf16.msra.mxu0 %v2834
    %2906 = vmatprep.subr.bf16.mxu0 %v2833
    %2907 = vmatpush2.bf16.msra.mxu0 %v2832
    %2908 = vmatprep.subr.bf16.mxu0 %v2831
    %2909 = vmatpush2.bf16.msra.mxu0 %v2830
    %2910 = vmatprep.mubr.bf16.mxu0 %v2687
    %2911 = vmatmul.mubr.bf16.gmra.mxu0 %v2686
    %v2912 = vpop.f32.mrf.mxu0
    %v2913 = vadd.f32 0.0, %v2912
    %v2914 = vpop.f32.mrf.mxu0
    %v2915 = vadd.f32 0.0, %v2914
    %v2916 = vpop.f32.mrf.mxu0
    %v2917 = vadd.f32 0.0, %v2916
    %v2918 = vpop.f32.mrf.mxu0
    %v2919 = vadd.f32 0.0, %v2918
    %2920 = vmatprep.mubr.bf16.mxu0 %v2689
    %2921 = vmatmul.mubr.bf16.gmra.mxu0 %v2688
    %v2922 = vpop.f32.mrf.mxu0
    %v2923 = vadd.f32 0.0, %v2922
    %v2924 = vpop.f32.mrf.mxu0
    %v2925 = vadd.f32 0.0, %v2924
    %v2926 = vpop.f32.mrf.mxu0
    %v2927 = vadd.f32 0.0, %v2926
    %v2928 = vpop.f32.mrf.mxu0
    %v2929 = vadd.f32 0.0, %v2928
    %2930 = vmatprep.mubr.bf16.mxu0 %v2691
    %2931 = vmatmul.mubr.bf16.gmra.mxu0 %v2690
    %v2932 = vpop.f32.mrf.mxu0
    %v2933 = vadd.f32 0.0, %v2932
    %v2934 = vpop.f32.mrf.mxu0
    %v2935 = vadd.f32 0.0, %v2934
    %v2936 = vpop.f32.mrf.mxu0
    %v2937 = vadd.f32 0.0, %v2936
    %v2938 = vpop.f32.mrf.mxu0
    %v2939 = vadd.f32 0.0, %v2938
    %2940 = vmatprep.mubr.bf16.mxu0 %v2693
    %2941 = vmatmul.mubr.bf16.gmra.mxu0 %v2692
    %v2942 = vpop.f32.mrf.mxu0
    %v2943 = vadd.f32 0.0, %v2942
    %v2944 = vpop.f32.mrf.mxu0
    %v2945 = vadd.f32 0.0, %v2944
    %v2946 = vpop.f32.mrf.mxu0
    %v2947 = vadd.f32 0.0, %v2946
    %v2948 = vpop.f32.mrf.mxu0
    %v2949 = vadd.f32 0.0, %v2948
    %2950 = vmatprep.mubr.bf16.mxu0 %v2695
    %2951 = vmatmul.mubr.bf16.gmra.mxu0 %v2694
    %v2952 = vpop.f32.mrf.mxu0
    %v2953 = vadd.f32 0.0, %v2952
    %v2954 = vpop.f32.mrf.mxu0
    %v2955 = vadd.f32 0.0, %v2954
    %v2956 = vpop.f32.mrf.mxu0
    %v2957 = vadd.f32 0.0, %v2956
    %v2958 = vpop.f32.mrf.mxu0
    %v2959 = vadd.f32 0.0, %v2958
    %2960 = vmatprep.mubr.bf16.mxu0 %v2697
    %2961 = vmatmul.mubr.bf16.gmra.mxu0 %v2696
    %v2962 = vpop.f32.mrf.mxu0
    %v2963 = vadd.f32 0.0, %v2962
    %v2964 = vpop.f32.mrf.mxu0
    %v2965 = vadd.f32 0.0, %v2964
    %v2966 = vpop.f32.mrf.mxu0
    %v2967 = vadd.f32 0.0, %v2966
    %v2968 = vpop.f32.mrf.mxu0
    %v2969 = vadd.f32 0.0, %v2968
    %2970 = vmatprep.mubr.bf16.mxu0 %v2699
    %2971 = vmatmul.mubr.bf16.gmra.mxu0 %v2698
    %v2972 = vpop.f32.mrf.mxu0
    %v2973 = vadd.f32 0.0, %v2972
    %v2974 = vpop.f32.mrf.mxu0
    %v2975 = vadd.f32 0.0, %v2974
    %v2976 = vpop.f32.mrf.mxu0
    %v2977 = vadd.f32 0.0, %v2976
    %v2978 = vpop.f32.mrf.mxu0
    %v2979 = vadd.f32 0.0, %v2978
    %2980 = vmatprep.mubr.bf16.mxu0 %v2701
    %2981 = vmatmul.mubr.bf16.gmra.mxu0 %v2700
    %v2982 = vpop.f32.mrf.mxu0
    %v2983 = vadd.f32 0.0, %v2982
    %v2984 = vpop.f32.mrf.mxu0
    %v2985 = vadd.f32 0.0, %v2984
    %v2986 = vpop.f32.mrf.mxu0
    %v2987 = vadd.f32 0.0, %v2986
    %v2988 = vpop.f32.mrf.mxu0
    %v2989 = vadd.f32 0.0, %v2988
    %2990 = vmatprep.mubr.bf16.mxu0 %v2703
    %2991 = vmatmul.mubr.bf16.gmra.mxu0 %v2702
    %v2992 = vpop.f32.mrf.mxu0
    %v2993 = vadd.f32 0.0, %v2992
    %v2994 = vpop.f32.mrf.mxu0
    %v2995 = vadd.f32 0.0, %v2994
    %v2996 = vpop.f32.mrf.mxu0
    %v2997 = vadd.f32 0.0, %v2996
    %v2998 = vpop.f32.mrf.mxu0
    %v2999 = vadd.f32 0.0, %v2998
    %3000 = vmatprep.mubr.bf16.mxu0 %v2705
    %3001 = vmatmul.mubr.bf16.gmra.mxu0 %v2704
    %v3002 = vpop.f32.mrf.mxu0
    %v3003 = vadd.f32 0.0, %v3002
    %v3004 = vpop.f32.mrf.mxu0
    %v3005 = vadd.f32 0.0, %v3004
    %v3006 = vpop.f32.mrf.mxu0
    %v3007 = vadd.f32 0.0, %v3006
    %v3008 = vpop.f32.mrf.mxu0
    %v3009 = vadd.f32 0.0, %v3008
    %3010 = vmatprep.mubr.bf16.mxu0 %v2707
    %3011 = vmatmul.mubr.bf16.gmra.mxu0 %v2706
    %v3012 = vpop.f32.mrf.mxu0
    %v3013 = vadd.f32 0.0, %v3012
    %v3014 = vpop.f32.mrf.mxu0
    %v3015 = vadd.f32 0.0, %v3014
    %v3016 = vpop.f32.mrf.mxu0
    %v3017 = vadd.f32 0.0, %v3016
    %v3018 = vpop.f32.mrf.mxu0
    %v3019 = vadd.f32 0.0, %v3018
    %3020 = vmatprep.mubr.bf16.mxu0 %v2709
    %3021 = vmatmul.mubr.bf16.gmra.mxu0 %v2708
    %v3022 = vpop.f32.mrf.mxu0
    %v3023 = vadd.f32 0.0, %v3022
    %v3024 = vpop.f32.mrf.mxu0
    %v3025 = vadd.f32 0.0, %v3024
    %v3026 = vpop.f32.mrf.mxu0
    %v3027 = vadd.f32 0.0, %v3026
    %v3028 = vpop.f32.mrf.mxu0
    %v3029 = vadd.f32 0.0, %v3028
    %3030 = vmatprep.mubr.bf16.mxu0 %v2711
    %3031 = vmatmul.mubr.bf16.gmra.mxu0 %v2710
    %v3032 = vpop.f32.mrf.mxu0
    %v3033 = vadd.f32 0.0, %v3032
    %v3034 = vpop.f32.mrf.mxu0
    %v3035 = vadd.f32 0.0, %v3034
    %v3036 = vpop.f32.mrf.mxu0
    %v3037 = vadd.f32 0.0, %v3036
    %v3038 = vpop.f32.mrf.mxu0
    %v3039 = vadd.f32 0.0, %v3038
    %3040 = vmatprep.mubr.bf16.mxu0 %v2713
    %3041 = vmatmul.mubr.bf16.gmra.mxu0 %v2712
    %v3042 = vpop.f32.mrf.mxu0
    %v3043 = vadd.f32 0.0, %v3042
    %v3044 = vpop.f32.mrf.mxu0
    %v3045 = vadd.f32 0.0, %v3044
    %v3046 = vpop.f32.mrf.mxu0
    %v3047 = vadd.f32 0.0, %v3046
    %v3048 = vpop.f32.mrf.mxu0
    %v3049 = vadd.f32 0.0, %v3048
    %3050 = vmatprep.mubr.bf16.mxu0 %v2715
    %3051 = vmatmul.mubr.bf16.gmra.mxu0 %v2714
    %v3052 = vpop.f32.mrf.mxu0
    %v3053 = vadd.f32 0.0, %v3052
    %v3054 = vpop.f32.mrf.mxu0
    %v3055 = vadd.f32 0.0, %v3054
    %v3056 = vpop.f32.mrf.mxu0
    %v3057 = vadd.f32 0.0, %v3056
    %v3058 = vpop.f32.mrf.mxu0
    %v3059 = vadd.f32 0.0, %v3058
    %3060 = vmatprep.mubr.bf16.mxu0 %v2717
    %3061 = vmatmul.mubr.bf16.gmra.mxu0 %v2716
    %v3062 = vpop.f32.mrf.mxu0
    %v3063 = vadd.f32 0.0, %v3062
    %v3064 = vpop.f32.mrf.mxu0
    %v3065 = vadd.f32 0.0, %v3064
    %v3066 = vpop.f32.mrf.mxu0
    %v3067 = vadd.f32 0.0, %v3066
    %v3068 = vpop.f32.mrf.mxu0
    %v3069 = vadd.f32 0.0, %v3068
    %3070 = vdwg.mxu0
    %v3071 = vadd.f32 %v2913, %v2917
    %v3072 = vadd.f32 %v3071, %v2923
    %v3073 = vadd.f32 %v3072, %v2927
    %v3074 = vadd.f32 %v3073, %v2933
    %v3075 = vadd.f32 %v3074, %v2937
    %v3076 = vadd.f32 %v3075, %v2943
    %v3077 = vadd.f32 %v3076, %v2947
    %v3078 = vadd.f32 %v3077, %v2953
    %v3079 = vadd.f32 %v3078, %v2957
    %v3080 = vadd.f32 %v3079, %v2963
    %v3081 = vadd.f32 %v3080, %v2967
    %v3082 = vadd.f32 %v3081, %v2973
    %v3083 = vadd.f32 %v3082, %v2977
    %v3084 = vadd.f32 %v3083, %v2983
    %v3085 = vadd.f32 %v3084, %v2987
    %v3086 = vadd.f32 %v3085, %v2993
    %v3087 = vadd.f32 %v3086, %v2997
    %v3088 = vadd.f32 %v3087, %v3003
    %v3089 = vadd.f32 %v3088, %v3007
    %v3090 = vadd.f32 %v3089, %v3013
    %v3091 = vadd.f32 %v3090, %v3017
    %v3092 = vadd.f32 %v3091, %v3023
    %v3093 = vadd.f32 %v3092, %v3027
    %v3094 = vadd.f32 %v3093, %v3033
    %v3095 = vadd.f32 %v3094, %v3037
    %v3096 = vadd.f32 %v3095, %v3043
    %v3097 = vadd.f32 %v3096, %v3047
    %v3098 = vadd.f32 %v3097, %v3053
    %v3099 = vadd.f32 %v3098, %v3057
    %v3100 = vadd.f32 %v3099, %v3063
    %v3101 = vadd.f32 %v3100, %v3067
    %v3102 = vrot.slane %v3101, 4
    %v3103 = vadd.f32 %v3101, %v3102
    %v3104 = vrot.slane %v3103, 2
    %v3105 = vadd.f32 %v3103, %v3104
    %v3106 = vrot.slane %v3105, 1
    %v3107 = vadd.f32 %v3105, %v3106
    %v3108 = vadd.f32 %v2915, %v2919
    %v3109 = vadd.f32 %v3108, %v2925
    %v3110 = vadd.f32 %v3109, %v2929
    %v3111 = vadd.f32 %v3110, %v2935
    %v3112 = vadd.f32 %v3111, %v2939
    %v3113 = vadd.f32 %v3112, %v2945
    %v3114 = vadd.f32 %v3113, %v2949
    %v3115 = vadd.f32 %v3114, %v2955
    %v3116 = vadd.f32 %v3115, %v2959
    %v3117 = vadd.f32 %v3116, %v2965
    %v3118 = vadd.f32 %v3117, %v2969
    %v3119 = vadd.f32 %v3118, %v2975
    %v3120 = vadd.f32 %v3119, %v2979
    %v3121 = vadd.f32 %v3120, %v2985
    %v3122 = vadd.f32 %v3121, %v2989
    %v3123 = vadd.f32 %v3122, %v2995
    %v3124 = vadd.f32 %v3123, %v2999
    %v3125 = vadd.f32 %v3124, %v3005
    %v3126 = vadd.f32 %v3125, %v3009
    %v3127 = vadd.f32 %v3126, %v3015
    %v3128 = vadd.f32 %v3127, %v3019
    %v3129 = vadd.f32 %v3128, %v3025
    %v3130 = vadd.f32 %v3129, %v3029
    %v3131 = vadd.f32 %v3130, %v3035
    %v3132 = vadd.f32 %v3131, %v3039
    %v3133 = vadd.f32 %v3132, %v3045
    %v3134 = vadd.f32 %v3133, %v3049
    %v3135 = vadd.f32 %v3134, %v3055
    %v3136 = vadd.f32 %v3135, %v3059
    %v3137 = vadd.f32 %v3136, %v3065
    %v3138 = vadd.f32 %v3137, %v3069
    %v3139 = vrot.slane %v3138, 4
    %v3140 = vadd.f32 %v3138, %v3139
    %v3141 = vrot.slane %v3140, 2
    %v3142 = vadd.f32 %v3140, %v3141
    %v3143 = vrot.slane %v3142, 1
    %v3144 = vadd.f32 %v3142, %v3143
    %v3145 = vmul.f32 %v3107, 0.00390625
    %v3146 = vmul.f32 %v3144, 0.00390625
    %v3147 = vmul.f32 %v2913, %v2913
    %v3148 = vmul.f32 %v2915, %v2915
    %v3149 = vmul.f32 %v2917, %v2917
    %v3150 = vmul.f32 %v2919, %v2919
    %v3151 = vmul.f32 %v2923, %v2923
    %v3152 = vmul.f32 %v2925, %v2925
    %v3153 = vmul.f32 %v2927, %v2927
    %v3154 = vmul.f32 %v2929, %v2929
    %v3155 = vmul.f32 %v2933, %v2933
    %v3156 = vmul.f32 %v2935, %v2935
    %v3157 = vmul.f32 %v2937, %v2937
    %v3158 = vmul.f32 %v2939, %v2939
    %v3159 = vmul.f32 %v2943, %v2943
    %v3160 = vmul.f32 %v2945, %v2945
    %v3161 = vmul.f32 %v2947, %v2947
    %v3162 = vmul.f32 %v2949, %v2949
    %v3163 = vmul.f32 %v2953, %v2953
    %v3164 = vmul.f32 %v2955, %v2955
    %v3165 = vmul.f32 %v2957, %v2957
    %v3166 = vmul.f32 %v2959, %v2959
    %v3167 = vmul.f32 %v2963, %v2963
    %v3168 = vmul.f32 %v2965, %v2965
    %v3169 = vmul.f32 %v2967, %v2967
    %v3170 = vmul.f32 %v2969, %v2969
    %v3171 = vmul.f32 %v2973, %v2973
    %v3172 = vmul.f32 %v2975, %v2975
    %v3173 = vmul.f32 %v2977, %v2977
    %v3174 = vmul.f32 %v2979, %v2979
    %v3175 = vmul.f32 %v2983, %v2983
    %v3176 = vmul.f32 %v2985, %v2985
    %v3177 = vmul.f32 %v2987, %v2987
    %v3178 = vmul.f32 %v2989, %v2989
    %v3179 = vmul.f32 %v2993, %v2993
    %v3180 = vmul.f32 %v2995, %v2995
    %v3181 = vmul.f32 %v2997, %v2997
    %v3182 = vmul.f32 %v2999, %v2999
    %v3183 = vmul.f32 %v3003, %v3003
    %v3184 = vmul.f32 %v3005, %v3005
    %v3185 = vmul.f32 %v3007, %v3007
    %v3186 = vmul.f32 %v3009, %v3009
    %v3187 = vmul.f32 %v3013, %v3013
    %v3188 = vmul.f32 %v3015, %v3015
    %v3189 = vmul.f32 %v3017, %v3017
    %v3190 = vmul.f32 %v3019, %v3019
    %v3191 = vmul.f32 %v3023, %v3023
    %v3192 = vmul.f32 %v3025, %v3025
    %v3193 = vmul.f32 %v3027, %v3027
    %v3194 = vmul.f32 %v3029, %v3029
    %v3195 = vmul.f32 %v3033, %v3033
    %v3196 = vmul.f32 %v3035, %v3035
    %v3197 = vmul.f32 %v3037, %v3037
    %v3198 = vmul.f32 %v3039, %v3039
    %v3199 = vmul.f32 %v3043, %v3043
    %v3200 = vmul.f32 %v3045, %v3045
    %v3201 = vmul.f32 %v3047, %v3047
    %v3202 = vmul.f32 %v3049, %v3049
    %v3203 = vmul.f32 %v3053, %v3053
    %v3204 = vmul.f32 %v3055, %v3055
    %v3205 = vmul.f32 %v3057, %v3057
    %v3206 = vmul.f32 %v3059, %v3059
    %v3207 = vmul.f32 %v3063, %v3063
    %v3208 = vmul.f32 %v3065, %v3065
    %v3209 = vmul.f32 %v3067, %v3067
    %v3210 = vmul.f32 %v3069, %v3069
    %v3211 = vadd.f32 %v3147, %v3149
    %v3212 = vadd.f32 %v3211, %v3151
    %v3213 = vadd.f32 %v3212, %v3153
    %v3214 = vadd.f32 %v3213, %v3155
    %v3215 = vadd.f32 %v3214, %v3157
    %v3216 = vadd.f32 %v3215, %v3159
    %v3217 = vadd.f32 %v3216, %v3161
    %v3218 = vadd.f32 %v3217, %v3163
    %v3219 = vadd.f32 %v3218, %v3165
    %v3220 = vadd.f32 %v3219, %v3167
    %v3221 = vadd.f32 %v3220, %v3169
    %v3222 = vadd.f32 %v3221, %v3171
    %v3223 = vadd.f32 %v3222, %v3173
    %v3224 = vadd.f32 %v3223, %v3175
    %v3225 = vadd.f32 %v3224, %v3177
    %v3226 = vadd.f32 %v3225, %v3179
    %v3227 = vadd.f32 %v3226, %v3181
    %v3228 = vadd.f32 %v3227, %v3183
    %v3229 = vadd.f32 %v3228, %v3185
    %v3230 = vadd.f32 %v3229, %v3187
    %v3231 = vadd.f32 %v3230, %v3189
    %v3232 = vadd.f32 %v3231, %v3191
    %v3233 = vadd.f32 %v3232, %v3193
    %v3234 = vadd.f32 %v3233, %v3195
    %v3235 = vadd.f32 %v3234, %v3197
    %v3236 = vadd.f32 %v3235, %v3199
    %v3237 = vadd.f32 %v3236, %v3201
    %v3238 = vadd.f32 %v3237, %v3203
    %v3239 = vadd.f32 %v3238, %v3205
    %v3240 = vadd.f32 %v3239, %v3207
    %v3241 = vadd.f32 %v3240, %v3209
    %v3242 = vrot.slane %v3241, 4
    %v3243 = vadd.f32 %v3241, %v3242
    %v3244 = vrot.slane %v3243, 2
    %v3245 = vadd.f32 %v3243, %v3244
    %v3246 = vrot.slane %v3245, 1
    %v3247 = vadd.f32 %v3245, %v3246
    %v3248 = vadd.f32 %v3148, %v3150
    %v3249 = vadd.f32 %v3248, %v3152
    %v3250 = vadd.f32 %v3249, %v3154
    %v3251 = vadd.f32 %v3250, %v3156
    %v3252 = vadd.f32 %v3251, %v3158
    %v3253 = vadd.f32 %v3252, %v3160
    %v3254 = vadd.f32 %v3253, %v3162
    %v3255 = vadd.f32 %v3254, %v3164
    %v3256 = vadd.f32 %v3255, %v3166
    %v3257 = vadd.f32 %v3256, %v3168
    %v3258 = vadd.f32 %v3257, %v3170
    %v3259 = vadd.f32 %v3258, %v3172
    %v3260 = vadd.f32 %v3259, %v3174
    %v3261 = vadd.f32 %v3260, %v3176
    %v3262 = vadd.f32 %v3261, %v3178
    %v3263 = vadd.f32 %v3262, %v3180
    %v3264 = vadd.f32 %v3263, %v3182
    %v3265 = vadd.f32 %v3264, %v3184
    %v3266 = vadd.f32 %v3265, %v3186
    %v3267 = vadd.f32 %v3266, %v3188
    %v3268 = vadd.f32 %v3267, %v3190
    %v3269 = vadd.f32 %v3268, %v3192
    %v3270 = vadd.f32 %v3269, %v3194
    %v3271 = vadd.f32 %v3270, %v3196
    %v3272 = vadd.f32 %v3271, %v3198
    %v3273 = vadd.f32 %v3272, %v3200
    %v3274 = vadd.f32 %v3273, %v3202
    %v3275 = vadd.f32 %v3274, %v3204
    %v3276 = vadd.f32 %v3275, %v3206
    %v3277 = vadd.f32 %v3276, %v3208
    %v3278 = vadd.f32 %v3277, %v3210
    %v3279 = vrot.slane %v3278, 4
    %v3280 = vadd.f32 %v3278, %v3279
    %v3281 = vrot.slane %v3280, 2
    %v3282 = vadd.f32 %v3280, %v3281
    %v3283 = vrot.slane %v3282, 1
    %v3284 = vadd.f32 %v3282, %v3283
    %v3285 = vmul.f32 %v3247, 0.00390625
    %v3286 = vmul.f32 %v3284, 0.00390625
    %v3287 = vmul.f32 %v3145, %v3145
    %v3288 = vmul.f32 %v3146, %v3146
    %v3289 = vsub.f32 %v3285, %v3287
    %v3290 = vsub.f32 %v3286, %v3288
    %v3291 = vmax.f32 %v3289, 0.0
    %v3292 = vmax.f32 %v3290, 0.0
    %v3293 = vadd.f32 %v3291, 1e-05
    %v3294 = vadd.f32 %v3292, 1e-05
    %v3295 = vrsqrt.pop %v3293
    %v3296 = vrsqrt.pop %v3294
    %v3297 = vmul.f32 %v119, %v3295
    %v3298 = vmul.f32 %v120, %v3296
    %v3299 = vmul.f32 %v3145, %v3297
    %v3300 = vmul.f32 %v3146, %v3298
    %v3303 = vrot.slane %v3299, 7
    %v3304 = vrot.slane %v3300, 7
    %v3307 = vsub.f32 %v121, %v3303
    %v3308 = vsub.f32 %v122, %v3304
    %v3309 = vlaneseq
    %v3310 = vshrl.u32 %v3309, 7
    %v3311 = vsub.s32 7, %v3310
    %v3312 = vrot.slane %v3297, %v3311
    %v3313 = vlaneseq
    %v3314 = vshrl.u32 %v3313, 7
    %v3315 = vsub.s32 7, %v3314
    %v3316 = vrot.slane %v3298, %v3315
    %v3317 = vmul.f32 %v2913, %v3312
    %v3318 = vmul.f32 %v2915, %v3316
    %v3319 = vmul.f32 %v2917, %v3312
    %v3320 = vmul.f32 %v2919, %v3316
    %v3321 = vmul.f32 %v2923, %v3312
    %v3322 = vmul.f32 %v2925, %v3316
    %v3323 = vmul.f32 %v2927, %v3312
    %v3324 = vmul.f32 %v2929, %v3316
    %v3325 = vmul.f32 %v2933, %v3312
    %v3326 = vmul.f32 %v2935, %v3316
    %v3327 = vmul.f32 %v2937, %v3312
    %v3328 = vmul.f32 %v2939, %v3316
    %v3329 = vmul.f32 %v2943, %v3312
    %v3330 = vmul.f32 %v2945, %v3316
    %v3331 = vmul.f32 %v2947, %v3312
    %v3332 = vmul.f32 %v2949, %v3316
    %v3333 = vmul.f32 %v2953, %v3312
    %v3334 = vmul.f32 %v2955, %v3316
    %v3335 = vmul.f32 %v2957, %v3312
    %v3336 = vmul.f32 %v2959, %v3316
    %v3337 = vmul.f32 %v2963, %v3312
    %v3338 = vmul.f32 %v2965, %v3316
    %v3339 = vmul.f32 %v2967, %v3312
    %v3340 = vmul.f32 %v2969, %v3316
    %v3341 = vmul.f32 %v2973, %v3312
    %v3342 = vmul.f32 %v2975, %v3316
    %v3343 = vmul.f32 %v2977, %v3312
    %v3344 = vmul.f32 %v2979, %v3316
    %v3345 = vmul.f32 %v2983, %v3312
    %v3346 = vmul.f32 %v2985, %v3316
    %v3347 = vmul.f32 %v2987, %v3312
    %v3348 = vmul.f32 %v2989, %v3316
    %v3349 = vmul.f32 %v2993, %v3312
    %v3350 = vmul.f32 %v2995, %v3316
    %v3351 = vmul.f32 %v2997, %v3312
    %v3352 = vmul.f32 %v2999, %v3316
    %v3353 = vmul.f32 %v3003, %v3312
    %v3354 = vmul.f32 %v3005, %v3316
    %v3355 = vmul.f32 %v3007, %v3312
    %v3356 = vmul.f32 %v3009, %v3316
    %v3357 = vmul.f32 %v3013, %v3312
    %v3358 = vmul.f32 %v3015, %v3316
    %v3359 = vmul.f32 %v3017, %v3312
    %v3360 = vmul.f32 %v3019, %v3316
    %v3361 = vmul.f32 %v3023, %v3312
    %v3362 = vmul.f32 %v3025, %v3316
    %v3363 = vmul.f32 %v3027, %v3312
    %v3364 = vmul.f32 %v3029, %v3316
    %v3365 = vmul.f32 %v3033, %v3312
    %v3366 = vmul.f32 %v3035, %v3316
    %v3367 = vmul.f32 %v3037, %v3312
    %v3368 = vmul.f32 %v3039, %v3316
    %v3369 = vmul.f32 %v3043, %v3312
    %v3370 = vmul.f32 %v3045, %v3316
    %v3371 = vmul.f32 %v3047, %v3312
    %v3372 = vmul.f32 %v3049, %v3316
    %v3373 = vmul.f32 %v3053, %v3312
    %v3374 = vmul.f32 %v3055, %v3316
    %v3375 = vmul.f32 %v3057, %v3312
    %v3376 = vmul.f32 %v3059, %v3316
    %v3377 = vmul.f32 %v3063, %v3312
    %v3378 = vmul.f32 %v3065, %v3316
    %v3379 = vmul.f32 %v3067, %v3312
    %v3380 = vmul.f32 %v3069, %v3316
    %v3381 = vlaneseq
    %v3382 = vshrl.u32 %v3381, 7
    %v3383 = vsub.s32 0, %v3382
    %v3384 = vrot.slane %v3307, %v3383
    %v3385 = vlaneseq
    %v3386 = vshrl.u32 %v3385, 7
    %v3387 = vsub.s32 0, %v3386
    %v3388 = vrot.slane %v3308, %v3387
    %v3389 = vadd.f32 %v3317, %v3384
    %v3390 = vadd.f32 %v3318, %v3388
    %v3391 = vadd.f32 %v3319, %v3384
    %v3392 = vadd.f32 %v3320, %v3388
    %v3393 = vadd.f32 %v3321, %v3384
    %v3394 = vadd.f32 %v3322, %v3388
    %v3395 = vadd.f32 %v3323, %v3384
    %v3396 = vadd.f32 %v3324, %v3388
    %v3397 = vadd.f32 %v3325, %v3384
    %v3398 = vadd.f32 %v3326, %v3388
    %v3399 = vadd.f32 %v3327, %v3384
    %v3400 = vadd.f32 %v3328, %v3388
    %v3401 = vadd.f32 %v3329, %v3384
    %v3402 = vadd.f32 %v3330, %v3388
    %v3403 = vadd.f32 %v3331, %v3384
    %v3404 = vadd.f32 %v3332, %v3388
    %v3405 = vadd.f32 %v3333, %v3384
    %v3406 = vadd.f32 %v3334, %v3388
    %v3407 = vadd.f32 %v3335, %v3384
    %v3408 = vadd.f32 %v3336, %v3388
    %v3409 = vadd.f32 %v3337, %v3384
    %v3410 = vadd.f32 %v3338, %v3388
    %v3411 = vadd.f32 %v3339, %v3384
    %v3412 = vadd.f32 %v3340, %v3388
    %v3413 = vadd.f32 %v3341, %v3384
    %v3414 = vadd.f32 %v3342, %v3388
    %v3415 = vadd.f32 %v3343, %v3384
    %v3416 = vadd.f32 %v3344, %v3388
    %v3417 = vadd.f32 %v3345, %v3384
    %v3418 = vadd.f32 %v3346, %v3388
    %v3419 = vadd.f32 %v3347, %v3384
    %v3420 = vadd.f32 %v3348, %v3388
    %v3421 = vadd.f32 %v3349, %v3384
    %v3422 = vadd.f32 %v3350, %v3388
    %v3423 = vadd.f32 %v3351, %v3384
    %v3424 = vadd.f32 %v3352, %v3388
    %v3425 = vadd.f32 %v3353, %v3384
    %v3426 = vadd.f32 %v3354, %v3388
    %v3427 = vadd.f32 %v3355, %v3384
    %v3428 = vadd.f32 %v3356, %v3388
    %v3429 = vadd.f32 %v3357, %v3384
    %v3430 = vadd.f32 %v3358, %v3388
    %v3431 = vadd.f32 %v3359, %v3384
    %v3432 = vadd.f32 %v3360, %v3388
    %v3433 = vadd.f32 %v3361, %v3384
    %v3434 = vadd.f32 %v3362, %v3388
    %v3435 = vadd.f32 %v3363, %v3384
    %v3436 = vadd.f32 %v3364, %v3388
    %v3437 = vadd.f32 %v3365, %v3384
    %v3438 = vadd.f32 %v3366, %v3388
    %v3439 = vadd.f32 %v3367, %v3384
    %v3440 = vadd.f32 %v3368, %v3388
    %v3441 = vadd.f32 %v3369, %v3384
    %v3442 = vadd.f32 %v3370, %v3388
    %v3443 = vadd.f32 %v3371, %v3384
    %v3444 = vadd.f32 %v3372, %v3388
    %v3445 = vadd.f32 %v3373, %v3384
    %v3446 = vadd.f32 %v3374, %v3388
    %v3447 = vadd.f32 %v3375, %v3384
    %v3448 = vadd.f32 %v3376, %v3388
    %v3449 = vadd.f32 %v3377, %v3384
    %v3450 = vadd.f32 %v3378, %v3388
    %v3451 = vadd.f32 %v3379, %v3384
    %v3452 = vadd.f32 %v3380, %v3388
    %v3453 = vmax.f32 %v3389, 0.0
    %v3454 = vmax.f32 %v3390, 0.0
    %v3455 = vmax.f32 %v3391, 0.0
    %v3456 = vmax.f32 %v3392, 0.0
    %v3457 = vmax.f32 %v3393, 0.0
    %v3458 = vmax.f32 %v3394, 0.0
    %v3459 = vmax.f32 %v3395, 0.0
    %v3460 = vmax.f32 %v3396, 0.0
    %v3461 = vmax.f32 %v3397, 0.0
    %v3462 = vmax.f32 %v3398, 0.0
    %v3463 = vmax.f32 %v3399, 0.0
    %v3464 = vmax.f32 %v3400, 0.0
    %v3465 = vmax.f32 %v3401, 0.0
    %v3466 = vmax.f32 %v3402, 0.0
    %v3467 = vmax.f32 %v3403, 0.0
    %v3468 = vmax.f32 %v3404, 0.0
    %v3469 = vmax.f32 %v3405, 0.0
    %v3470 = vmax.f32 %v3406, 0.0
    %v3471 = vmax.f32 %v3407, 0.0
    %v3472 = vmax.f32 %v3408, 0.0
    %v3473 = vmax.f32 %v3409, 0.0
    %v3474 = vmax.f32 %v3410, 0.0
    %v3475 = vmax.f32 %v3411, 0.0
    %v3476 = vmax.f32 %v3412, 0.0
    %v3477 = vmax.f32 %v3413, 0.0
    %v3478 = vmax.f32 %v3414, 0.0
    %v3479 = vmax.f32 %v3415, 0.0
    %v3480 = vmax.f32 %v3416, 0.0
    %v3481 = vmax.f32 %v3417, 0.0
    %v3482 = vmax.f32 %v3418, 0.0
    %v3483 = vmax.f32 %v3419, 0.0
    %v3484 = vmax.f32 %v3420, 0.0
    %v3485 = vmax.f32 %v3421, 0.0
    %v3486 = vmax.f32 %v3422, 0.0
    %v3487 = vmax.f32 %v3423, 0.0
    %v3488 = vmax.f32 %v3424, 0.0
    %v3489 = vmax.f32 %v3425, 0.0
    %v3490 = vmax.f32 %v3426, 0.0
    %v3491 = vmax.f32 %v3427, 0.0
    %v3492 = vmax.f32 %v3428, 0.0
    %v3493 = vmax.f32 %v3429, 0.0
    %v3494 = vmax.f32 %v3430, 0.0
    %v3495 = vmax.f32 %v3431, 0.0
    %v3496 = vmax.f32 %v3432, 0.0
    %v3497 = vmax.f32 %v3433, 0.0
    %v3498 = vmax.f32 %v3434, 0.0
    %v3499 = vmax.f32 %v3435, 0.0
    %v3500 = vmax.f32 %v3436, 0.0
    %v3501 = vmax.f32 %v3437, 0.0
    %v3502 = vmax.f32 %v3438, 0.0
    %v3503 = vmax.f32 %v3439, 0.0
    %v3504 = vmax.f32 %v3440, 0.0
    %v3505 = vmax.f32 %v3441, 0.0
    %v3506 = vmax.f32 %v3442, 0.0
    %v3507 = vmax.f32 %v3443, 0.0
    %v3508 = vmax.f32 %v3444, 0.0
    %v3509 = vmax.f32 %v3445, 0.0
    %v3510 = vmax.f32 %v3446, 0.0
    %v3511 = vmax.f32 %v3447, 0.0
    %v3512 = vmax.f32 %v3448, 0.0
    %v3513 = vmax.f32 %v3449, 0.0
    %v3514 = vmax.f32 %v3450, 0.0
    %v3515 = vmax.f32 %v3451, 0.0
    %v3516 = vmax.f32 %v3452, 0.0
    %3517 = vxpose.xlu0.b32.start [1/16] %v3453, 128
    %3518 = vxpose.xlu0.b32.cont [2/16] %v3455, 128
    %3519 = vxpose.xlu0.b32.cont [3/16] %v3457, 128
    %3520 = vxpose.xlu0.b32.cont [4/16] %v3459, 128
    %3521 = vxpose.xlu0.b32.cont [5/16] %v3461, 128
    %3522 = vxpose.xlu0.b32.cont [6/16] %v3463, 128
    %3523 = vxpose.xlu0.b32.cont [7/16] %v3465, 128
    %3524 = vxpose.xlu0.b32.cont [8/16] %v3467, 128
    %3525 = vxpose.xlu0.b32.cont [9/16] %v3469, 128
    %3526 = vxpose.xlu0.b32.cont [10/16] %v3471, 128
    %3527 = vxpose.xlu0.b32.cont [11/16] %v3473, 128
    %3528 = vxpose.xlu0.b32.cont [12/16] %v3475, 128
    %3529 = vxpose.xlu0.b32.cont [13/16] %v3477, 128
    %3530 = vxpose.xlu0.b32.cont [14/16] %v3479, 128
    %3531 = vxpose.xlu0.b32.cont [15/16] %v3481, 128
    %3532 = vxpose.xlu0.b32.end [16/16] %v3483, 128
    %v3533 = vpop.trf.xlu0
    %v3534 = vpop.trf.xlu0
    %v3535 = vpop.trf.xlu0
    %v3536 = vpop.trf.xlu0
    %v3537 = vpop.trf.xlu0
    %v3538 = vpop.trf.xlu0
    %v3539 = vpop.trf.xlu0
    %v3540 = vpop.trf.xlu0
    %v3541 = vpop.trf.xlu0
    %v3542 = vpop.trf.xlu0
    %v3543 = vpop.trf.xlu0
    %v3544 = vpop.trf.xlu0
    %v3545 = vpop.trf.xlu0
    %v3546 = vpop.trf.xlu0
    %v3547 = vpop.trf.xlu0
    %v3548 = vpop.trf.xlu0
    %3549 = vxpose.xlu0.b32.start [1/16] %v3454, 128
    %3550 = vxpose.xlu0.b32.cont [2/16] %v3456, 128
    %3551 = vxpose.xlu0.b32.cont [3/16] %v3458, 128
    %3552 = vxpose.xlu0.b32.cont [4/16] %v3460, 128
    %3553 = vxpose.xlu0.b32.cont [5/16] %v3462, 128
    %3554 = vxpose.xlu0.b32.cont [6/16] %v3464, 128
    %3555 = vxpose.xlu0.b32.cont [7/16] %v3466, 128
    %3556 = vxpose.xlu0.b32.cont [8/16] %v3468, 128
    %3557 = vxpose.xlu0.b32.cont [9/16] %v3470, 128
    %3558 = vxpose.xlu0.b32.cont [10/16] %v3472, 128
    %3559 = vxpose.xlu0.b32.cont [11/16] %v3474, 128
    %3560 = vxpose.xlu0.b32.cont [12/16] %v3476, 128
    %3561 = vxpose.xlu0.b32.cont [13/16] %v3478, 128
    %3562 = vxpose.xlu0.b32.cont [14/16] %v3480, 128
    %3563 = vxpose.xlu0.b32.cont [15/16] %v3482, 128
    %3564 = vxpose.xlu0.b32.end [16/16] %v3484, 128
    %v3565 = vpop.trf.xlu0
    %v3566 = vpop.trf.xlu0
    %v3567 = vpop.trf.xlu0
    %v3568 = vpop.trf.xlu0
    %v3569 = vpop.trf.xlu0
    %v3570 = vpop.trf.xlu0
    %v3571 = vpop.trf.xlu0
    %v3572 = vpop.trf.xlu0
    %v3573 = vpop.trf.xlu0
    %v3574 = vpop.trf.xlu0
    %v3575 = vpop.trf.xlu0
    %v3576 = vpop.trf.xlu0
    %v3577 = vpop.trf.xlu0
    %v3578 = vpop.trf.xlu0
    %v3579 = vpop.trf.xlu0
    %v3580 = vpop.trf.xlu0
    %3581 = vst [vmem:[#allocation2] sm:$0xff] %v3533
    %3582 = vst [vmem:[#allocation2 + $0x8] sm:$0xff] %v3534
    %3583 = vst [vmem:[#allocation2 + $0x10] sm:$0xff] %v3535
    %3584 = vst [vmem:[#allocation2 + $0x18] sm:$0xff] %v3536
    %3585 = vst [vmem:[#allocation2 + $0x20] sm:$0xff] %v3537
    %3586 = vst [vmem:[#allocation2 + $0x28] sm:$0xff] %v3538
    %3587 = vst [vmem:[#allocation2 + $0x30] sm:$0xff] %v3539
    %3588 = vst [vmem:[#allocation2 + $0x38] sm:$0xff] %v3540
    %3589 = vst [vmem:[#allocation2 + $0x40] sm:$0xff] %v3541
    %3590 = vst [vmem:[#allocation2 + $0x48] sm:$0xff] %v3542
    %3591 = vst [vmem:[#allocation2 + $0x50] sm:$0xff] %v3543
    %3592 = vst [vmem:[#allocation2 + $0x58] sm:$0xff] %v3544
    %3593 = vst [vmem:[#allocation2 + $0x60] sm:$0xff] %v3545
    %3594 = vst [vmem:[#allocation2 + $0x68] sm:$0xff] %v3546
    %3595 = vst [vmem:[#allocation2 + $0x70] sm:$0xff] %v3547
    %3596 = vst [vmem:[#allocation2 + $0x78] sm:$0xff] %v3548
    %3597 = vst [vmem:[#allocation2 + $0x80] sm:$0xff] %v3565
    %3598 = vst [vmem:[#allocation2 + $0x88] sm:$0xff] %v3566
    %3599 = vst [vmem:[#allocation2 + $0x90] sm:$0xff] %v3567
    %3600 = vst [vmem:[#allocation2 + $0x98] sm:$0xff] %v3568
    %3601 = vst [vmem:[#allocation2 + $0xa0] sm:$0xff] %v3569
    %3602 = vst [vmem:[#allocation2 + $0xa8] sm:$0xff] %v3570
    %3603 = vst [vmem:[#allocation2 + $0xb0] sm:$0xff] %v3571
    %3604 = vst [vmem:[#allocation2 + $0xb8] sm:$0xff] %v3572
    %3605 = vst [vmem:[#allocation2 + $0xc0] sm:$0xff] %v3573
    %3606 = vst [vmem:[#allocation2 + $0xc8] sm:$0xff] %v3574
    %3607 = vst [vmem:[#allocation2 + $0xd0] sm:$0xff] %v3575
    %3608 = vst [vmem:[#allocation2 + $0xd8] sm:$0xff] %v3576
    %3609 = vst [vmem:[#allocation2 + $0xe0] sm:$0xff] %v3577
    %3610 = vst [vmem:[#allocation2 + $0xe8] sm:$0xff] %v3578
    %3611 = vst [vmem:[#allocation2 + $0xf0] sm:$0xff] %v3579
    %3612 = vst [vmem:[#allocation2 + $0xf8] sm:$0xff] %v3580
    %3613 = vxpose.xlu0.b32.start [1/16] %v3485, 128
    %3614 = vxpose.xlu0.b32.cont [2/16] %v3487, 128
    %3615 = vxpose.xlu0.b32.cont [3/16] %v3489, 128
    %3616 = vxpose.xlu0.b32.cont [4/16] %v3491, 128
    %3617 = vxpose.xlu0.b32.cont [5/16] %v3493, 128
    %3618 = vxpose.xlu0.b32.cont [6/16] %v3495, 128
    %3619 = vxpose.xlu0.b32.cont [7/16] %v3497, 128
    %3620 = vxpose.xlu0.b32.cont [8/16] %v3499, 128
    %3621 = vxpose.xlu0.b32.cont [9/16] %v3501, 128
    %3622 = vxpose.xlu0.b32.cont [10/16] %v3503, 128
    %3623 = vxpose.xlu0.b32.cont [11/16] %v3505, 128
    %3624 = vxpose.xlu0.b32.cont [12/16] %v3507, 128
    %3625 = vxpose.xlu0.b32.cont [13/16] %v3509, 128
    %3626 = vxpose.xlu0.b32.cont [14/16] %v3511, 128
    %3627 = vxpose.xlu0.b32.cont [15/16] %v3513, 128
    %3628 = vxpose.xlu0.b32.end [16/16] %v3515, 128
    %v3629 = vpop.trf.xlu0
    %v3630 = vpop.trf.xlu0
    %v3631 = vpop.trf.xlu0
    %v3632 = vpop.trf.xlu0
    %v3633 = vpop.trf.xlu0
    %v3634 = vpop.trf.xlu0
    %v3635 = vpop.trf.xlu0
    %v3636 = vpop.trf.xlu0
    %v3637 = vpop.trf.xlu0
    %v3638 = vpop.trf.xlu0
    %v3639 = vpop.trf.xlu0
    %v3640 = vpop.trf.xlu0
    %v3641 = vpop.trf.xlu0
    %v3642 = vpop.trf.xlu0
    %v3643 = vpop.trf.xlu0
    %v3644 = vpop.trf.xlu0
    %3645 = vxpose.xlu0.b32.start [1/16] %v3486, 128
    %3646 = vxpose.xlu0.b32.cont [2/16] %v3488, 128
    %3647 = vxpose.xlu0.b32.cont [3/16] %v3490, 128
    %3648 = vxpose.xlu0.b32.cont [4/16] %v3492, 128
    %3649 = vxpose.xlu0.b32.cont [5/16] %v3494, 128
    %3650 = vxpose.xlu0.b32.cont [6/16] %v3496, 128
    %3651 = vxpose.xlu0.b32.cont [7/16] %v3498, 128
    %3652 = vxpose.xlu0.b32.cont [8/16] %v3500, 128
    %3653 = vxpose.xlu0.b32.cont [9/16] %v3502, 128
    %3654 = vxpose.xlu0.b32.cont [10/16] %v3504, 128
    %3655 = vxpose.xlu0.b32.cont [11/16] %v3506, 128
    %3656 = vxpose.xlu0.b32.cont [12/16] %v3508, 128
    %3657 = vxpose.xlu0.b32.cont [13/16] %v3510, 128
    %3658 = vxpose.xlu0.b32.cont [14/16] %v3512, 128
    %3659 = vxpose.xlu0.b32.cont [15/16] %v3514, 128
    %3660 = vxpose.xlu0.b32.end [16/16] %v3516, 128
    %v3661 = vpop.trf.xlu0
    %v3662 = vpop.trf.xlu0
    %v3663 = vpop.trf.xlu0
    %v3664 = vpop.trf.xlu0
    %v3665 = vpop.trf.xlu0
    %v3666 = vpop.trf.xlu0
    %v3667 = vpop.trf.xlu0
    %v3668 = vpop.trf.xlu0
    %v3669 = vpop.trf.xlu0
    %v3670 = vpop.trf.xlu0
    %v3671 = vpop.trf.xlu0
    %v3672 = vpop.trf.xlu0
    %v3673 = vpop.trf.xlu0
    %v3674 = vpop.trf.xlu0
    %v3675 = vpop.trf.xlu0
    %v3676 = vpop.trf.xlu0
    %s3677 = scalar_lea.vmem [#allocation2], 256
    %3678 = vst [vmem:[%s3677] sm:$0xff] %v3629
    %3679 = vst [vmem:[%s3677 + $0x8] sm:$0xff] %v3630
    %3680 = vst [vmem:[%s3677 + $0x10] sm:$0xff] %v3631
    %3681 = vst [vmem:[%s3677 + $0x18] sm:$0xff] %v3632
    %3682 = vst [vmem:[%s3677 + $0x20] sm:$0xff] %v3633
    %3683 = vst [vmem:[%s3677 + $0x28] sm:$0xff] %v3634
    %3684 = vst [vmem:[%s3677 + $0x30] sm:$0xff] %v3635
    %3685 = vst [vmem:[%s3677 + $0x38] sm:$0xff] %v3636
    %3686 = vst [vmem:[%s3677 + $0x40] sm:$0xff] %v3637
    %3687 = vst [vmem:[%s3677 + $0x48] sm:$0xff] %v3638
    %3688 = vst [vmem:[%s3677 + $0x50] sm:$0xff] %v3639
    %3689 = vst [vmem:[%s3677 + $0x58] sm:$0xff] %v3640
    %3690 = vst [vmem:[%s3677 + $0x60] sm:$0xff] %v3641
    %3691 = vst [vmem:[%s3677 + $0x68] sm:$0xff] %v3642
    %3692 = vst [vmem:[%s3677 + $0x70] sm:$0xff] %v3643
    %3693 = vst [vmem:[%s3677 + $0x78] sm:$0xff] %v3644
    %3694 = vst [vmem:[%s3677 + $0x80] sm:$0xff] %v3661
    %3695 = vst [vmem:[%s3677 + $0x88] sm:$0xff] %v3662
    %3696 = vst [vmem:[%s3677 + $0x90] sm:$0xff] %v3663
    %3697 = vst [vmem:[%s3677 + $0x98] sm:$0xff] %v3664
    %3698 = vst [vmem:[%s3677 + $0xa0] sm:$0xff] %v3665
    %3699 = vst [vmem:[%s3677 + $0xa8] sm:$0xff] %v3666
    %3700 = vst [vmem:[%s3677 + $0xb0] sm:$0xff] %v3667
    %3701 = vst [vmem:[%s3677 + $0xb8] sm:$0xff] %v3668
    %3702 = vst [vmem:[%s3677 + $0xc0] sm:$0xff] %v3669
    %3703 = vst [vmem:[%s3677 + $0xc8] sm:$0xff] %v3670
    %3704 = vst [vmem:[%s3677 + $0xd0] sm:$0xff] %v3671
    %3705 = vst [vmem:[%s3677 + $0xd8] sm:$0xff] %v3672
    %3706 = vst [vmem:[%s3677 + $0xe0] sm:$0xff] %v3673
    %3707 = vst [vmem:[%s3677 + $0xe8] sm:$0xff] %v3674
    %3708 = vst [vmem:[%s3677 + $0xf0] sm:$0xff] %v3675
    %3709 = vst [vmem:[%s3677 + $0xf8] sm:$0xff] %v3676
    // Predicated region
    $region22: #{convolutional_block.1} parent=1 // pred_check
      _
    $region23: #{convolutional_block.1} parent=1 // pred_check_branch
      %3711 = sbr.rel (0) target = $region25
    $region24: #{convolutional_block.1} parent=1 // pred_region
      %s3713 = ssub.s32 8192, 8192
      %3714 = vsyncadd [#allocation3], %s3713
      %s3715 = sshll.u32 [#allocation2], 4
      %s3716 = int_to_ptr.vmem [resolvable:$true] %s3715
      %3721 = dma.vmem_to_hbm [thread:$0]  %s3716, 8192, %s5, [#allocation3], 128, 128, 8
    $region25: #{convolutional_block.1} parent=1 // pred_fallthru
      _
    // Predicated region
    $region26: #{convolutional_block.1} parent=1 // pred_check
      _
    $region27: #{convolutional_block.1} parent=1 // pred_check_branch
      %3723 = sbr.rel (0) target = $region29
    $region28: #{convolutional_block.1} parent=1 // pred_region
      %3724 = dma.done [#allocation3], 8192
    $region29: #{convolutional_block.1} parent=1 // pred_fallthru
      _
    %3725 = vsyncpa [#allocation3], 1

</llo_original>
